<compile_context>
chip_gen: v7x
topology: tpu7x:2x2x1
jax: 0.10.0
libtpu: 0.0.40
codegen_flags: <defaults>
</compile_context>

<pallas_src>
import functools

import jax
import jax.numpy as jnp
from jax.experimental import pallas as pl
from jax.experimental.pallas import tpu as pltpu

D_INPUT = 21 * 6      # fixed by forward(): 21 joints x 6D rotation
D_INPUT_PAD = 128     # lane-aligned K for the first matmul (extra rows are 0)
D_MODEL = 512         # module default
D_OUTPUT = 512        # module default
BLOCK_M = 1024        # batch-tile rows (v5e-safe; v6e/v7x could sweep 2048)
OUT_DTYPE = jnp.bfloat16   # kernel writeback dtype (perf review item 1)

# tanh GELU runs on the EUP transcendental slot (free bundle slot); set False
# to match nn.GELU()'s erf formulation more closely.
GELU_APPROXIMATE = True


def _round_up(x, m):
    return (x + m - 1) // m * m


def _cdiv(a, b):
    return -(-a // b)


# ----------------------------------------------------------------------------
# Plain-JAX glue: axis_angle -> rotation matrix -> 6D rep (pytorch3d semantics)
# (63 floats/sample; fused by XLA into the same jit as the Pallas call)
# ----------------------------------------------------------------------------
def axis_angle_to_matrix(aa):
    """aa: (..., 3) axis-angle -> (..., 3, 3) rotation matrix (Rodrigues)."""
    theta = jnp.linalg.norm(aa, axis=-1, keepdims=True)              # (..., 1)
    theta2 = theta * theta
    small = theta < 1e-4
    a = jnp.where(small, 1.0 - theta2 / 6.0,
                  jnp.sin(theta) / jnp.where(small, 1.0, theta))
    b = jnp.where(small, 0.5 - theta2 / 24.0,
                  (1.0 - jnp.cos(theta)) / jnp.where(small, 1.0, theta2))
    x, y, z = aa[..., 0], aa[..., 1], aa[..., 2]
    zeros = jnp.zeros_like(x)
    K = jnp.stack(
        [
            jnp.stack([zeros, -z, y], axis=-1),
            jnp.stack([z, zeros, -x], axis=-1),
            jnp.stack([-y, x, zeros], axis=-1),
        ],
        axis=-2,
    )                                                                 # (..., 3, 3)
    I = jnp.eye(3, dtype=aa.dtype)
    return I + a[..., None] * K + b[..., None] * (K @ K)


def matrix_to_rotation_6d(R):
    """R: (..., 3, 3) -> (..., 6): first two rows flattened (pytorch3d)."""
    return R[..., :2, :].reshape(R.shape[:-2] + (6,))


# ----------------------------------------------------------------------------
# Pallas kernel: Linear(128->D) ; 2 x PreNormResidual(D) ; LayerNorm ; Linear
#   x_ref   : (BM, 128)   bf16   batch tile (zero-padded features / rows)
#   w*_ref  : bf16 weights, (D_in, D_out) layout -> x @ W
#   vec_ref : (16, D)     f32    packed biases + LayerNorm gamma/beta rows
#   o_ref   : (BM, D_out) bf16
#
# packed vector rows:
#   0: b0 | 1: g1 | 2: be1 | 3: b1a | 4: b1b
#   5: g2 | 6: be2 | 7: b2a | 8: b2b
#   9: gf | 10: bf | 11: bo | 12..15: zero padding (sublane alignment)
# ----------------------------------------------------------------------------
def tpa_mlp_kernel(x_ref, w0_ref, w1a_ref, w1b_ref, w2a_ref, w2b_ref, wo_ref,
                   vec_ref, o_ref):
    vecs = vec_ref[...]                                               # (16, D) f32
    b0, g1, be1, b1a, b1b = (vecs[0:1], vecs[1:2], vecs[2:3], vecs[3:4], vecs[4:5])
    g2, be2, b2a, b2b = (vecs[5:6], vecs[6:7], vecs[7:8], vecs[8:9])
    gf, bf, bo = (vecs[9:10], vecs[10:11], vecs[11:12])

    w0 = w0_ref[...]
    w1a, w1b = w1a_ref[...], w1b_ref[...]
    w2a, w2b = w2a_ref[...], w2b_ref[...]
    wo = wo_ref[...]

    def layernorm(h, g, b, eps=1e-5):
        # One-pass statistics (E[x], E[x^2]): one reduction pair on the XLU.
        # f32 with D=512 -> cancellation is benign (noted numerics deviation
        # from torch.nn.LayerNorm's two-pass form).
        mu = jnp.mean(h, axis=-1, keepdims=True)
        ex2 = jnp.mean(h * h, axis=-1, keepdims=True)
        var = ex2 - mu * mu
        return (h - mu) * jax.lax.rsqrt(var + eps) * g + b

    def prenorm_residual(h, g, be, wa, ba, wb, bb):
        y = layernorm(h, g, be)
        y = jnp.dot(y.astype(jnp.bfloat16), wa,
                    preferred_element_type=jnp.float32) + ba
        y = jax.nn.gelu(y, approximate=GELU_APPROXIMATE)
        y = jnp.dot(y.astype(jnp.bfloat16), wb,
                    preferred_element_type=jnp.float32) + bb
        return h + y                                 # Dropout == identity (eval)

    def chain(x):
        # bf16 x bf16 matmuls with f32 accumulation; LN/GELU/residual in f32.
        h = jnp.dot(x, w0, preferred_element_type=jnp.float32) + b0
        h = prenorm_residual(h, g1, be1, w1a, b1a, w1b, b1b)
        h = prenorm_residual(h, g2, be2, w2a, b2a, w2b, b2b)
        h = layernorm(h, gf, bf)
        out = jnp.dot(h.astype(jnp.bfloat16), wo,
                      preferred_element_type=jnp.float32) + bo
        return out.astype(o_ref.dtype)

    bm = x_ref.shape[0]
    if bm >= 64 and bm % 32 == 0:
        # Two independent sub-chains in the same basic block: the scheduler can
        # overlap MXU pushes of one half with the XLU/EUP/VPU LN+GELU work of
        # the other (the per-half chain is otherwise strictly serial).
        half = bm // 2
        o_ref[:half, :] = chain(x_ref[:half, :])
        o_ref[half:, :] = chain(x_ref[half:, :])
    else:
        o_ref[...] = chain(x_ref[...])


# ----------------------------------------------------------------------------
# Parameters (synthetic, deterministic) — shapes per TPAPoseEnc.__init__
# ----------------------------------------------------------------------------
def init_params(key, d_input=D_INPUT, d_model=D_MODEL, d_output=D_OUTPUT):
    assert d_model == d_output, "packed bias layout assumes d_model == d_output"
    ks = list(jax.random.split(key, 8))

    def lin(k, din, dout):
        kw, kb = jax.random.split(k)
        w = jax.random.normal(kw, (din, dout), jnp.float32) * 0.02
        b = jax.random.normal(kb, (1, dout), jnp.float32) * 0.02
        return w, b

    w0, b0 = lin(ks[0], d_input, d_model)
    # zero-pad K: 126 -> 128 (extra rows exactly zero => identical results)
    w0 = jnp.pad(w0, ((0, D_INPUT_PAD - d_input), (0, 0)))
    g1 = jnp.ones((1, d_model), jnp.float32); be1 = jnp.zeros((1, d_model), jnp.float32)
    w1a, b1a = lin(ks[1], d_model, d_model)
    w1b, b1b = lin(ks[2], d_model, d_model)
    g2 = jnp.ones((1, d_model), jnp.float32); be2 = jnp.zeros((1, d_model), jnp.float32)
    w2a, b2a = lin(ks[3], d_model, d_model)
    w2b, b2b = lin(ks[4], d_model, d_model)
    gf = jnp.ones((1, d_model), jnp.float32); bf = jnp.zeros((1, d_model), jnp.float32)
    wo, bo = lin(ks[5], d_model, d_output)

    to_bf16 = lambda w: w.astype(jnp.bfloat16)
    vecs = jnp.concatenate(
        [b0, g1, be1, b1a, b1b, g2, be2, b2a, b2b, gf, bf, bo,
         jnp.zeros((4, d_model), jnp.float32)], axis=0)               # (16, D)
    return (to_bf16(w0), to_bf16(w1a), to_bf16(w1b),
            to_bf16(w2a), to_bf16(w2b), to_bf16(wo), vecs)


# ----------------------------------------------------------------------------
# Wrapper: glue + batch-tiled pallas_call
# ----------------------------------------------------------------------------
def _choose_block_m(bs, block_m):
    if bs <= 32:
        return _round_up(bs, 16)        # tiny batch: one packed bf16 tile
    # Ensure >= 2 grid steps so ("parallel",) shards across v7x's two TCs,
    # while keeping tiles large enough to amortize the ~0.35 us step overhead.
    return min(block_m, _round_up(_cdiv(bs, 2), 32))


@functools.partial(jax.jit, static_argnames=("block_m",))
def tpa_pose_enc(batch_poses, params, *, block_m=BLOCK_M):
    """batch_poses: (bs, 63) axis-angle for 21 joints -> (bs, D_OUTPUT) bf16."""
    bs = batch_poses.shape[0]
    # axis-angle -> 3x3 -> 6D glue; same jit as the pallas_call so XLA fuses
    # the pad + bf16 cast into the Rodrigues producer (no extra HBM round trip).
    R = axis_angle_to_matrix(batch_poses.reshape(bs, 21, 3).astype(jnp.float32))
    x6d = matrix_to_rotation_6d(R).reshape(bs, D_INPUT)

    bm = _choose_block_m(bs, block_m)
    bs_p = _round_up(bs, bm)
    x = jnp.pad(x6d, ((0, bs_p - bs), (0, D_INPUT_PAD - D_INPUT)))
    x = x.astype(jnp.bfloat16)                                        # halve DMA bytes

    w0, w1a, w1b, w2a, w2b, wo, vecs = params

    # Constant-index operands: DMA'd once, stay resident, single-buffered
    # (double buffers on constant blocks would just waste VMEM on v7x).
    def resident(shape):
        return pl.BlockSpec(shape, lambda i: (0, 0), pipeline_mode=pl.Buffered(1))

    flops = 2 * bs_p * (D_INPUT_PAD * D_MODEL + 4 * D_MODEL * D_MODEL
                        + D_MODEL * D_OUTPUT)
    transcendentals = 2 * bs_p * D_MODEL + 3 * bs_p       # GELU tanh + LN rsqrt
    bytes_accessed = (x.size * 2 + bs_p * D_OUTPUT * 2
                      + sum(w.size * 2 for w in (w0, w1a, w1b, w2a, w2b, wo))
                      + vecs.size * 4)

    out = pl.pallas_call(
        tpa_mlp_kernel,
        out_shape=jax.ShapeDtypeStruct((bs_p, D_OUTPUT), OUT_DTYPE),
        grid=(bs_p // bm,),
        in_specs=[
            pl.BlockSpec((bm, D_INPUT_PAD), lambda i: (i, 0)),        # x: batch-tiled
            resident(w0.shape), resident(w1a.shape), resident(w1b.shape),
            resident(w2a.shape), resident(w2b.shape), resident(wo.shape),
            resident(vecs.shape),
        ],
        out_specs=pl.BlockSpec((bm, D_OUTPUT), lambda i: (i, 0)),
        compiler_params=pltpu.CompilerParams(
            dimension_semantics=("parallel",),            # megacore on v7x
            vmem_limit_bytes=32 * 1024 * 1024),           # covers BM=1024 tiles
        cost_estimate=pl.CostEstimate(flops=flops,
                                      transcendentals=transcendentals,
                                      bytes_accessed=bytes_accessed),
    )(x, w0, w1a, w1b, w2a, w2b, wo, vecs)
    # bf16 writeback; upcast to f32 outside only if a consumer truly needs it.
    return out[:bs]


if __name__ == "__main__":
    key = jax.random.PRNGKey(0)
    kpose, kparam = jax.random.split(key)

    bs = 8  # small demo batch; real workloads should batch many frames per call
    batch_poses = jax.random.normal(kpose, (bs, 21 * 3), jnp.float32) * 0.5
    params = init_params(kparam)

    out = tpa_pose_enc(batch_poses, params)
    jax.block_until_ready(out)
    assert out.shape == (bs, D_OUTPUT) and out.dtype == OUT_DTYPE
    assert bool(jnp.all(jnp.isfinite(out.astype(jnp.float32))))
    print("KERNEL_OK")
</pallas_src>

<mosaic_0001>
module attributes {stable_mosaic.version = 11 : i64} {
  func.func @tpa_mlp_kernel(%arg0: i32, %arg1: memref<16x128xbf16, #tpu.memory_space<vmem>>, %arg2: memref<128x512xbf16, #tpu.memory_space<vmem>>, %arg3: memref<512x512xbf16, #tpu.memory_space<vmem>>, %arg4: memref<512x512xbf16, #tpu.memory_space<vmem>>, %arg5: memref<512x512xbf16, #tpu.memory_space<vmem>>, %arg6: memref<512x512xbf16, #tpu.memory_space<vmem>>, %arg7: memref<512x512xbf16, #tpu.memory_space<vmem>>, %arg8: memref<16x512xf32, #tpu.memory_space<vmem>>, %arg9: memref<16x512xbf16, #tpu.memory_space<vmem>>) attributes {dimension_semantics = [#tpu.dimension_semantics<parallel>], iteration_bounds = array<i64: 1>, scalar_prefetch = 0 : i64, scratch_operands = 0 : i64, tpu.core_type = #tpu.core_type<tc>, window_params = [{transform_indices = @transform_0, window_bounds = array<i64: 16, 128>}, {pipeline_mode = #tpu.pipeline_mode<synchronous>, transform_indices = @transform_1, window_bounds = array<i64: 128, 512>}, {pipeline_mode = #tpu.pipeline_mode<synchronous>, transform_indices = @transform_2, window_bounds = array<i64: 512, 512>}, {pipeline_mode = #tpu.pipeline_mode<synchronous>, transform_indices = @transform_3, window_bounds = array<i64: 512, 512>}, {pipeline_mode = #tpu.pipeline_mode<synchronous>, transform_indices = @transform_4, window_bounds = array<i64: 512, 512>}, {pipeline_mode = #tpu.pipeline_mode<synchronous>, transform_indices = @transform_5, window_bounds = array<i64: 512, 512>}, {pipeline_mode = #tpu.pipeline_mode<synchronous>, transform_indices = @transform_6, window_bounds = array<i64: 512, 512>}, {pipeline_mode = #tpu.pipeline_mode<synchronous>, transform_indices = @transform_7, window_bounds = array<i64: 16, 512>}, {transform_indices = @transform_8, window_bounds = array<i64: 16, 512>}]} {
    %c0 = arith.constant 0 : index
    %c0_0 = arith.constant 0 : index
    %0 = vector.load %arg8[%c0, %c0_0] : memref<16x512xf32, #tpu.memory_space<vmem>>, vector<16x512xf32>
    %1 = vector.extract_strided_slice %0 {offsets = [0, 0], sizes = [1, 512], strides = [1, 1]} : vector<16x512xf32> to vector<1x512xf32>
    %2 = vector.extract_strided_slice %0 {offsets = [1, 0], sizes = [1, 512], strides = [1, 1]} : vector<16x512xf32> to vector<1x512xf32>
    %3 = vector.extract_strided_slice %0 {offsets = [2, 0], sizes = [1, 512], strides = [1, 1]} : vector<16x512xf32> to vector<1x512xf32>
    %4 = vector.extract_strided_slice %0 {offsets = [3, 0], sizes = [1, 512], strides = [1, 1]} : vector<16x512xf32> to vector<1x512xf32>
    %5 = vector.extract_strided_slice %0 {offsets = [4, 0], sizes = [1, 512], strides = [1, 1]} : vector<16x512xf32> to vector<1x512xf32>
    %6 = vector.extract_strided_slice %0 {offsets = [5, 0], sizes = [1, 512], strides = [1, 1]} : vector<16x512xf32> to vector<1x512xf32>
    %7 = vector.extract_strided_slice %0 {offsets = [6, 0], sizes = [1, 512], strides = [1, 1]} : vector<16x512xf32> to vector<1x512xf32>
    %8 = vector.extract_strided_slice %0 {offsets = [7, 0], sizes = [1, 512], strides = [1, 1]} : vector<16x512xf32> to vector<1x512xf32>
    %9 = vector.extract_strided_slice %0 {offsets = [8, 0], sizes = [1, 512], strides = [1, 1]} : vector<16x512xf32> to vector<1x512xf32>
    %10 = vector.extract_strided_slice %0 {offsets = [9, 0], sizes = [1, 512], strides = [1, 1]} : vector<16x512xf32> to vector<1x512xf32>
    %11 = vector.extract_strided_slice %0 {offsets = [10, 0], sizes = [1, 512], strides = [1, 1]} : vector<16x512xf32> to vector<1x512xf32>
    %12 = vector.extract_strided_slice %0 {offsets = [11, 0], sizes = [1, 512], strides = [1, 1]} : vector<16x512xf32> to vector<1x512xf32>
    %c0_1 = arith.constant 0 : index
    %c0_2 = arith.constant 0 : index
    %13 = vector.load %arg2[%c0_1, %c0_2] : memref<128x512xbf16, #tpu.memory_space<vmem>>, vector<128x512xbf16>
    %c0_3 = arith.constant 0 : index
    %c0_4 = arith.constant 0 : index
    %14 = vector.load %arg3[%c0_3, %c0_4] : memref<512x512xbf16, #tpu.memory_space<vmem>>, vector<512x512xbf16>
    %c0_5 = arith.constant 0 : index
    %c0_6 = arith.constant 0 : index
    %15 = vector.load %arg4[%c0_5, %c0_6] : memref<512x512xbf16, #tpu.memory_space<vmem>>, vector<512x512xbf16>
    %c0_7 = arith.constant 0 : index
    %c0_8 = arith.constant 0 : index
    %16 = vector.load %arg5[%c0_7, %c0_8] : memref<512x512xbf16, #tpu.memory_space<vmem>>, vector<512x512xbf16>
    %c0_9 = arith.constant 0 : index
    %c0_10 = arith.constant 0 : index
    %17 = vector.load %arg6[%c0_9, %c0_10] : memref<512x512xbf16, #tpu.memory_space<vmem>>, vector<512x512xbf16>
    %c0_11 = arith.constant 0 : index
    %c0_12 = arith.constant 0 : index
    %18 = vector.load %arg7[%c0_11, %c0_12] : memref<512x512xbf16, #tpu.memory_space<vmem>>, vector<512x512xbf16>
    %c0_13 = arith.constant 0 : index
    %c0_14 = arith.constant 0 : index
    %19 = vector.load %arg1[%c0_13, %c0_14] : memref<16x128xbf16, #tpu.memory_space<vmem>>, vector<16x128xbf16>
    %cst = arith.constant dense<0.000000e+00> : vector<16x512xf32>
    %20 = tpu.matmul %19, %13, %cst {dimension_numbers = #tpu.dot_dimension_numbers<[1], [0], [0], [1], [0, 0, 1, 1], [], []>} : vector<16x128xbf16>, vector<128x512xbf16>, vector<16x512xf32> -> vector<16x512xf32>
    %21 = vector.broadcast %1 : vector<1x512xf32> to vector<16x512xf32>
    %22 = arith.addf %20, %21 : vector<16x512xf32>
    %cst_15 = arith.constant dense<0.000000e+00> : vector<16xf32>
    %23 = vector.multi_reduction <add>, %22, %cst_15 [1] : vector<16x512xf32> to vector<16xf32>
    %24 = vector.shape_cast %23 : vector<16xf32> to vector<16x1xf32>
    %cst_16 = arith.constant 5.120000e+02 : f32
    %25 = vector.broadcast %cst_16 : f32 to vector<16x1xf32>
    %26 = arith.divf %24, %25 : vector<16x1xf32>
    %27 = arith.mulf %22, %22 : vector<16x512xf32>
    %cst_17 = arith.constant dense<0.000000e+00> : vector<16xf32>
    %28 = vector.multi_reduction <add>, %27, %cst_17 [1] : vector<16x512xf32> to vector<16xf32>
    %29 = vector.shape_cast %28 : vector<16xf32> to vector<16x1xf32>
    %cst_18 = arith.constant 5.120000e+02 : f32
    %30 = vector.broadcast %cst_18 : f32 to vector<16x1xf32>
    %31 = arith.divf %29, %30 : vector<16x1xf32>
    %32 = arith.mulf %26, %26 : vector<16x1xf32>
    %33 = arith.subf %31, %32 : vector<16x1xf32>
    %34 = vector.broadcast %26 : vector<16x1xf32> to vector<16x512xf32>
    %35 = arith.subf %22, %34 : vector<16x512xf32>
    %cst_19 = arith.constant 9.99999974E-6 : f32
    %36 = vector.broadcast %cst_19 : f32 to vector<16x1xf32>
    %37 = arith.addf %33, %36 : vector<16x1xf32>
    %38 = math.rsqrt %37 : vector<16x1xf32>
    %39 = vector.broadcast %38 : vector<16x1xf32> to vector<16x512xf32>
    %40 = arith.mulf %35, %39 : vector<16x512xf32>
    %41 = vector.broadcast %2 : vector<1x512xf32> to vector<16x512xf32>
    %42 = arith.mulf %40, %41 : vector<16x512xf32>
    %43 = vector.broadcast %3 : vector<1x512xf32> to vector<16x512xf32>
    %44 = arith.addf %42, %43 : vector<16x512xf32>
    %45 = arith.truncf %44 : vector<16x512xf32> to vector<16x512xbf16>
    %cst_20 = arith.constant dense<0.000000e+00> : vector<16x512xf32>
    %46 = tpu.matmul %45, %14, %cst_20 {dimension_numbers = #tpu.dot_dimension_numbers<[1], [0], [0], [1], [0, 0, 1, 1], [], []>} : vector<16x512xbf16>, vector<512x512xbf16>, vector<16x512xf32> -> vector<16x512xf32>
    %47 = vector.broadcast %4 : vector<1x512xf32> to vector<16x512xf32>
    %48 = arith.addf %46, %47 : vector<16x512xf32>
    %49 = arith.mulf %48, %48 : vector<16x512xf32>
    %50 = arith.mulf %48, %49 : vector<16x512xf32>
    %cst_21 = arith.constant 4.471500e-02 : f32
    %51 = vector.broadcast %cst_21 : f32 to vector<16x512xf32>
    %52 = arith.mulf %51, %50 : vector<16x512xf32>
    %53 = arith.addf %48, %52 : vector<16x512xf32>
    %cst_22 = arith.constant 0.797884583 : f32
    %54 = vector.broadcast %cst_22 : f32 to vector<16x512xf32>
    %55 = arith.mulf %54, %53 : vector<16x512xf32>
    %56 = math.tanh %55 : vector<16x512xf32>
    %cst_23 = arith.constant 1.000000e+00 : f32
    %57 = vector.broadcast %cst_23 : f32 to vector<16x512xf32>
    %58 = arith.addf %57, %56 : vector<16x512xf32>
    %cst_24 = arith.constant 5.000000e-01 : f32
    %59 = vector.broadcast %cst_24 : f32 to vector<16x512xf32>
    %60 = arith.mulf %59, %58 : vector<16x512xf32>
    %61 = arith.mulf %48, %60 : vector<16x512xf32>
    %62 = arith.truncf %61 : vector<16x512xf32> to vector<16x512xbf16>
    %cst_25 = arith.constant dense<0.000000e+00> : vector<16x512xf32>
    %63 = tpu.matmul %62, %15, %cst_25 {dimension_numbers = #tpu.dot_dimension_numbers<[1], [0], [0], [1], [0, 0, 1, 1], [], []>} : vector<16x512xbf16>, vector<512x512xbf16>, vector<16x512xf32> -> vector<16x512xf32>
    %64 = vector.broadcast %5 : vector<1x512xf32> to vector<16x512xf32>
    %65 = arith.addf %63, %64 : vector<16x512xf32>
    %66 = arith.addf %22, %65 : vector<16x512xf32>
    %cst_26 = arith.constant dense<0.000000e+00> : vector<16xf32>
    %67 = vector.multi_reduction <add>, %66, %cst_26 [1] : vector<16x512xf32> to vector<16xf32>
    %68 = vector.shape_cast %67 : vector<16xf32> to vector<16x1xf32>
    %cst_27 = arith.constant 5.120000e+02 : f32
    %69 = vector.broadcast %cst_27 : f32 to vector<16x1xf32>
    %70 = arith.divf %68, %69 : vector<16x1xf32>
    %71 = arith.mulf %66, %66 : vector<16x512xf32>
    %cst_28 = arith.constant dense<0.000000e+00> : vector<16xf32>
    %72 = vector.multi_reduction <add>, %71, %cst_28 [1] : vector<16x512xf32> to vector<16xf32>
    %73 = vector.shape_cast %72 : vector<16xf32> to vector<16x1xf32>
    %cst_29 = arith.constant 5.120000e+02 : f32
    %74 = vector.broadcast %cst_29 : f32 to vector<16x1xf32>
    %75 = arith.divf %73, %74 : vector<16x1xf32>
    %76 = arith.mulf %70, %70 : vector<16x1xf32>
    %77 = arith.subf %75, %76 : vector<16x1xf32>
    %78 = vector.broadcast %70 : vector<16x1xf32> to vector<16x512xf32>
    %79 = arith.subf %66, %78 : vector<16x512xf32>
    %cst_30 = arith.constant 9.99999974E-6 : f32
    %80 = vector.broadcast %cst_30 : f32 to vector<16x1xf32>
    %81 = arith.addf %77, %80 : vector<16x1xf32>
    %82 = math.rsqrt %81 : vector<16x1xf32>
    %83 = vector.broadcast %82 : vector<16x1xf32> to vector<16x512xf32>
    %84 = arith.mulf %79, %83 : vector<16x512xf32>
    %85 = vector.broadcast %6 : vector<1x512xf32> to vector<16x512xf32>
    %86 = arith.mulf %84, %85 : vector<16x512xf32>
    %87 = vector.broadcast %7 : vector<1x512xf32> to vector<16x512xf32>
    %88 = arith.addf %86, %87 : vector<16x512xf32>
    %89 = arith.truncf %88 : vector<16x512xf32> to vector<16x512xbf16>
    %cst_31 = arith.constant dense<0.000000e+00> : vector<16x512xf32>
    %90 = tpu.matmul %89, %16, %cst_31 {dimension_numbers = #tpu.dot_dimension_numbers<[1], [0], [0], [1], [0, 0, 1, 1], [], []>} : vector<16x512xbf16>, vector<512x512xbf16>, vector<16x512xf32> -> vector<16x512xf32>
    %91 = vector.broadcast %8 : vector<1x512xf32> to vector<16x512xf32>
    %92 = arith.addf %90, %91 : vector<16x512xf32>
    %93 = arith.mulf %92, %92 : vector<16x512xf32>
    %94 = arith.mulf %92, %93 : vector<16x512xf32>
    %cst_32 = arith.constant 4.471500e-02 : f32
    %95 = vector.broadcast %cst_32 : f32 to vector<16x512xf32>
    %96 = arith.mulf %95, %94 : vector<16x512xf32>
    %97 = arith.addf %92, %96 : vector<16x512xf32>
    %cst_33 = arith.constant 0.797884583 : f32
    %98 = vector.broadcast %cst_33 : f32 to vector<16x512xf32>
    %99 = arith.mulf %98, %97 : vector<16x512xf32>
    %100 = math.tanh %99 : vector<16x512xf32>
    %cst_34 = arith.constant 1.000000e+00 : f32
    %101 = vector.broadcast %cst_34 : f32 to vector<16x512xf32>
    %102 = arith.addf %101, %100 : vector<16x512xf32>
    %cst_35 = arith.constant 5.000000e-01 : f32
    %103 = vector.broadcast %cst_35 : f32 to vector<16x512xf32>
    %104 = arith.mulf %103, %102 : vector<16x512xf32>
    %105 = arith.mulf %92, %104 : vector<16x512xf32>
    %106 = arith.truncf %105 : vector<16x512xf32> to vector<16x512xbf16>
    %cst_36 = arith.constant dense<0.000000e+00> : vector<16x512xf32>
    %107 = tpu.matmul %106, %17, %cst_36 {dimension_numbers = #tpu.dot_dimension_numbers<[1], [0], [0], [1], [0, 0, 1, 1], [], []>} : vector<16x512xbf16>, vector<512x512xbf16>, vector<16x512xf32> -> vector<16x512xf32>
    %108 = vector.broadcast %9 : vector<1x512xf32> to vector<16x512xf32>
    %109 = arith.addf %107, %108 : vector<16x512xf32>
    %110 = arith.addf %66, %109 : vector<16x512xf32>
    %cst_37 = arith.constant dense<0.000000e+00> : vector<16xf32>
    %111 = vector.multi_reduction <add>, %110, %cst_37 [1] : vector<16x512xf32> to vector<16xf32>
    %112 = vector.shape_cast %111 : vector<16xf32> to vector<16x1xf32>
    %cst_38 = arith.constant 5.120000e+02 : f32
    %113 = vector.broadcast %cst_38 : f32 to vector<16x1xf32>
    %114 = arith.divf %112, %113 : vector<16x1xf32>
    %115 = arith.mulf %110, %110 : vector<16x512xf32>
    %cst_39 = arith.constant dense<0.000000e+00> : vector<16xf32>
    %116 = vector.multi_reduction <add>, %115, %cst_39 [1] : vector<16x512xf32> to vector<16xf32>
    %117 = vector.shape_cast %116 : vector<16xf32> to vector<16x1xf32>
    %cst_40 = arith.constant 5.120000e+02 : f32
    %118 = vector.broadcast %cst_40 : f32 to vector<16x1xf32>
    %119 = arith.divf %117, %118 : vector<16x1xf32>
    %120 = arith.mulf %114, %114 : vector<16x1xf32>
    %121 = arith.subf %119, %120 : vector<16x1xf32>
    %122 = vector.broadcast %114 : vector<16x1xf32> to vector<16x512xf32>
    %123 = arith.subf %110, %122 : vector<16x512xf32>
    %cst_41 = arith.constant 9.99999974E-6 : f32
    %124 = vector.broadcast %cst_41 : f32 to vector<16x1xf32>
    %125 = arith.addf %121, %124 : vector<16x1xf32>
    %126 = math.rsqrt %125 : vector<16x1xf32>
    %127 = vector.broadcast %126 : vector<16x1xf32> to vector<16x512xf32>
    %128 = arith.mulf %123, %127 : vector<16x512xf32>
    %129 = vector.broadcast %10 : vector<1x512xf32> to vector<16x512xf32>
    %130 = arith.mulf %128, %129 : vector<16x512xf32>
    %131 = vector.broadcast %11 : vector<1x512xf32> to vector<16x512xf32>
    %132 = arith.addf %130, %131 : vector<16x512xf32>
    %133 = arith.truncf %132 : vector<16x512xf32> to vector<16x512xbf16>
    %cst_42 = arith.constant dense<0.000000e+00> : vector<16x512xf32>
    %134 = tpu.matmul %133, %18, %cst_42 {dimension_numbers = #tpu.dot_dimension_numbers<[1], [0], [0], [1], [0, 0, 1, 1], [], []>} : vector<16x512xbf16>, vector<512x512xbf16>, vector<16x512xf32> -> vector<16x512xf32>
    %135 = vector.broadcast %12 : vector<1x512xf32> to vector<16x512xf32>
    %136 = arith.addf %134, %135 : vector<16x512xf32>
    %137 = arith.truncf %136 : vector<16x512xf32> to vector<16x512xbf16>
    %c0_43 = arith.constant 0 : index
    %c0_44 = arith.constant 0 : index
    %138 = vector.load %arg9[%c0_43, %c0_44] : memref<16x512xbf16, #tpu.memory_space<vmem>>, vector<16x512xbf16>
    tpu.vector_store %arg9[%c0_43, %c0_44], %137 {strides = array<i32>} : memref<16x512xbf16, #tpu.memory_space<vmem>>, vector<16x512xbf16>,
    return
  }
  func.func @transform_0(%arg0: i32) -> (i32, i32) {
    %c0_i32 = arith.constant 0 : i32
    %c0_i32_0 = arith.constant 0 : i32
    return %arg0, %c0_i32 : i32, i32
  }
  func.func @transform_1(%arg0: i32) -> (i32, i32) {
    %c0_i32 = arith.constant 0 : i32
    %c0_i32_0 = arith.constant 0 : i32
    %c0_i32_1 = arith.constant 0 : i32
    return %c0_i32, %c0_i32_0 : i32, i32
  }
  func.func @transform_2(%arg0: i32) -> (i32, i32) {
    %c0_i32 = arith.constant 0 : i32
    %c0_i32_0 = arith.constant 0 : i32
    %c0_i32_1 = arith.constant 0 : i32
    return %c0_i32, %c0_i32_0 : i32, i32
  }
  func.func @transform_3(%arg0: i32) -> (i32, i32) {
    %c0_i32 = arith.constant 0 : i32
    %c0_i32_0 = arith.constant 0 : i32
    %c0_i32_1 = arith.constant 0 : i32
    return %c0_i32, %c0_i32_0 : i32, i32
  }
  func.func @transform_4(%arg0: i32) -> (i32, i32) {
    %c0_i32 = arith.constant 0 : i32
    %c0_i32_0 = arith.constant 0 : i32
    %c0_i32_1 = arith.constant 0 : i32
    return %c0_i32, %c0_i32_0 : i32, i32
  }
  func.func @transform_5(%arg0: i32) -> (i32, i32) {
    %c0_i32 = arith.constant 0 : i32
    %c0_i32_0 = arith.constant 0 : i32
    %c0_i32_1 = arith.constant 0 : i32
    return %c0_i32, %c0_i32_0 : i32, i32
  }
  func.func @transform_6(%arg0: i32) -> (i32, i32) {
    %c0_i32 = arith.constant 0 : i32
    %c0_i32_0 = arith.constant 0 : i32
    %c0_i32_1 = arith.constant 0 : i32
    return %c0_i32, %c0_i32_0 : i32, i32
  }
  func.func @transform_7(%arg0: i32) -> (i32, i32) {
    %c0_i32 = arith.constant 0 : i32
    %c0_i32_0 = arith.constant 0 : i32
    %c0_i32_1 = arith.constant 0 : i32
    return %c0_i32, %c0_i32_0 : i32, i32
  }
  func.func @transform_8(%arg0: i32) -> (i32, i32) {
    %c0_i32 = arith.constant 0 : i32
    %c0_i32_0 = arith.constant 0 : i32
    return %arg0, %c0_i32 : i32, i32
  }
}

</mosaic_0001>

<llo_original>
// kernel: neg.1
$region0: #{neg.1}
  #allocation0 [shape = 's32[1]{0}', space=sflag, size = 0x4, scoped, tag = 'scoped memory for neg.1']
  %s0 = inlined_call_operand.vmem [shape: f32[8,21,1], index: 0, kind: input, shape index: {}]
  %s1 = inlined_call_operand.vmem [shape: f32[8,21,1], index: 1, kind: output, shape index: {}]
  %v2 = vld [vmem:[%s0] sm:$0xff]
  %3 = xla_tuple %v2
  %4 = xla_tuple %3
  %v5 = vxor.u32 %v2, 2147483648
  %6 = xla_tuple %v5
  %7 = vst [vmem:[%s1] sm:$0xff] %v5

// kernel: tpa_pose_enc.1
$region0: #{tpa_pose_enc.1}
  #allocation0 [shape = 'u32[]', space=smem, size = 0x4, offset = 0x4, fixed_abs, tag = 'smem constant byte address 0x4 - core index']
  #allocation1 [shape = 'u32[144,128]{1,0:T(1,128)}', space=vmem, size = 0x12000, scoped, tag = 'internal scratch']
  %s0 = inlined_call_operand.vmem [shape: bf16[16,128], index: 0, kind: input, shape index: {}]
  %s1 = inlined_call_operand.vmem [shape: bf16[128,512], index: 1, kind: input, shape index: {}]
  %s2 = inlined_call_operand.vmem [shape: bf16[512,512], index: 2, kind: input, shape index: {}]
  %s3 = inlined_call_operand.vmem [shape: bf16[512,512], index: 3, kind: input, shape index: {}]
  %s4 = inlined_call_operand.vmem [shape: bf16[512,512], index: 4, kind: input, shape index: {}]
  %s5 = inlined_call_operand.vmem [shape: bf16[512,512], index: 5, kind: input, shape index: {}]
  %s6 = inlined_call_operand.hbm [shape: bf16[512,512], index: 6, kind: input, shape index: {}]
  %s7 = inlined_call_operand.vmem [shape: f32[16,512], index: 7, kind: input, shape index: {}]
  %s8 = inlined_call_operand.vmem [shape: bf16[16,512], index: 8, kind: output, shape index: {}]
  %s9 = sld [smem:[#allocation0]]
  $region46: #{tpa_pose_enc.1} parent=0
    _
  %s11 = ssub.s32 1, %s9
  %s12 = scalar_select 0, %s11, %s9
  $region1: #{tpa_pose_enc.1} parent=0
    #allocation2 [shape = 'u8[524288]{0}', space=vmem, size = 0x80000, scoped, tag = 'input window, operand 6, single buffered']
    #allocation3 [shape = 's32[1]{0}', space=sflag, size = 0x4, scoped, tag = 'scoped memory for tpa_pose_enc.1']
    %13 = vsyncpa [#allocation3], 0
    // Predicated region
    $region2: #{tpa_pose_enc.1} parent=1 // pred_check
      _
    $region3: #{tpa_pose_enc.1} parent=1 // pred_check_branch
      %15 = sbr.rel (0) target = $region5
    $region4: #{tpa_pose_enc.1} parent=1 // pred_region
      _
    $region5: #{tpa_pose_enc.1} parent=1 // pred_fallthru
      _
    // Predicated region
    $region6: #{tpa_pose_enc.1} parent=1 // pred_check
      _
    $region7: #{tpa_pose_enc.1} parent=1 // pred_check_branch
      %17 = sbr.rel (0) target = $region9
    $region8: #{tpa_pose_enc.1} parent=1 // pred_region
      _
    $region9: #{tpa_pose_enc.1} parent=1 // pred_fallthru
      _
    // Predicated region
    $region10: #{tpa_pose_enc.1} parent=1 // pred_check
      _
    $region11: #{tpa_pose_enc.1} parent=1 // pred_check_branch
      %19 = sbr.rel (0) target = $region13
    $region12: #{tpa_pose_enc.1} parent=1 // pred_region
      _
    $region13: #{tpa_pose_enc.1} parent=1 // pred_fallthru
      _
    // Predicated region
    $region14: #{tpa_pose_enc.1} parent=1 // pred_check
      _
    $region15: #{tpa_pose_enc.1} parent=1 // pred_check_branch
      %21 = sbr.rel (0) target = $region17
    $region16: #{tpa_pose_enc.1} parent=1 // pred_region
      _
    $region17: #{tpa_pose_enc.1} parent=1 // pred_fallthru
      _
    // Predicated region
    $region18: #{tpa_pose_enc.1} parent=1 // pred_check
      _
    $region19: #{tpa_pose_enc.1} parent=1 // pred_check_branch
      %23 = sbr.rel (0) target = $region21
    $region20: #{tpa_pose_enc.1} parent=1 // pred_region
      _
    $region21: #{tpa_pose_enc.1} parent=1 // pred_fallthru
      _
    // Predicated region
    $region22: #{tpa_pose_enc.1} parent=1 // pred_check
      _
    $region23: #{tpa_pose_enc.1} parent=1 // pred_check_branch
      %25 = sbr.rel (0) target = $region25
    $region24: #{tpa_pose_enc.1} parent=1 // pred_region
      _
    $region25: #{tpa_pose_enc.1} parent=1 // pred_fallthru
      _
    // Predicated region
    $region26: #{tpa_pose_enc.1} parent=1 // pred_check
      _
    $region27: #{tpa_pose_enc.1} parent=1 // pred_check_branch
      %27 = sbr.rel (0) target = $region29
    $region28: #{tpa_pose_enc.1} parent=1 // pred_region
      %s29 = ssub.s32 16384, 16384
      %30 = vsyncadd [#allocation3], %s29
      %s31 = sshll.u32 [#allocation2], 4
      %s32 = int_to_ptr.vmem [resolvable:$true] %s31
      %37 = dma.hbm_to_vmem [thread:$0]  %s6, 16384, %s32, [#allocation3], 256, 256, 16
    $region29: #{tpa_pose_enc.1} parent=1 // pred_fallthru
      _
    // Predicated region
    $region30: #{tpa_pose_enc.1} parent=1 // pred_check
      _
    $region31: #{tpa_pose_enc.1} parent=1 // pred_check_branch
      %39 = sbr.rel (0) target = $region33
    $region32: #{tpa_pose_enc.1} parent=1 // pred_region
      _
    $region33: #{tpa_pose_enc.1} parent=1 // pred_fallthru
      _
    // Predicated region
    $region34: #{tpa_pose_enc.1} parent=1 // pred_check
      _
    $region35: #{tpa_pose_enc.1} parent=1 // pred_check_branch
      %41 = sbr.rel (0) target = $region37
    $region36: #{tpa_pose_enc.1} parent=1 // pred_region
      %42 = dma.done [#allocation3], 16384
    $region37: #{tpa_pose_enc.1} parent=1 // pred_fallthru
      _
    %v44 = vld [vmem:[%s7] sm:$0xff]
    %v45 = vld [vmem:[%s7 + $0x8] sm:$0xff]
    %v46 = vld [vmem:[%s7 + $0x10] sm:$0xff]
    %v47 = vld [vmem:[%s7 + $0x18] sm:$0xff]
    %v48 = vld [vmem:[%s7 + $0x20] sm:$0xff]
    %v49 = vld [vmem:[%s7 + $0x28] sm:$0xff]
    %v50 = vld [vmem:[%s7 + $0x30] sm:$0xff]
    %v51 = vld [vmem:[%s7 + $0x38] sm:$0xff]
    %v52 = vld [vmem:[%s1] sm:$0xff]
    %v53 = vld [vmem:[%s1 + $0x8] sm:$0xff]
    %v54 = vld [vmem:[%s1 + $0x10] sm:$0xff]
    %v55 = vld [vmem:[%s1 + $0x18] sm:$0xff]
    %v56 = vld [vmem:[%s1 + $0x20] sm:$0xff]
    %v57 = vld [vmem:[%s1 + $0x28] sm:$0xff]
    %v58 = vld [vmem:[%s1 + $0x30] sm:$0xff]
    %v59 = vld [vmem:[%s1 + $0x38] sm:$0xff]
    %v60 = vld [vmem:[%s1 + $0x40] sm:$0xff]
    %v61 = vld [vmem:[%s1 + $0x48] sm:$0xff]
    %v62 = vld [vmem:[%s1 + $0x50] sm:$0xff]
    %v63 = vld [vmem:[%s1 + $0x58] sm:$0xff]
    %v64 = vld [vmem:[%s1 + $0x60] sm:$0xff]
    %v65 = vld [vmem:[%s1 + $0x68] sm:$0xff]
    %v66 = vld [vmem:[%s1 + $0x70] sm:$0xff]
    %v67 = vld [vmem:[%s1 + $0x78] sm:$0xff]
    %v68 = vld [vmem:[%s1 + $0x80] sm:$0xff]
    %v69 = vld [vmem:[%s1 + $0x88] sm:$0xff]
    %v70 = vld [vmem:[%s1 + $0x90] sm:$0xff]
    %v71 = vld [vmem:[%s1 + $0x98] sm:$0xff]
    %v72 = vld [vmem:[%s1 + $0xa0] sm:$0xff]
    %v73 = vld [vmem:[%s1 + $0xa8] sm:$0xff]
    %v74 = vld [vmem:[%s1 + $0xb0] sm:$0xff]
    %v75 = vld [vmem:[%s1 + $0xb8] sm:$0xff]
    %v76 = vld [vmem:[%s1 + $0xc0] sm:$0xff]
    %v77 = vld [vmem:[%s1 + $0xc8] sm:$0xff]
    %v78 = vld [vmem:[%s1 + $0xd0] sm:$0xff]
    %v79 = vld [vmem:[%s1 + $0xd8] sm:$0xff]
    %v80 = vld [vmem:[%s1 + $0xe0] sm:$0xff]
    %v81 = vld [vmem:[%s1 + $0xe8] sm:$0xff]
    %v82 = vld [vmem:[%s1 + $0xf0] sm:$0xff]
    %v83 = vld [vmem:[%s1 + $0xf8] sm:$0xff]
    %v84 = vld [vmem:[%s2] sm:$0xff]
    %v85 = vld [vmem:[%s2 + $0x8] sm:$0xff]
    %v86 = vld [vmem:[%s2 + $0x10] sm:$0xff]
    %v87 = vld [vmem:[%s2 + $0x18] sm:$0xff]
    %v88 = vld [vmem:[%s2 + $0x20] sm:$0xff]
    %v89 = vld [vmem:[%s2 + $0x28] sm:$0xff]
    %v90 = vld [vmem:[%s2 + $0x30] sm:$0xff]
    %v91 = vld [vmem:[%s2 + $0x38] sm:$0xff]
    %v92 = vld [vmem:[%s2 + $0x40] sm:$0xff]
    %v93 = vld [vmem:[%s2 + $0x48] sm:$0xff]
    %v94 = vld [vmem:[%s2 + $0x50] sm:$0xff]
    %v95 = vld [vmem:[%s2 + $0x58] sm:$0xff]
    %v96 = vld [vmem:[%s2 + $0x60] sm:$0xff]
    %v97 = vld [vmem:[%s2 + $0x68] sm:$0xff]
    %v98 = vld [vmem:[%s2 + $0x70] sm:$0xff]
    %v99 = vld [vmem:[%s2 + $0x78] sm:$0xff]
    %v100 = vld [vmem:[%s2 + $0x80] sm:$0xff]
    %v101 = vld [vmem:[%s2 + $0x88] sm:$0xff]
    %v102 = vld [vmem:[%s2 + $0x90] sm:$0xff]
    %v103 = vld [vmem:[%s2 + $0x98] sm:$0xff]
    %v104 = vld [vmem:[%s2 + $0xa0] sm:$0xff]
    %v105 = vld [vmem:[%s2 + $0xa8] sm:$0xff]
    %v106 = vld [vmem:[%s2 + $0xb0] sm:$0xff]
    %v107 = vld [vmem:[%s2 + $0xb8] sm:$0xff]
    %v108 = vld [vmem:[%s2 + $0xc0] sm:$0xff]
    %v109 = vld [vmem:[%s2 + $0xc8] sm:$0xff]
    %v110 = vld [vmem:[%s2 + $0xd0] sm:$0xff]
    %v111 = vld [vmem:[%s2 + $0xd8] sm:$0xff]
    %v112 = vld [vmem:[%s2 + $0xe0] sm:$0xff]
    %v113 = vld [vmem:[%s2 + $0xe8] sm:$0xff]
    %v114 = vld [vmem:[%s2 + $0xf0] sm:$0xff]
    %v115 = vld [vmem:[%s2 + $0xf8] sm:$0xff]
    %v116 = vld [vmem:[%s2 + $0x100] sm:$0xff]
    %v117 = vld [vmem:[%s2 + $0x108] sm:$0xff]
    %v118 = vld [vmem:[%s2 + $0x110] sm:$0xff]
    %v119 = vld [vmem:[%s2 + $0x118] sm:$0xff]
    %v120 = vld [vmem:[%s2 + $0x120] sm:$0xff]
    %v121 = vld [vmem:[%s2 + $0x128] sm:$0xff]
    %v122 = vld [vmem:[%s2 + $0x130] sm:$0xff]
    %v123 = vld [vmem:[%s2 + $0x138] sm:$0xff]
    %v124 = vld [vmem:[%s2 + $0x140] sm:$0xff]
    %v125 = vld [vmem:[%s2 + $0x148] sm:$0xff]
    %v126 = vld [vmem:[%s2 + $0x150] sm:$0xff]
    %v127 = vld [vmem:[%s2 + $0x158] sm:$0xff]
    %v128 = vld [vmem:[%s2 + $0x160] sm:$0xff]
    %v129 = vld [vmem:[%s2 + $0x168] sm:$0xff]
    %v130 = vld [vmem:[%s2 + $0x170] sm:$0xff]
    %v131 = vld [vmem:[%s2 + $0x178] sm:$0xff]
    %v132 = vld [vmem:[%s2 + $0x180] sm:$0xff]
    %v133 = vld [vmem:[%s2 + $0x188] sm:$0xff]
    %v134 = vld [vmem:[%s2 + $0x190] sm:$0xff]
    %v135 = vld [vmem:[%s2 + $0x198] sm:$0xff]
    %v136 = vld [vmem:[%s2 + $0x1a0] sm:$0xff]
    %v137 = vld [vmem:[%s2 + $0x1a8] sm:$0xff]
    %v138 = vld [vmem:[%s2 + $0x1b0] sm:$0xff]
    %v139 = vld [vmem:[%s2 + $0x1b8] sm:$0xff]
    %v140 = vld [vmem:[%s2 + $0x1c0] sm:$0xff]
    %v141 = vld [vmem:[%s2 + $0x1c8] sm:$0xff]
    %v142 = vld [vmem:[%s2 + $0x1d0] sm:$0xff]
    %v143 = vld [vmem:[%s2 + $0x1d8] sm:$0xff]
    %v144 = vld [vmem:[%s2 + $0x1e0] sm:$0xff]
    %v145 = vld [vmem:[%s2 + $0x1e8] sm:$0xff]
    %v146 = vld [vmem:[%s2 + $0x1f0] sm:$0xff]
    %v147 = vld [vmem:[%s2 + $0x1f8] sm:$0xff]
    %v148 = vld [vmem:[%s2 + $0x200] sm:$0xff]
    %v149 = vld [vmem:[%s2 + $0x208] sm:$0xff]
    %v150 = vld [vmem:[%s2 + $0x210] sm:$0xff]
    %v151 = vld [vmem:[%s2 + $0x218] sm:$0xff]
    %v152 = vld [vmem:[%s2 + $0x220] sm:$0xff]
    %v153 = vld [vmem:[%s2 + $0x228] sm:$0xff]
    %v154 = vld [vmem:[%s2 + $0x230] sm:$0xff]
    %v155 = vld [vmem:[%s2 + $0x238] sm:$0xff]
    %v156 = vld [vmem:[%s2 + $0x240] sm:$0xff]
    %v157 = vld [vmem:[%s2 + $0x248] sm:$0xff]
    %v158 = vld [vmem:[%s2 + $0x250] sm:$0xff]
    %v159 = vld [vmem:[%s2 + $0x258] sm:$0xff]
    %v160 = vld [vmem:[%s2 + $0x260] sm:$0xff]
    %v161 = vld [vmem:[%s2 + $0x268] sm:$0xff]
    %v162 = vld [vmem:[%s2 + $0x270] sm:$0xff]
    %v163 = vld [vmem:[%s2 + $0x278] sm:$0xff]
    %v164 = vld [vmem:[%s2 + $0x280] sm:$0xff]
    %v165 = vld [vmem:[%s2 + $0x288] sm:$0xff]
    %v166 = vld [vmem:[%s2 + $0x290] sm:$0xff]
    %v167 = vld [vmem:[%s2 + $0x298] sm:$0xff]
    %v168 = vld [vmem:[%s2 + $0x2a0] sm:$0xff]
    %v169 = vld [vmem:[%s2 + $0x2a8] sm:$0xff]
    %v170 = vld [vmem:[%s2 + $0x2b0] sm:$0xff]
    %v171 = vld [vmem:[%s2 + $0x2b8] sm:$0xff]
    %v172 = vld [vmem:[%s2 + $0x2c0] sm:$0xff]
    %v173 = vld [vmem:[%s2 + $0x2c8] sm:$0xff]
    %v174 = vld [vmem:[%s2 + $0x2d0] sm:$0xff]
    %v175 = vld [vmem:[%s2 + $0x2d8] sm:$0xff]
    %v176 = vld [vmem:[%s2 + $0x2e0] sm:$0xff]
    %v177 = vld [vmem:[%s2 + $0x2e8] sm:$0xff]
    %v178 = vld [vmem:[%s2 + $0x2f0] sm:$0xff]
    %v179 = vld [vmem:[%s2 + $0x2f8] sm:$0xff]
    %v180 = vld [vmem:[%s2 + $0x300] sm:$0xff]
    %v181 = vld [vmem:[%s2 + $0x308] sm:$0xff]
    %v182 = vld [vmem:[%s2 + $0x310] sm:$0xff]
    %v183 = vld [vmem:[%s2 + $0x318] sm:$0xff]
    %v184 = vld [vmem:[%s2 + $0x320] sm:$0xff]
    %v185 = vld [vmem:[%s2 + $0x328] sm:$0xff]
    %v186 = vld [vmem:[%s2 + $0x330] sm:$0xff]
    %v187 = vld [vmem:[%s2 + $0x338] sm:$0xff]
    %v188 = vld [vmem:[%s2 + $0x340] sm:$0xff]
    %v189 = vld [vmem:[%s2 + $0x348] sm:$0xff]
    %v190 = vld [vmem:[%s2 + $0x350] sm:$0xff]
    %v191 = vld [vmem:[%s2 + $0x358] sm:$0xff]
    %v192 = vld [vmem:[%s2 + $0x360] sm:$0xff]
    %v193 = vld [vmem:[%s2 + $0x368] sm:$0xff]
    %v194 = vld [vmem:[%s2 + $0x370] sm:$0xff]
    %v195 = vld [vmem:[%s2 + $0x378] sm:$0xff]
    %v196 = vld [vmem:[%s2 + $0x380] sm:$0xff]
    %v197 = vld [vmem:[%s2 + $0x388] sm:$0xff]
    %v198 = vld [vmem:[%s2 + $0x390] sm:$0xff]
    %v199 = vld [vmem:[%s2 + $0x398] sm:$0xff]
    %v200 = vld [vmem:[%s2 + $0x3a0] sm:$0xff]
    %v201 = vld [vmem:[%s2 + $0x3a8] sm:$0xff]
    %v202 = vld [vmem:[%s2 + $0x3b0] sm:$0xff]
    %v203 = vld [vmem:[%s2 + $0x3b8] sm:$0xff]
    %v204 = vld [vmem:[%s2 + $0x3c0] sm:$0xff]
    %v205 = vld [vmem:[%s2 + $0x3c8] sm:$0xff]
    %v206 = vld [vmem:[%s2 + $0x3d0] sm:$0xff]
    %v207 = vld [vmem:[%s2 + $0x3d8] sm:$0xff]
    %v208 = vld [vmem:[%s2 + $0x3e0] sm:$0xff]
    %v209 = vld [vmem:[%s2 + $0x3e8] sm:$0xff]
    %v210 = vld [vmem:[%s2 + $0x3f0] sm:$0xff]
    %v211 = vld [vmem:[%s2 + $0x3f8] sm:$0xff]
    %v212 = vld [vmem:[%s3] sm:$0xff]
    %v213 = vld [vmem:[%s3 + $0x8] sm:$0xff]
    %v214 = vld [vmem:[%s3 + $0x10] sm:$0xff]
    %v215 = vld [vmem:[%s3 + $0x18] sm:$0xff]
    %v216 = vld [vmem:[%s3 + $0x20] sm:$0xff]
    %v217 = vld [vmem:[%s3 + $0x28] sm:$0xff]
    %v218 = vld [vmem:[%s3 + $0x30] sm:$0xff]
    %v219 = vld [vmem:[%s3 + $0x38] sm:$0xff]
    %v220 = vld [vmem:[%s3 + $0x40] sm:$0xff]
    %v221 = vld [vmem:[%s3 + $0x48] sm:$0xff]
    %v222 = vld [vmem:[%s3 + $0x50] sm:$0xff]
    %v223 = vld [vmem:[%s3 + $0x58] sm:$0xff]
    %v224 = vld [vmem:[%s3 + $0x60] sm:$0xff]
    %v225 = vld [vmem:[%s3 + $0x68] sm:$0xff]
    %v226 = vld [vmem:[%s3 + $0x70] sm:$0xff]
    %v227 = vld [vmem:[%s3 + $0x78] sm:$0xff]
    %v228 = vld [vmem:[%s3 + $0x80] sm:$0xff]
    %v229 = vld [vmem:[%s3 + $0x88] sm:$0xff]
    %v230 = vld [vmem:[%s3 + $0x90] sm:$0xff]
    %v231 = vld [vmem:[%s3 + $0x98] sm:$0xff]
    %v232 = vld [vmem:[%s3 + $0xa0] sm:$0xff]
    %v233 = vld [vmem:[%s3 + $0xa8] sm:$0xff]
    %v234 = vld [vmem:[%s3 + $0xb0] sm:$0xff]
    %v235 = vld [vmem:[%s3 + $0xb8] sm:$0xff]
    %v236 = vld [vmem:[%s3 + $0xc0] sm:$0xff]
    %v237 = vld [vmem:[%s3 + $0xc8] sm:$0xff]
    %v238 = vld [vmem:[%s3 + $0xd0] sm:$0xff]
    %v239 = vld [vmem:[%s3 + $0xd8] sm:$0xff]
    %v240 = vld [vmem:[%s3 + $0xe0] sm:$0xff]
    %v241 = vld [vmem:[%s3 + $0xe8] sm:$0xff]
    %v242 = vld [vmem:[%s3 + $0xf0] sm:$0xff]
    %v243 = vld [vmem:[%s3 + $0xf8] sm:$0xff]
    %v244 = vld [vmem:[%s3 + $0x100] sm:$0xff]
    %v245 = vld [vmem:[%s3 + $0x108] sm:$0xff]
    %v246 = vld [vmem:[%s3 + $0x110] sm:$0xff]
    %v247 = vld [vmem:[%s3 + $0x118] sm:$0xff]
    %v248 = vld [vmem:[%s3 + $0x120] sm:$0xff]
    %v249 = vld [vmem:[%s3 + $0x128] sm:$0xff]
    %v250 = vld [vmem:[%s3 + $0x130] sm:$0xff]
    %v251 = vld [vmem:[%s3 + $0x138] sm:$0xff]
    %v252 = vld [vmem:[%s3 + $0x140] sm:$0xff]
    %v253 = vld [vmem:[%s3 + $0x148] sm:$0xff]
    %v254 = vld [vmem:[%s3 + $0x150] sm:$0xff]
    %v255 = vld [vmem:[%s3 + $0x158] sm:$0xff]
    %v256 = vld [vmem:[%s3 + $0x160] sm:$0xff]
    %v257 = vld [vmem:[%s3 + $0x168] sm:$0xff]
    %v258 = vld [vmem:[%s3 + $0x170] sm:$0xff]
    %v259 = vld [vmem:[%s3 + $0x178] sm:$0xff]
    %v260 = vld [vmem:[%s3 + $0x180] sm:$0xff]
    %v261 = vld [vmem:[%s3 + $0x188] sm:$0xff]
    %v262 = vld [vmem:[%s3 + $0x190] sm:$0xff]
    %v263 = vld [vmem:[%s3 + $0x198] sm:$0xff]
    %v264 = vld [vmem:[%s3 + $0x1a0] sm:$0xff]
    %v265 = vld [vmem:[%s3 + $0x1a8] sm:$0xff]
    %v266 = vld [vmem:[%s3 + $0x1b0] sm:$0xff]
    %v267 = vld [vmem:[%s3 + $0x1b8] sm:$0xff]
    %v268 = vld [vmem:[%s3 + $0x1c0] sm:$0xff]
    %v269 = vld [vmem:[%s3 + $0x1c8] sm:$0xff]
    %v270 = vld [vmem:[%s3 + $0x1d0] sm:$0xff]
    %v271 = vld [vmem:[%s3 + $0x1d8] sm:$0xff]
    %v272 = vld [vmem:[%s3 + $0x1e0] sm:$0xff]
    %v273 = vld [vmem:[%s3 + $0x1e8] sm:$0xff]
    %v274 = vld [vmem:[%s3 + $0x1f0] sm:$0xff]
    %v275 = vld [vmem:[%s3 + $0x1f8] sm:$0xff]
    %v276 = vld [vmem:[%s3 + $0x200] sm:$0xff]
    %v277 = vld [vmem:[%s3 + $0x208] sm:$0xff]
    %v278 = vld [vmem:[%s3 + $0x210] sm:$0xff]
    %v279 = vld [vmem:[%s3 + $0x218] sm:$0xff]
    %v280 = vld [vmem:[%s3 + $0x220] sm:$0xff]
    %v281 = vld [vmem:[%s3 + $0x228] sm:$0xff]
    %v282 = vld [vmem:[%s3 + $0x230] sm:$0xff]
    %v283 = vld [vmem:[%s3 + $0x238] sm:$0xff]
    %v284 = vld [vmem:[%s3 + $0x240] sm:$0xff]
    %v285 = vld [vmem:[%s3 + $0x248] sm:$0xff]
    %v286 = vld [vmem:[%s3 + $0x250] sm:$0xff]
    %v287 = vld [vmem:[%s3 + $0x258] sm:$0xff]
    %v288 = vld [vmem:[%s3 + $0x260] sm:$0xff]
    %v289 = vld [vmem:[%s3 + $0x268] sm:$0xff]
    %v290 = vld [vmem:[%s3 + $0x270] sm:$0xff]
    %v291 = vld [vmem:[%s3 + $0x278] sm:$0xff]
    %v292 = vld [vmem:[%s3 + $0x280] sm:$0xff]
    %v293 = vld [vmem:[%s3 + $0x288] sm:$0xff]
    %v294 = vld [vmem:[%s3 + $0x290] sm:$0xff]
    %v295 = vld [vmem:[%s3 + $0x298] sm:$0xff]
    %v296 = vld [vmem:[%s3 + $0x2a0] sm:$0xff]
    %v297 = vld [vmem:[%s3 + $0x2a8] sm:$0xff]
    %v298 = vld [vmem:[%s3 + $0x2b0] sm:$0xff]
    %v299 = vld [vmem:[%s3 + $0x2b8] sm:$0xff]
    %v300 = vld [vmem:[%s3 + $0x2c0] sm:$0xff]
    %v301 = vld [vmem:[%s3 + $0x2c8] sm:$0xff]
    %v302 = vld [vmem:[%s3 + $0x2d0] sm:$0xff]
    %v303 = vld [vmem:[%s3 + $0x2d8] sm:$0xff]
    %v304 = vld [vmem:[%s3 + $0x2e0] sm:$0xff]
    %v305 = vld [vmem:[%s3 + $0x2e8] sm:$0xff]
    %v306 = vld [vmem:[%s3 + $0x2f0] sm:$0xff]
    %v307 = vld [vmem:[%s3 + $0x2f8] sm:$0xff]
    %v308 = vld [vmem:[%s3 + $0x300] sm:$0xff]
    %v309 = vld [vmem:[%s3 + $0x308] sm:$0xff]
    %v310 = vld [vmem:[%s3 + $0x310] sm:$0xff]
    %v311 = vld [vmem:[%s3 + $0x318] sm:$0xff]
    %v312 = vld [vmem:[%s3 + $0x320] sm:$0xff]
    %v313 = vld [vmem:[%s3 + $0x328] sm:$0xff]
    %v314 = vld [vmem:[%s3 + $0x330] sm:$0xff]
    %v315 = vld [vmem:[%s3 + $0x338] sm:$0xff]
    %v316 = vld [vmem:[%s3 + $0x340] sm:$0xff]
    %v317 = vld [vmem:[%s3 + $0x348] sm:$0xff]
    %v318 = vld [vmem:[%s3 + $0x350] sm:$0xff]
    %v319 = vld [vmem:[%s3 + $0x358] sm:$0xff]
    %v320 = vld [vmem:[%s3 + $0x360] sm:$0xff]
    %v321 = vld [vmem:[%s3 + $0x368] sm:$0xff]
    %v322 = vld [vmem:[%s3 + $0x370] sm:$0xff]
    %v323 = vld [vmem:[%s3 + $0x378] sm:$0xff]
    %v324 = vld [vmem:[%s3 + $0x380] sm:$0xff]
    %v325 = vld [vmem:[%s3 + $0x388] sm:$0xff]
    %v326 = vld [vmem:[%s3 + $0x390] sm:$0xff]
    %v327 = vld [vmem:[%s3 + $0x398] sm:$0xff]
    %v328 = vld [vmem:[%s3 + $0x3a0] sm:$0xff]
    %v329 = vld [vmem:[%s3 + $0x3a8] sm:$0xff]
    %v330 = vld [vmem:[%s3 + $0x3b0] sm:$0xff]
    %v331 = vld [vmem:[%s3 + $0x3b8] sm:$0xff]
    %v332 = vld [vmem:[%s3 + $0x3c0] sm:$0xff]
    %v333 = vld [vmem:[%s3 + $0x3c8] sm:$0xff]
    %v334 = vld [vmem:[%s3 + $0x3d0] sm:$0xff]
    %v335 = vld [vmem:[%s3 + $0x3d8] sm:$0xff]
    %v336 = vld [vmem:[%s3 + $0x3e0] sm:$0xff]
    %v337 = vld [vmem:[%s3 + $0x3e8] sm:$0xff]
    %v338 = vld [vmem:[%s3 + $0x3f0] sm:$0xff]
    %v339 = vld [vmem:[%s3 + $0x3f8] sm:$0xff]
    %v340 = vld [vmem:[%s4] sm:$0xff]
    %v341 = vld [vmem:[%s4 + $0x8] sm:$0xff]
    %v342 = vld [vmem:[%s4 + $0x10] sm:$0xff]
    %v343 = vld [vmem:[%s4 + $0x18] sm:$0xff]
    %v344 = vld [vmem:[%s4 + $0x20] sm:$0xff]
    %v345 = vld [vmem:[%s4 + $0x28] sm:$0xff]
    %v346 = vld [vmem:[%s4 + $0x30] sm:$0xff]
    %v347 = vld [vmem:[%s4 + $0x38] sm:$0xff]
    %v348 = vld [vmem:[%s4 + $0x40] sm:$0xff]
    %v349 = vld [vmem:[%s4 + $0x48] sm:$0xff]
    %v350 = vld [vmem:[%s4 + $0x50] sm:$0xff]
    %v351 = vld [vmem:[%s4 + $0x58] sm:$0xff]
    %v352 = vld [vmem:[%s4 + $0x60] sm:$0xff]
    %v353 = vld [vmem:[%s4 + $0x68] sm:$0xff]
    %v354 = vld [vmem:[%s4 + $0x70] sm:$0xff]
    %v355 = vld [vmem:[%s4 + $0x78] sm:$0xff]
    %v356 = vld [vmem:[%s4 + $0x80] sm:$0xff]
    %v357 = vld [vmem:[%s4 + $0x88] sm:$0xff]
    %v358 = vld [vmem:[%s4 + $0x90] sm:$0xff]
    %v359 = vld [vmem:[%s4 + $0x98] sm:$0xff]
    %v360 = vld [vmem:[%s4 + $0xa0] sm:$0xff]
    %v361 = vld [vmem:[%s4 + $0xa8] sm:$0xff]
    %v362 = vld [vmem:[%s4 + $0xb0] sm:$0xff]
    %v363 = vld [vmem:[%s4 + $0xb8] sm:$0xff]
    %v364 = vld [vmem:[%s4 + $0xc0] sm:$0xff]
    %v365 = vld [vmem:[%s4 + $0xc8] sm:$0xff]
    %v366 = vld [vmem:[%s4 + $0xd0] sm:$0xff]
    %v367 = vld [vmem:[%s4 + $0xd8] sm:$0xff]
    %v368 = vld [vmem:[%s4 + $0xe0] sm:$0xff]
    %v369 = vld [vmem:[%s4 + $0xe8] sm:$0xff]
    %v370 = vld [vmem:[%s4 + $0xf0] sm:$0xff]
    %v371 = vld [vmem:[%s4 + $0xf8] sm:$0xff]
    %v372 = vld [vmem:[%s4 + $0x100] sm:$0xff]
    %v373 = vld [vmem:[%s4 + $0x108] sm:$0xff]
    %v374 = vld [vmem:[%s4 + $0x110] sm:$0xff]
    %v375 = vld [vmem:[%s4 + $0x118] sm:$0xff]
    %v376 = vld [vmem:[%s4 + $0x120] sm:$0xff]
    %v377 = vld [vmem:[%s4 + $0x128] sm:$0xff]
    %v378 = vld [vmem:[%s4 + $0x130] sm:$0xff]
    %v379 = vld [vmem:[%s4 + $0x138] sm:$0xff]
    %v380 = vld [vmem:[%s4 + $0x140] sm:$0xff]
    %v381 = vld [vmem:[%s4 + $0x148] sm:$0xff]
    %v382 = vld [vmem:[%s4 + $0x150] sm:$0xff]
    %v383 = vld [vmem:[%s4 + $0x158] sm:$0xff]
    %v384 = vld [vmem:[%s4 + $0x160] sm:$0xff]
    %v385 = vld [vmem:[%s4 + $0x168] sm:$0xff]
    %v386 = vld [vmem:[%s4 + $0x170] sm:$0xff]
    %v387 = vld [vmem:[%s4 + $0x178] sm:$0xff]
    %v388 = vld [vmem:[%s4 + $0x180] sm:$0xff]
    %v389 = vld [vmem:[%s4 + $0x188] sm:$0xff]
    %v390 = vld [vmem:[%s4 + $0x190] sm:$0xff]
    %v391 = vld [vmem:[%s4 + $0x198] sm:$0xff]
    %v392 = vld [vmem:[%s4 + $0x1a0] sm:$0xff]
    %v393 = vld [vmem:[%s4 + $0x1a8] sm:$0xff]
    %v394 = vld [vmem:[%s4 + $0x1b0] sm:$0xff]
    %v395 = vld [vmem:[%s4 + $0x1b8] sm:$0xff]
    %v396 = vld [vmem:[%s4 + $0x1c0] sm:$0xff]
    %v397 = vld [vmem:[%s4 + $0x1c8] sm:$0xff]
    %v398 = vld [vmem:[%s4 + $0x1d0] sm:$0xff]
    %v399 = vld [vmem:[%s4 + $0x1d8] sm:$0xff]
    %v400 = vld [vmem:[%s4 + $0x1e0] sm:$0xff]
    %v401 = vld [vmem:[%s4 + $0x1e8] sm:$0xff]
    %v402 = vld [vmem:[%s4 + $0x1f0] sm:$0xff]
    %v403 = vld [vmem:[%s4 + $0x1f8] sm:$0xff]
    %v404 = vld [vmem:[%s4 + $0x200] sm:$0xff]
    %v405 = vld [vmem:[%s4 + $0x208] sm:$0xff]
    %v406 = vld [vmem:[%s4 + $0x210] sm:$0xff]
    %v407 = vld [vmem:[%s4 + $0x218] sm:$0xff]
    %v408 = vld [vmem:[%s4 + $0x220] sm:$0xff]
    %v409 = vld [vmem:[%s4 + $0x228] sm:$0xff]
    %v410 = vld [vmem:[%s4 + $0x230] sm:$0xff]
    %v411 = vld [vmem:[%s4 + $0x238] sm:$0xff]
    %v412 = vld [vmem:[%s4 + $0x240] sm:$0xff]
    %v413 = vld [vmem:[%s4 + $0x248] sm:$0xff]
    %v414 = vld [vmem:[%s4 + $0x250] sm:$0xff]
    %v415 = vld [vmem:[%s4 + $0x258] sm:$0xff]
    %v416 = vld [vmem:[%s4 + $0x260] sm:$0xff]
    %v417 = vld [vmem:[%s4 + $0x268] sm:$0xff]
    %v418 = vld [vmem:[%s4 + $0x270] sm:$0xff]
    %v419 = vld [vmem:[%s4 + $0x278] sm:$0xff]
    %v420 = vld [vmem:[%s4 + $0x280] sm:$0xff]
    %v421 = vld [vmem:[%s4 + $0x288] sm:$0xff]
    %v422 = vld [vmem:[%s4 + $0x290] sm:$0xff]
    %v423 = vld [vmem:[%s4 + $0x298] sm:$0xff]
    %v424 = vld [vmem:[%s4 + $0x2a0] sm:$0xff]
    %v425 = vld [vmem:[%s4 + $0x2a8] sm:$0xff]
    %v426 = vld [vmem:[%s4 + $0x2b0] sm:$0xff]
    %v427 = vld [vmem:[%s4 + $0x2b8] sm:$0xff]
    %v428 = vld [vmem:[%s4 + $0x2c0] sm:$0xff]
    %v429 = vld [vmem:[%s4 + $0x2c8] sm:$0xff]
    %v430 = vld [vmem:[%s4 + $0x2d0] sm:$0xff]
    %v431 = vld [vmem:[%s4 + $0x2d8] sm:$0xff]
    %v432 = vld [vmem:[%s4 + $0x2e0] sm:$0xff]
    %v433 = vld [vmem:[%s4 + $0x2e8] sm:$0xff]
    %v434 = vld [vmem:[%s4 + $0x2f0] sm:$0xff]
    %v435 = vld [vmem:[%s4 + $0x2f8] sm:$0xff]
    %v436 = vld [vmem:[%s4 + $0x300] sm:$0xff]
    %v437 = vld [vmem:[%s4 + $0x308] sm:$0xff]
    %v438 = vld [vmem:[%s4 + $0x310] sm:$0xff]
    %v439 = vld [vmem:[%s4 + $0x318] sm:$0xff]
    %v440 = vld [vmem:[%s4 + $0x320] sm:$0xff]
    %v441 = vld [vmem:[%s4 + $0x328] sm:$0xff]
    %v442 = vld [vmem:[%s4 + $0x330] sm:$0xff]
    %v443 = vld [vmem:[%s4 + $0x338] sm:$0xff]
    %v444 = vld [vmem:[%s4 + $0x340] sm:$0xff]
    %v445 = vld [vmem:[%s4 + $0x348] sm:$0xff]
    %v446 = vld [vmem:[%s4 + $0x350] sm:$0xff]
    %v447 = vld [vmem:[%s4 + $0x358] sm:$0xff]
    %v448 = vld [vmem:[%s4 + $0x360] sm:$0xff]
    %v449 = vld [vmem:[%s4 + $0x368] sm:$0xff]
    %v450 = vld [vmem:[%s4 + $0x370] sm:$0xff]
    %v451 = vld [vmem:[%s4 + $0x378] sm:$0xff]
    %v452 = vld [vmem:[%s4 + $0x380] sm:$0xff]
    %v453 = vld [vmem:[%s4 + $0x388] sm:$0xff]
    %v454 = vld [vmem:[%s4 + $0x390] sm:$0xff]
    %v455 = vld [vmem:[%s4 + $0x398] sm:$0xff]
    %v456 = vld [vmem:[%s4 + $0x3a0] sm:$0xff]
    %v457 = vld [vmem:[%s4 + $0x3a8] sm:$0xff]
    %v458 = vld [vmem:[%s4 + $0x3b0] sm:$0xff]
    %v459 = vld [vmem:[%s4 + $0x3b8] sm:$0xff]
    %v460 = vld [vmem:[%s4 + $0x3c0] sm:$0xff]
    %v461 = vld [vmem:[%s4 + $0x3c8] sm:$0xff]
    %v462 = vld [vmem:[%s4 + $0x3d0] sm:$0xff]
    %v463 = vld [vmem:[%s4 + $0x3d8] sm:$0xff]
    %v464 = vld [vmem:[%s4 + $0x3e0] sm:$0xff]
    %v465 = vld [vmem:[%s4 + $0x3e8] sm:$0xff]
    %v466 = vld [vmem:[%s4 + $0x3f0] sm:$0xff]
    %v467 = vld [vmem:[%s4 + $0x3f8] sm:$0xff]
    %v468 = vld [vmem:[%s5] sm:$0xff]
    %v469 = vld [vmem:[%s5 + $0x8] sm:$0xff]
    %v470 = vld [vmem:[%s5 + $0x10] sm:$0xff]
    %v471 = vld [vmem:[%s5 + $0x18] sm:$0xff]
    %v472 = vld [vmem:[%s5 + $0x20] sm:$0xff]
    %v473 = vld [vmem:[%s5 + $0x28] sm:$0xff]
    %v474 = vld [vmem:[%s5 + $0x30] sm:$0xff]
    %v475 = vld [vmem:[%s5 + $0x38] sm:$0xff]
    %v476 = vld [vmem:[%s5 + $0x40] sm:$0xff]
    %v477 = vld [vmem:[%s5 + $0x48] sm:$0xff]
    %v478 = vld [vmem:[%s5 + $0x50] sm:$0xff]
    %v479 = vld [vmem:[%s5 + $0x58] sm:$0xff]
    %v480 = vld [vmem:[%s5 + $0x60] sm:$0xff]
    %v481 = vld [vmem:[%s5 + $0x68] sm:$0xff]
    %v482 = vld [vmem:[%s5 + $0x70] sm:$0xff]
    %v483 = vld [vmem:[%s5 + $0x78] sm:$0xff]
    %v484 = vld [vmem:[%s5 + $0x80] sm:$0xff]
    %v485 = vld [vmem:[%s5 + $0x88] sm:$0xff]
    %v486 = vld [vmem:[%s5 + $0x90] sm:$0xff]
    %v487 = vld [vmem:[%s5 + $0x98] sm:$0xff]
    %v488 = vld [vmem:[%s5 + $0xa0] sm:$0xff]
    %v489 = vld [vmem:[%s5 + $0xa8] sm:$0xff]
    %v490 = vld [vmem:[%s5 + $0xb0] sm:$0xff]
    %v491 = vld [vmem:[%s5 + $0xb8] sm:$0xff]
    %v492 = vld [vmem:[%s5 + $0xc0] sm:$0xff]
    %v493 = vld [vmem:[%s5 + $0xc8] sm:$0xff]
    %v494 = vld [vmem:[%s5 + $0xd0] sm:$0xff]
    %v495 = vld [vmem:[%s5 + $0xd8] sm:$0xff]
    %v496 = vld [vmem:[%s5 + $0xe0] sm:$0xff]
    %v497 = vld [vmem:[%s5 + $0xe8] sm:$0xff]
    %v498 = vld [vmem:[%s5 + $0xf0] sm:$0xff]
    %v499 = vld [vmem:[%s5 + $0xf8] sm:$0xff]
    %v500 = vld [vmem:[%s5 + $0x100] sm:$0xff]
    %v501 = vld [vmem:[%s5 + $0x108] sm:$0xff]
    %v502 = vld [vmem:[%s5 + $0x110] sm:$0xff]
    %v503 = vld [vmem:[%s5 + $0x118] sm:$0xff]
    %v504 = vld [vmem:[%s5 + $0x120] sm:$0xff]
    %v505 = vld [vmem:[%s5 + $0x128] sm:$0xff]
    %v506 = vld [vmem:[%s5 + $0x130] sm:$0xff]
    %v507 = vld [vmem:[%s5 + $0x138] sm:$0xff]
    %v508 = vld [vmem:[%s5 + $0x140] sm:$0xff]
    %v509 = vld [vmem:[%s5 + $0x148] sm:$0xff]
    %v510 = vld [vmem:[%s5 + $0x150] sm:$0xff]
    %v511 = vld [vmem:[%s5 + $0x158] sm:$0xff]
    %v512 = vld [vmem:[%s5 + $0x160] sm:$0xff]
    %v513 = vld [vmem:[%s5 + $0x168] sm:$0xff]
    %v514 = vld [vmem:[%s5 + $0x170] sm:$0xff]
    %v515 = vld [vmem:[%s5 + $0x178] sm:$0xff]
    %v516 = vld [vmem:[%s5 + $0x180] sm:$0xff]
    %v517 = vld [vmem:[%s5 + $0x188] sm:$0xff]
    %v518 = vld [vmem:[%s5 + $0x190] sm:$0xff]
    %v519 = vld [vmem:[%s5 + $0x198] sm:$0xff]
    %v520 = vld [vmem:[%s5 + $0x1a0] sm:$0xff]
    %v521 = vld [vmem:[%s5 + $0x1a8] sm:$0xff]
    %v522 = vld [vmem:[%s5 + $0x1b0] sm:$0xff]
    %v523 = vld [vmem:[%s5 + $0x1b8] sm:$0xff]
    %v524 = vld [vmem:[%s5 + $0x1c0] sm:$0xff]
    %v525 = vld [vmem:[%s5 + $0x1c8] sm:$0xff]
    %v526 = vld [vmem:[%s5 + $0x1d0] sm:$0xff]
    %v527 = vld [vmem:[%s5 + $0x1d8] sm:$0xff]
    %v528 = vld [vmem:[%s5 + $0x1e0] sm:$0xff]
    %v529 = vld [vmem:[%s5 + $0x1e8] sm:$0xff]
    %v530 = vld [vmem:[%s5 + $0x1f0] sm:$0xff]
    %v531 = vld [vmem:[%s5 + $0x1f8] sm:$0xff]
    %v532 = vld [vmem:[%s5 + $0x200] sm:$0xff]
    %v533 = vld [vmem:[%s5 + $0x208] sm:$0xff]
    %v534 = vld [vmem:[%s5 + $0x210] sm:$0xff]
    %v535 = vld [vmem:[%s5 + $0x218] sm:$0xff]
    %v536 = vld [vmem:[%s5 + $0x220] sm:$0xff]
    %v537 = vld [vmem:[%s5 + $0x228] sm:$0xff]
    %v538 = vld [vmem:[%s5 + $0x230] sm:$0xff]
    %v539 = vld [vmem:[%s5 + $0x238] sm:$0xff]
    %v540 = vld [vmem:[%s5 + $0x240] sm:$0xff]
    %v541 = vld [vmem:[%s5 + $0x248] sm:$0xff]
    %v542 = vld [vmem:[%s5 + $0x250] sm:$0xff]
    %v543 = vld [vmem:[%s5 + $0x258] sm:$0xff]
    %v544 = vld [vmem:[%s5 + $0x260] sm:$0xff]
    %v545 = vld [vmem:[%s5 + $0x268] sm:$0xff]
    %v546 = vld [vmem:[%s5 + $0x270] sm:$0xff]
    %v547 = vld [vmem:[%s5 + $0x278] sm:$0xff]
    %v548 = vld [vmem:[%s5 + $0x280] sm:$0xff]
    %v549 = vld [vmem:[%s5 + $0x288] sm:$0xff]
    %v550 = vld [vmem:[%s5 + $0x290] sm:$0xff]
    %v551 = vld [vmem:[%s5 + $0x298] sm:$0xff]
    %v552 = vld [vmem:[%s5 + $0x2a0] sm:$0xff]
    %v553 = vld [vmem:[%s5 + $0x2a8] sm:$0xff]
    %v554 = vld [vmem:[%s5 + $0x2b0] sm:$0xff]
    %v555 = vld [vmem:[%s5 + $0x2b8] sm:$0xff]
    %v556 = vld [vmem:[%s5 + $0x2c0] sm:$0xff]
    %v557 = vld [vmem:[%s5 + $0x2c8] sm:$0xff]
    %v558 = vld [vmem:[%s5 + $0x2d0] sm:$0xff]
    %v559 = vld [vmem:[%s5 + $0x2d8] sm:$0xff]
    %v560 = vld [vmem:[%s5 + $0x2e0] sm:$0xff]
    %v561 = vld [vmem:[%s5 + $0x2e8] sm:$0xff]
    %v562 = vld [vmem:[%s5 + $0x2f0] sm:$0xff]
    %v563 = vld [vmem:[%s5 + $0x2f8] sm:$0xff]
    %v564 = vld [vmem:[%s5 + $0x300] sm:$0xff]
    %v565 = vld [vmem:[%s5 + $0x308] sm:$0xff]
    %v566 = vld [vmem:[%s5 + $0x310] sm:$0xff]
    %v567 = vld [vmem:[%s5 + $0x318] sm:$0xff]
    %v568 = vld [vmem:[%s5 + $0x320] sm:$0xff]
    %v569 = vld [vmem:[%s5 + $0x328] sm:$0xff]
    %v570 = vld [vmem:[%s5 + $0x330] sm:$0xff]
    %v571 = vld [vmem:[%s5 + $0x338] sm:$0xff]
    %v572 = vld [vmem:[%s5 + $0x340] sm:$0xff]
    %v573 = vld [vmem:[%s5 + $0x348] sm:$0xff]
    %v574 = vld [vmem:[%s5 + $0x350] sm:$0xff]
    %v575 = vld [vmem:[%s5 + $0x358] sm:$0xff]
    %v576 = vld [vmem:[%s5 + $0x360] sm:$0xff]
    %v577 = vld [vmem:[%s5 + $0x368] sm:$0xff]
    %v578 = vld [vmem:[%s5 + $0x370] sm:$0xff]
    %v579 = vld [vmem:[%s5 + $0x378] sm:$0xff]
    %v580 = vld [vmem:[%s5 + $0x380] sm:$0xff]
    %v581 = vld [vmem:[%s5 + $0x388] sm:$0xff]
    %v582 = vld [vmem:[%s5 + $0x390] sm:$0xff]
    %v583 = vld [vmem:[%s5 + $0x398] sm:$0xff]
    %v584 = vld [vmem:[%s5 + $0x3a0] sm:$0xff]
    %v585 = vld [vmem:[%s5 + $0x3a8] sm:$0xff]
    %v586 = vld [vmem:[%s5 + $0x3b0] sm:$0xff]
    %v587 = vld [vmem:[%s5 + $0x3b8] sm:$0xff]
    %v588 = vld [vmem:[%s5 + $0x3c0] sm:$0xff]
    %v589 = vld [vmem:[%s5 + $0x3c8] sm:$0xff]
    %v590 = vld [vmem:[%s5 + $0x3d0] sm:$0xff]
    %v591 = vld [vmem:[%s5 + $0x3d8] sm:$0xff]
    %v592 = vld [vmem:[%s5 + $0x3e0] sm:$0xff]
    %v593 = vld [vmem:[%s5 + $0x3e8] sm:$0xff]
    %v594 = vld [vmem:[%s5 + $0x3f0] sm:$0xff]
    %v595 = vld [vmem:[%s5 + $0x3f8] sm:$0xff]
    %v596 = vld [vmem:[#allocation2] sm:$0xff]
    %v597 = vld [vmem:[#allocation2 + $0x8] sm:$0xff]
    %v598 = vld [vmem:[#allocation2 + $0x10] sm:$0xff]
    %v599 = vld [vmem:[#allocation2 + $0x18] sm:$0xff]
    %v600 = vld [vmem:[#allocation2 + $0x20] sm:$0xff]
    %v601 = vld [vmem:[#allocation2 + $0x28] sm:$0xff]
    %v602 = vld [vmem:[#allocation2 + $0x30] sm:$0xff]
    %v603 = vld [vmem:[#allocation2 + $0x38] sm:$0xff]
    %v604 = vld [vmem:[#allocation2 + $0x40] sm:$0xff]
    %v605 = vld [vmem:[#allocation2 + $0x48] sm:$0xff]
    %v606 = vld [vmem:[#allocation2 + $0x50] sm:$0xff]
    %v607 = vld [vmem:[#allocation2 + $0x58] sm:$0xff]
    %v608 = vld [vmem:[#allocation2 + $0x60] sm:$0xff]
    %v609 = vld [vmem:[#allocation2 + $0x68] sm:$0xff]
    %v610 = vld [vmem:[#allocation2 + $0x70] sm:$0xff]
    %v611 = vld [vmem:[#allocation2 + $0x78] sm:$0xff]
    %v612 = vld [vmem:[#allocation2 + $0x80] sm:$0xff]
    %v613 = vld [vmem:[#allocation2 + $0x88] sm:$0xff]
    %v614 = vld [vmem:[#allocation2 + $0x90] sm:$0xff]
    %v615 = vld [vmem:[#allocation2 + $0x98] sm:$0xff]
    %v616 = vld [vmem:[#allocation2 + $0xa0] sm:$0xff]
    %v617 = vld [vmem:[#allocation2 + $0xa8] sm:$0xff]
    %v618 = vld [vmem:[#allocation2 + $0xb0] sm:$0xff]
    %v619 = vld [vmem:[#allocation2 + $0xb8] sm:$0xff]
    %v620 = vld [vmem:[#allocation2 + $0xc0] sm:$0xff]
    %v621 = vld [vmem:[#allocation2 + $0xc8] sm:$0xff]
    %v622 = vld [vmem:[#allocation2 + $0xd0] sm:$0xff]
    %v623 = vld [vmem:[#allocation2 + $0xd8] sm:$0xff]
    %v624 = vld [vmem:[#allocation2 + $0xe0] sm:$0xff]
    %v625 = vld [vmem:[#allocation2 + $0xe8] sm:$0xff]
    %v626 = vld [vmem:[#allocation2 + $0xf0] sm:$0xff]
    %v627 = vld [vmem:[#allocation2 + $0xf8] sm:$0xff]
    %v628 = vld [vmem:[#allocation2 + $0x100] sm:$0xff]
    %v629 = vld [vmem:[#allocation2 + $0x108] sm:$0xff]
    %v630 = vld [vmem:[#allocation2 + $0x110] sm:$0xff]
    %v631 = vld [vmem:[#allocation2 + $0x118] sm:$0xff]
    %v632 = vld [vmem:[#allocation2 + $0x120] sm:$0xff]
    %v633 = vld [vmem:[#allocation2 + $0x128] sm:$0xff]
    %v634 = vld [vmem:[#allocation2 + $0x130] sm:$0xff]
    %v635 = vld [vmem:[#allocation2 + $0x138] sm:$0xff]
    %v636 = vld [vmem:[#allocation2 + $0x140] sm:$0xff]
    %v637 = vld [vmem:[#allocation2 + $0x148] sm:$0xff]
    %v638 = vld [vmem:[#allocation2 + $0x150] sm:$0xff]
    %v639 = vld [vmem:[#allocation2 + $0x158] sm:$0xff]
    %v640 = vld [vmem:[#allocation2 + $0x160] sm:$0xff]
    %v641 = vld [vmem:[#allocation2 + $0x168] sm:$0xff]
    %v642 = vld [vmem:[#allocation2 + $0x170] sm:$0xff]
    %v643 = vld [vmem:[#allocation2 + $0x178] sm:$0xff]
    %v644 = vld [vmem:[#allocation2 + $0x180] sm:$0xff]
    %v645 = vld [vmem:[#allocation2 + $0x188] sm:$0xff]
    %v646 = vld [vmem:[#allocation2 + $0x190] sm:$0xff]
    %v647 = vld [vmem:[#allocation2 + $0x198] sm:$0xff]
    %v648 = vld [vmem:[#allocation2 + $0x1a0] sm:$0xff]
    %v649 = vld [vmem:[#allocation2 + $0x1a8] sm:$0xff]
    %v650 = vld [vmem:[#allocation2 + $0x1b0] sm:$0xff]
    %v651 = vld [vmem:[#allocation2 + $0x1b8] sm:$0xff]
    %v652 = vld [vmem:[#allocation2 + $0x1c0] sm:$0xff]
    %v653 = vld [vmem:[#allocation2 + $0x1c8] sm:$0xff]
    %v654 = vld [vmem:[#allocation2 + $0x1d0] sm:$0xff]
    %v655 = vld [vmem:[#allocation2 + $0x1d8] sm:$0xff]
    %v656 = vld [vmem:[#allocation2 + $0x1e0] sm:$0xff]
    %v657 = vld [vmem:[#allocation2 + $0x1e8] sm:$0xff]
    %v658 = vld [vmem:[#allocation2 + $0x1f0] sm:$0xff]
    %v659 = vld [vmem:[#allocation2 + $0x1f8] sm:$0xff]
    %v660 = vld [vmem:[#allocation2 + $0x200] sm:$0xff]
    %v661 = vld [vmem:[#allocation2 + $0x208] sm:$0xff]
    %v662 = vld [vmem:[#allocation2 + $0x210] sm:$0xff]
    %v663 = vld [vmem:[#allocation2 + $0x218] sm:$0xff]
    %v664 = vld [vmem:[#allocation2 + $0x220] sm:$0xff]
    %v665 = vld [vmem:[#allocation2 + $0x228] sm:$0xff]
    %v666 = vld [vmem:[#allocation2 + $0x230] sm:$0xff]
    %v667 = vld [vmem:[#allocation2 + $0x238] sm:$0xff]
    %v668 = vld [vmem:[#allocation2 + $0x240] sm:$0xff]
    %v669 = vld [vmem:[#allocation2 + $0x248] sm:$0xff]
    %v670 = vld [vmem:[#allocation2 + $0x250] sm:$0xff]
    %v671 = vld [vmem:[#allocation2 + $0x258] sm:$0xff]
    %v672 = vld [vmem:[#allocation2 + $0x260] sm:$0xff]
    %v673 = vld [vmem:[#allocation2 + $0x268] sm:$0xff]
    %v674 = vld [vmem:[#allocation2 + $0x270] sm:$0xff]
    %v675 = vld [vmem:[#allocation2 + $0x278] sm:$0xff]
    %v676 = vld [vmem:[#allocation2 + $0x280] sm:$0xff]
    %v677 = vld [vmem:[#allocation2 + $0x288] sm:$0xff]
    %v678 = vld [vmem:[#allocation2 + $0x290] sm:$0xff]
    %v679 = vld [vmem:[#allocation2 + $0x298] sm:$0xff]
    %v680 = vld [vmem:[#allocation2 + $0x2a0] sm:$0xff]
    %v681 = vld [vmem:[#allocation2 + $0x2a8] sm:$0xff]
    %v682 = vld [vmem:[#allocation2 + $0x2b0] sm:$0xff]
    %v683 = vld [vmem:[#allocation2 + $0x2b8] sm:$0xff]
    %v684 = vld [vmem:[#allocation2 + $0x2c0] sm:$0xff]
    %v685 = vld [vmem:[#allocation2 + $0x2c8] sm:$0xff]
    %v686 = vld [vmem:[#allocation2 + $0x2d0] sm:$0xff]
    %v687 = vld [vmem:[#allocation2 + $0x2d8] sm:$0xff]
    %v688 = vld [vmem:[#allocation2 + $0x2e0] sm:$0xff]
    %v689 = vld [vmem:[#allocation2 + $0x2e8] sm:$0xff]
    %v690 = vld [vmem:[#allocation2 + $0x2f0] sm:$0xff]
    %v691 = vld [vmem:[#allocation2 + $0x2f8] sm:$0xff]
    %v692 = vld [vmem:[#allocation2 + $0x300] sm:$0xff]
    %v693 = vld [vmem:[#allocation2 + $0x308] sm:$0xff]
    %v694 = vld [vmem:[#allocation2 + $0x310] sm:$0xff]
    %v695 = vld [vmem:[#allocation2 + $0x318] sm:$0xff]
    %v696 = vld [vmem:[#allocation2 + $0x320] sm:$0xff]
    %v697 = vld [vmem:[#allocation2 + $0x328] sm:$0xff]
    %v698 = vld [vmem:[#allocation2 + $0x330] sm:$0xff]
    %v699 = vld [vmem:[#allocation2 + $0x338] sm:$0xff]
    %v700 = vld [vmem:[#allocation2 + $0x340] sm:$0xff]
    %v701 = vld [vmem:[#allocation2 + $0x348] sm:$0xff]
    %v702 = vld [vmem:[#allocation2 + $0x350] sm:$0xff]
    %v703 = vld [vmem:[#allocation2 + $0x358] sm:$0xff]
    %v704 = vld [vmem:[#allocation2 + $0x360] sm:$0xff]
    %v705 = vld [vmem:[#allocation2 + $0x368] sm:$0xff]
    %v706 = vld [vmem:[#allocation2 + $0x370] sm:$0xff]
    %v707 = vld [vmem:[#allocation2 + $0x378] sm:$0xff]
    %v708 = vld [vmem:[#allocation2 + $0x380] sm:$0xff]
    %v709 = vld [vmem:[#allocation2 + $0x388] sm:$0xff]
    %v710 = vld [vmem:[#allocation2 + $0x390] sm:$0xff]
    %v711 = vld [vmem:[#allocation2 + $0x398] sm:$0xff]
    %v712 = vld [vmem:[#allocation2 + $0x3a0] sm:$0xff]
    %v713 = vld [vmem:[#allocation2 + $0x3a8] sm:$0xff]
    %v714 = vld [vmem:[#allocation2 + $0x3b0] sm:$0xff]
    %v715 = vld [vmem:[#allocation2 + $0x3b8] sm:$0xff]
    %v716 = vld [vmem:[#allocation2 + $0x3c0] sm:$0xff]
    %v717 = vld [vmem:[#allocation2 + $0x3c8] sm:$0xff]
    %v718 = vld [vmem:[#allocation2 + $0x3d0] sm:$0xff]
    %v719 = vld [vmem:[#allocation2 + $0x3d8] sm:$0xff]
    %v720 = vld [vmem:[#allocation2 + $0x3e0] sm:$0xff]
    %v721 = vld [vmem:[#allocation2 + $0x3e8] sm:$0xff]
    %v722 = vld [vmem:[#allocation2 + $0x3f0] sm:$0xff]
    %v723 = vld [vmem:[#allocation2 + $0x3f8] sm:$0xff]
    %v724 = vld [vmem:[%s0] sm:$0xf]
    %v725 = vld [vmem:[%s0 + $0x4] sm:$0xf]
    %v726 = vlaneseq
    %v727 = vshrl.u32 %v726, 7
    %v728 = vsub.s32 0, %v727
    %v729 = vrot.slane %v44, %v728
    %v730 = vlaneseq
    %v731 = vshrl.u32 %v730, 7
    %v732 = vsub.s32 0, %v731
    %v733 = vrot.slane %v45, %v732
    %v734 = vlaneseq
    %v735 = vshrl.u32 %v734, 7
    %v736 = vsub.s32 0, %v735
    %v737 = vrot.slane %v46, %v736
    %v738 = vlaneseq
    %v739 = vshrl.u32 %v738, 7
    %v740 = vsub.s32 0, %v739
    %v741 = vrot.slane %v47, %v740
    %v744 = vunpack.c.l.b16 %v724
    %v745 = vunpack.c.l.b16 %v725
    %v746 = vpack.c.b16 %v745, %v744
    %v780 = vunpack.c.l.b16 %v52
    %v781 = vunpack.c.h.b16 %v52
    %v782 = vunpack.c.l.b16 %v53
    %v783 = vunpack.c.h.b16 %v53
    %v784 = vunpack.c.l.b16 %v54
    %v785 = vunpack.c.h.b16 %v54
    %v786 = vunpack.c.l.b16 %v55
    %v787 = vunpack.c.h.b16 %v55
    %v788 = vunpack.c.l.b16 %v56
    %v789 = vunpack.c.h.b16 %v56
    %v790 = vunpack.c.l.b16 %v57
    %v791 = vunpack.c.h.b16 %v57
    %v792 = vunpack.c.l.b16 %v58
    %v793 = vunpack.c.h.b16 %v58
    %v794 = vunpack.c.l.b16 %v59
    %v795 = vunpack.c.h.b16 %v59
    %v796 = vunpack.c.l.b16 %v60
    %v797 = vunpack.c.h.b16 %v60
    %v798 = vunpack.c.l.b16 %v61
    %v799 = vunpack.c.h.b16 %v61
    %v800 = vunpack.c.l.b16 %v62
    %v801 = vunpack.c.h.b16 %v62
    %v802 = vunpack.c.l.b16 %v63
    %v803 = vunpack.c.h.b16 %v63
    %v804 = vunpack.c.l.b16 %v64
    %v805 = vunpack.c.h.b16 %v64
    %v806 = vunpack.c.l.b16 %v65
    %v807 = vunpack.c.h.b16 %v65
    %v808 = vunpack.c.l.b16 %v66
    %v809 = vunpack.c.h.b16 %v66
    %v810 = vunpack.c.l.b16 %v67
    %v811 = vunpack.c.h.b16 %v67
    %v812 = vunpack.c.l.b16 %v68
    %v813 = vunpack.c.h.b16 %v68
    %v814 = vunpack.c.l.b16 %v69
    %v815 = vunpack.c.h.b16 %v69
    %v816 = vunpack.c.l.b16 %v70
    %v817 = vunpack.c.h.b16 %v70
    %v818 = vunpack.c.l.b16 %v71
    %v819 = vunpack.c.h.b16 %v71
    %v820 = vunpack.c.l.b16 %v72
    %v821 = vunpack.c.h.b16 %v72
    %v822 = vunpack.c.l.b16 %v73
    %v823 = vunpack.c.h.b16 %v73
    %v824 = vunpack.c.l.b16 %v74
    %v825 = vunpack.c.h.b16 %v74
    %v826 = vunpack.c.l.b16 %v75
    %v827 = vunpack.c.h.b16 %v75
    %v828 = vunpack.c.l.b16 %v76
    %v829 = vunpack.c.h.b16 %v76
    %v830 = vunpack.c.l.b16 %v77
    %v831 = vunpack.c.h.b16 %v77
    %v832 = vunpack.c.l.b16 %v78
    %v833 = vunpack.c.h.b16 %v78
    %v834 = vunpack.c.l.b16 %v79
    %v835 = vunpack.c.h.b16 %v79
    %v836 = vunpack.c.l.b16 %v80
    %v837 = vunpack.c.h.b16 %v80
    %v838 = vunpack.c.l.b16 %v81
    %v839 = vunpack.c.h.b16 %v81
    %v840 = vunpack.c.l.b16 %v82
    %v841 = vunpack.c.h.b16 %v82
    %v842 = vunpack.c.l.b16 %v83
    %v843 = vunpack.c.h.b16 %v83
    %v844 = vpack.c.b16 %v784, %v780
    %v845 = vpack.c.b16 %v785, %v781
    %v846 = vpack.c.b16 %v786, %v782
    %v847 = vpack.c.b16 %v787, %v783
    %v848 = vpack.c.b16 %v792, %v788
    %v849 = vpack.c.b16 %v793, %v789
    %v850 = vpack.c.b16 %v794, %v790
    %v851 = vpack.c.b16 %v795, %v791
    %v852 = vpack.c.b16 %v800, %v796
    %v853 = vpack.c.b16 %v801, %v797
    %v854 = vpack.c.b16 %v802, %v798
    %v855 = vpack.c.b16 %v803, %v799
    %v856 = vpack.c.b16 %v808, %v804
    %v857 = vpack.c.b16 %v809, %v805
    %v858 = vpack.c.b16 %v810, %v806
    %v859 = vpack.c.b16 %v811, %v807
    %v860 = vpack.c.b16 %v816, %v812
    %v861 = vpack.c.b16 %v817, %v813
    %v862 = vpack.c.b16 %v818, %v814
    %v863 = vpack.c.b16 %v819, %v815
    %v864 = vpack.c.b16 %v824, %v820
    %v865 = vpack.c.b16 %v825, %v821
    %v866 = vpack.c.b16 %v826, %v822
    %v867 = vpack.c.b16 %v827, %v823
    %v868 = vpack.c.b16 %v832, %v828
    %v869 = vpack.c.b16 %v833, %v829
    %v870 = vpack.c.b16 %v834, %v830
    %v871 = vpack.c.b16 %v835, %v831
    %v872 = vpack.c.b16 %v840, %v836
    %v873 = vpack.c.b16 %v841, %v837
    %v874 = vpack.c.b16 %v842, %v838
    %v875 = vpack.c.b16 %v843, %v839
    %908 = vmatprep.subr.bf16.mxu0 %v845
    %909 = vmatpush1.bf16.msra.mxu0 %v844
    %910 = vmatprep.subr.bf16.mxu0 %v849
    %911 = vmatpush1.bf16.msra.mxu0 %v848
    %912 = vmatprep.subr.bf16.mxu0 %v853
    %913 = vmatpush1.bf16.msra.mxu0 %v852
    %914 = vmatprep.subr.bf16.mxu0 %v857
    %915 = vmatpush1.bf16.msra.mxu0 %v856
    %916 = vmatprep.subr.bf16.mxu0 %v861
    %917 = vmatpush1.bf16.msra.mxu0 %v860
    %918 = vmatprep.subr.bf16.mxu0 %v865
    %919 = vmatpush1.bf16.msra.mxu0 %v864
    %920 = vmatprep.subr.bf16.mxu0 %v869
    %921 = vmatpush1.bf16.msra.mxu0 %v868
    %922 = vmatprep.subr.bf16.mxu0 %v873
    %923 = vmatpush1.bf16.msra.mxu0 %v872
    %924 = vmatprep.subr.bf16.mxu0 0
    %925 = vmatpush1.bf16.msra.mxu0 0
    %926 = vmatprep.subr.bf16.mxu0 0
    %927 = vmatpush1.bf16.msra.mxu0 0
    %928 = vmatprep.subr.bf16.mxu0 0
    %929 = vmatpush1.bf16.msra.mxu0 0
    %930 = vmatprep.subr.bf16.mxu0 0
    %931 = vmatpush1.bf16.msra.mxu0 0
    %932 = vmatprep.subr.bf16.mxu0 0
    %933 = vmatpush1.bf16.msra.mxu0 0
    %934 = vmatprep.subr.bf16.mxu0 0
    %935 = vmatpush1.bf16.msra.mxu0 0
    %936 = vmatprep.subr.bf16.mxu0 0
    %937 = vmatpush1.bf16.msra.mxu0 0
    %938 = vmatprep.subr.bf16.mxu0 0
    %939 = vmatpush1.bf16.msra.mxu0 0
    %940 = vmatprep.mubr.bf16.mxu0 0
    %941 = vmatmul.mubr.bf16.gmra.mrb[0].mxu0 %v746
    %v942 = vpop.f32.mrb[0].mxu0
    %v943 = vadd.f32 %v729, %v942
    %v944 = vpop.f32.mrb[0].mxu0
    %v945 = vadd.f32 %v733, %v944
    %v946 = vpop.f32.mrb[0].mxu0
    %v947 = vadd.f32 %v729, %v946
    %v948 = vpop.f32.mrb[0].mxu0
    %v949 = vadd.f32 %v733, %v948
    %950 = vdwg.mxu0
    %951 = vmatprep.subr.bf16.mxu0 %v847
    %952 = vmatpush1.bf16.msra.mxu0 %v846
    %953 = vmatprep.subr.bf16.mxu0 %v851
    %954 = vmatpush1.bf16.msra.mxu0 %v850
    %955 = vmatprep.subr.bf16.mxu0 %v855
    %956 = vmatpush1.bf16.msra.mxu0 %v854
    %957 = vmatprep.subr.bf16.mxu0 %v859
    %958 = vmatpush1.bf16.msra.mxu0 %v858
    %959 = vmatprep.subr.bf16.mxu0 %v863
    %960 = vmatpush1.bf16.msra.mxu0 %v862
    %961 = vmatprep.subr.bf16.mxu0 %v867
    %962 = vmatpush1.bf16.msra.mxu0 %v866
    %963 = vmatprep.subr.bf16.mxu0 %v871
    %964 = vmatpush1.bf16.msra.mxu0 %v870
    %965 = vmatprep.subr.bf16.mxu0 %v875
    %966 = vmatpush1.bf16.msra.mxu0 %v874
    %967 = vmatprep.subr.bf16.mxu0 0
    %968 = vmatpush1.bf16.msra.mxu0 0
    %969 = vmatprep.subr.bf16.mxu0 0
    %970 = vmatpush1.bf16.msra.mxu0 0
    %971 = vmatprep.subr.bf16.mxu0 0
    %972 = vmatpush1.bf16.msra.mxu0 0
    %973 = vmatprep.subr.bf16.mxu0 0
    %974 = vmatpush1.bf16.msra.mxu0 0
    %975 = vmatprep.subr.bf16.mxu0 0
    %976 = vmatpush1.bf16.msra.mxu0 0
    %977 = vmatprep.subr.bf16.mxu0 0
    %978 = vmatpush1.bf16.msra.mxu0 0
    %979 = vmatprep.subr.bf16.mxu0 0
    %980 = vmatpush1.bf16.msra.mxu0 0
    %981 = vmatprep.subr.bf16.mxu0 0
    %982 = vmatpush1.bf16.msra.mxu0 0
    %983 = vmatprep.mubr.bf16.mxu0 0
    %984 = vmatmul.mubr.bf16.gmra.mrb[0].mxu0 %v746
    %v985 = vpop.f32.mrb[0].mxu0
    %v986 = vadd.f32 %v737, %v985
    %v987 = vpop.f32.mrb[0].mxu0
    %v988 = vadd.f32 %v741, %v987
    %v989 = vpop.f32.mrb[0].mxu0
    %v990 = vadd.f32 %v737, %v989
    %v991 = vpop.f32.mrb[0].mxu0
    %v992 = vadd.f32 %v741, %v991
    %993 = vdwg.mxu0
    %v994 = vadd.f32 %v943, %v945
    %v995 = vadd.f32 %v994, %v986
    %v996 = vadd.f32 %v995, %v988
    %997 = vadd.xlane.f32.xlu0 %v996
    %v998 = vpop.xlane.xlu0 %997
    %v999 = vadd.f32 %v947, %v949
    %v1000 = vadd.f32 %v999, %v990
    %v1001 = vadd.f32 %v1000, %v992
    %1002 = vadd.xlane.f32.xlu0 %v1001
    %v1003 = vpop.xlane.xlu0 %1002
    %v1004 = vrcp.pop 512.0
    %v1005 = vmul.f32 %v998, %v1004
    %v1006 = vmul.f32 %v1003, %v1004
    %v1007 = vmul.f32 %v943, %v943
    %v1008 = vmul.f32 %v945, %v945
    %v1009 = vmul.f32 %v986, %v986
    %v1010 = vmul.f32 %v988, %v988
    %v1011 = vmul.f32 %v947, %v947
    %v1012 = vmul.f32 %v949, %v949
    %v1013 = vmul.f32 %v990, %v990
    %v1014 = vmul.f32 %v992, %v992
    %v1015 = vadd.f32 %v1007, %v1008
    %v1016 = vadd.f32 %v1015, %v1009
    %v1017 = vadd.f32 %v1016, %v1010
    %1018 = vadd.xlane.f32.xlu0 %v1017
    %v1019 = vpop.xlane.xlu0 %1018
    %v1020 = vadd.f32 %v1011, %v1012
    %v1021 = vadd.f32 %v1020, %v1013
    %v1022 = vadd.f32 %v1021, %v1014
    %1023 = vadd.xlane.f32.xlu0 %v1022
    %v1024 = vpop.xlane.xlu0 %1023
    %v1025 = vmul.f32 %v1019, %v1004
    %v1026 = vmul.f32 %v1024, %v1004
    %v1027 = vmul.f32 %v1005, %v1005
    %v1028 = vmul.f32 %v1006, %v1006
    %v1029 = vsub.f32 %v1025, %v1027
    %v1030 = vsub.f32 %v1026, %v1028
    %v1031 = vsub.f32 %v943, %v1005
    %v1032 = vsub.f32 %v945, %v1005
    %v1033 = vsub.f32 %v986, %v1005
    %v1034 = vsub.f32 %v988, %v1005
    %v1035 = vsub.f32 %v947, %v1006
    %v1036 = vsub.f32 %v949, %v1006
    %v1037 = vsub.f32 %v990, %v1006
    %v1038 = vsub.f32 %v992, %v1006
    %v1039 = vadd.f32 %v1029, 1e-05
    %v1040 = vadd.f32 %v1030, 1e-05
    %v1041 = vrsqrt.pop %v1039
    %v1042 = vrsqrt.pop %v1040
    %v1043 = vmul.f32 %v1031, %v1041
    %v1044 = vmul.f32 %v1032, %v1041
    %v1045 = vmul.f32 %v1033, %v1041
    %v1046 = vmul.f32 %v1034, %v1041
    %v1047 = vmul.f32 %v1035, %v1042
    %v1048 = vmul.f32 %v1036, %v1042
    %v1049 = vmul.f32 %v1037, %v1042
    %v1050 = vmul.f32 %v1038, %v1042
    %v1051 = vlaneseq
    %v1052 = vshrl.u32 %v1051, 7
    %v1053 = vsub.s32 1, %v1052
    %v1054 = vrot.slane %v44, %v1053
    %v1055 = vlaneseq
    %v1056 = vshrl.u32 %v1055, 7
    %v1057 = vsub.s32 1, %v1056
    %v1058 = vrot.slane %v45, %v1057
    %v1059 = vlaneseq
    %v1060 = vshrl.u32 %v1059, 7
    %v1061 = vsub.s32 1, %v1060
    %v1062 = vrot.slane %v46, %v1061
    %v1063 = vlaneseq
    %v1064 = vshrl.u32 %v1063, 7
    %v1065 = vsub.s32 1, %v1064
    %v1066 = vrot.slane %v47, %v1065
    %v1067 = vmul.f32 %v1043, %v1054
    %v1068 = vmul.f32 %v1044, %v1058
    %v1069 = vmul.f32 %v1045, %v1062
    %v1070 = vmul.f32 %v1046, %v1066
    %v1071 = vmul.f32 %v1047, %v1054
    %v1072 = vmul.f32 %v1048, %v1058
    %v1073 = vmul.f32 %v1049, %v1062
    %v1074 = vmul.f32 %v1050, %v1066
    %v1075 = vlaneseq
    %v1076 = vshrl.u32 %v1075, 7
    %v1077 = vsub.s32 2, %v1076
    %v1078 = vrot.slane %v44, %v1077
    %v1079 = vlaneseq
    %v1080 = vshrl.u32 %v1079, 7
    %v1081 = vsub.s32 2, %v1080
    %v1082 = vrot.slane %v45, %v1081
    %v1083 = vlaneseq
    %v1084 = vshrl.u32 %v1083, 7
    %v1085 = vsub.s32 2, %v1084
    %v1086 = vrot.slane %v46, %v1085
    %v1087 = vlaneseq
    %v1088 = vshrl.u32 %v1087, 7
    %v1089 = vsub.s32 2, %v1088
    %v1090 = vrot.slane %v47, %v1089
    %v1091 = vadd.f32 %v1067, %v1078
    %v1092 = vadd.f32 %v1068, %v1082
    %v1093 = vadd.f32 %v1069, %v1086
    %v1094 = vadd.f32 %v1070, %v1090
    %v1095 = vadd.f32 %v1071, %v1078
    %v1096 = vadd.f32 %v1072, %v1082
    %v1097 = vadd.f32 %v1073, %v1086
    %v1098 = vadd.f32 %v1074, %v1090
    %v1099 = vpack.c.bf16 %v1095, %v1091
    %v1100 = vpack.c.bf16 %v1096, %v1092
    %v1101 = vpack.c.bf16 %v1097, %v1093
    %v1102 = vpack.c.bf16 %v1098, %v1094
    %v1103 = vlaneseq
    %v1104 = vshrl.u32 %v1103, 7
    %v1105 = vsub.s32 3, %v1104
    %v1106 = vrot.slane %v44, %v1105
    %v1107 = vlaneseq
    %v1108 = vshrl.u32 %v1107, 7
    %v1109 = vsub.s32 3, %v1108
    %v1110 = vrot.slane %v45, %v1109
    %v1111 = vlaneseq
    %v1112 = vshrl.u32 %v1111, 7
    %v1113 = vsub.s32 3, %v1112
    %v1114 = vrot.slane %v46, %v1113
    %v1115 = vlaneseq
    %v1116 = vshrl.u32 %v1115, 7
    %v1117 = vsub.s32 3, %v1116
    %v1118 = vrot.slane %v47, %v1117
    %v1247 = vunpack.c.l.b16 %v84
    %v1248 = vunpack.c.h.b16 %v84
    %v1249 = vunpack.c.l.b16 %v85
    %v1250 = vunpack.c.h.b16 %v85
    %v1251 = vunpack.c.l.b16 %v86
    %v1252 = vunpack.c.h.b16 %v86
    %v1253 = vunpack.c.l.b16 %v87
    %v1254 = vunpack.c.h.b16 %v87
    %v1255 = vunpack.c.l.b16 %v88
    %v1256 = vunpack.c.h.b16 %v88
    %v1257 = vunpack.c.l.b16 %v89
    %v1258 = vunpack.c.h.b16 %v89
    %v1259 = vunpack.c.l.b16 %v90
    %v1260 = vunpack.c.h.b16 %v90
    %v1261 = vunpack.c.l.b16 %v91
    %v1262 = vunpack.c.h.b16 %v91
    %v1263 = vunpack.c.l.b16 %v92
    %v1264 = vunpack.c.h.b16 %v92
    %v1265 = vunpack.c.l.b16 %v93
    %v1266 = vunpack.c.h.b16 %v93
    %v1267 = vunpack.c.l.b16 %v94
    %v1268 = vunpack.c.h.b16 %v94
    %v1269 = vunpack.c.l.b16 %v95
    %v1270 = vunpack.c.h.b16 %v95
    %v1271 = vunpack.c.l.b16 %v96
    %v1272 = vunpack.c.h.b16 %v96
    %v1273 = vunpack.c.l.b16 %v97
    %v1274 = vunpack.c.h.b16 %v97
    %v1275 = vunpack.c.l.b16 %v98
    %v1276 = vunpack.c.h.b16 %v98
    %v1277 = vunpack.c.l.b16 %v99
    %v1278 = vunpack.c.h.b16 %v99
    %v1279 = vunpack.c.l.b16 %v100
    %v1280 = vunpack.c.h.b16 %v100
    %v1281 = vunpack.c.l.b16 %v101
    %v1282 = vunpack.c.h.b16 %v101
    %v1283 = vunpack.c.l.b16 %v102
    %v1284 = vunpack.c.h.b16 %v102
    %v1285 = vunpack.c.l.b16 %v103
    %v1286 = vunpack.c.h.b16 %v103
    %v1287 = vunpack.c.l.b16 %v104
    %v1288 = vunpack.c.h.b16 %v104
    %v1289 = vunpack.c.l.b16 %v105
    %v1290 = vunpack.c.h.b16 %v105
    %v1291 = vunpack.c.l.b16 %v106
    %v1292 = vunpack.c.h.b16 %v106
    %v1293 = vunpack.c.l.b16 %v107
    %v1294 = vunpack.c.h.b16 %v107
    %v1295 = vunpack.c.l.b16 %v108
    %v1296 = vunpack.c.h.b16 %v108
    %v1297 = vunpack.c.l.b16 %v109
    %v1298 = vunpack.c.h.b16 %v109
    %v1299 = vunpack.c.l.b16 %v110
    %v1300 = vunpack.c.h.b16 %v110
    %v1301 = vunpack.c.l.b16 %v111
    %v1302 = vunpack.c.h.b16 %v111
    %v1303 = vunpack.c.l.b16 %v112
    %v1304 = vunpack.c.h.b16 %v112
    %v1305 = vunpack.c.l.b16 %v113
    %v1306 = vunpack.c.h.b16 %v113
    %v1307 = vunpack.c.l.b16 %v114
    %v1308 = vunpack.c.h.b16 %v114
    %v1309 = vunpack.c.l.b16 %v115
    %v1310 = vunpack.c.h.b16 %v115
    %v1311 = vunpack.c.l.b16 %v116
    %v1312 = vunpack.c.h.b16 %v116
    %v1313 = vunpack.c.l.b16 %v117
    %v1314 = vunpack.c.h.b16 %v117
    %v1315 = vunpack.c.l.b16 %v118
    %v1316 = vunpack.c.h.b16 %v118
    %v1317 = vunpack.c.l.b16 %v119
    %v1318 = vunpack.c.h.b16 %v119
    %v1319 = vunpack.c.l.b16 %v120
    %v1320 = vunpack.c.h.b16 %v120
    %v1321 = vunpack.c.l.b16 %v121
    %v1322 = vunpack.c.h.b16 %v121
    %v1323 = vunpack.c.l.b16 %v122
    %v1324 = vunpack.c.h.b16 %v122
    %v1325 = vunpack.c.l.b16 %v123
    %v1326 = vunpack.c.h.b16 %v123
    %v1327 = vunpack.c.l.b16 %v124
    %v1328 = vunpack.c.h.b16 %v124
    %v1329 = vunpack.c.l.b16 %v125
    %v1330 = vunpack.c.h.b16 %v125
    %v1331 = vunpack.c.l.b16 %v126
    %v1332 = vunpack.c.h.b16 %v126
    %v1333 = vunpack.c.l.b16 %v127
    %v1334 = vunpack.c.h.b16 %v127
    %v1335 = vunpack.c.l.b16 %v128
    %v1336 = vunpack.c.h.b16 %v128
    %v1337 = vunpack.c.l.b16 %v129
    %v1338 = vunpack.c.h.b16 %v129
    %v1339 = vunpack.c.l.b16 %v130
    %v1340 = vunpack.c.h.b16 %v130
    %v1341 = vunpack.c.l.b16 %v131
    %v1342 = vunpack.c.h.b16 %v131
    %v1343 = vunpack.c.l.b16 %v132
    %v1344 = vunpack.c.h.b16 %v132
    %v1345 = vunpack.c.l.b16 %v133
    %v1346 = vunpack.c.h.b16 %v133
    %v1347 = vunpack.c.l.b16 %v134
    %v1348 = vunpack.c.h.b16 %v134
    %v1349 = vunpack.c.l.b16 %v135
    %v1350 = vunpack.c.h.b16 %v135
    %v1351 = vunpack.c.l.b16 %v136
    %v1352 = vunpack.c.h.b16 %v136
    %v1353 = vunpack.c.l.b16 %v137
    %v1354 = vunpack.c.h.b16 %v137
    %v1355 = vunpack.c.l.b16 %v138
    %v1356 = vunpack.c.h.b16 %v138
    %v1357 = vunpack.c.l.b16 %v139
    %v1358 = vunpack.c.h.b16 %v139
    %v1359 = vunpack.c.l.b16 %v140
    %v1360 = vunpack.c.h.b16 %v140
    %v1361 = vunpack.c.l.b16 %v141
    %v1362 = vunpack.c.h.b16 %v141
    %v1363 = vunpack.c.l.b16 %v142
    %v1364 = vunpack.c.h.b16 %v142
    %v1365 = vunpack.c.l.b16 %v143
    %v1366 = vunpack.c.h.b16 %v143
    %v1367 = vunpack.c.l.b16 %v144
    %v1368 = vunpack.c.h.b16 %v144
    %v1369 = vunpack.c.l.b16 %v145
    %v1370 = vunpack.c.h.b16 %v145
    %v1371 = vunpack.c.l.b16 %v146
    %v1372 = vunpack.c.h.b16 %v146
    %v1373 = vunpack.c.l.b16 %v147
    %v1374 = vunpack.c.h.b16 %v147
    %v1375 = vunpack.c.l.b16 %v148
    %v1376 = vunpack.c.h.b16 %v148
    %v1377 = vunpack.c.l.b16 %v149
    %v1378 = vunpack.c.h.b16 %v149
    %v1379 = vunpack.c.l.b16 %v150
    %v1380 = vunpack.c.h.b16 %v150
    %v1381 = vunpack.c.l.b16 %v151
    %v1382 = vunpack.c.h.b16 %v151
    %v1383 = vunpack.c.l.b16 %v152
    %v1384 = vunpack.c.h.b16 %v152
    %v1385 = vunpack.c.l.b16 %v153
    %v1386 = vunpack.c.h.b16 %v153
    %v1387 = vunpack.c.l.b16 %v154
    %v1388 = vunpack.c.h.b16 %v154
    %v1389 = vunpack.c.l.b16 %v155
    %v1390 = vunpack.c.h.b16 %v155
    %v1391 = vunpack.c.l.b16 %v156
    %v1392 = vunpack.c.h.b16 %v156
    %v1393 = vunpack.c.l.b16 %v157
    %v1394 = vunpack.c.h.b16 %v157
    %v1395 = vunpack.c.l.b16 %v158
    %v1396 = vunpack.c.h.b16 %v158
    %v1397 = vunpack.c.l.b16 %v159
    %v1398 = vunpack.c.h.b16 %v159
    %v1399 = vunpack.c.l.b16 %v160
    %v1400 = vunpack.c.h.b16 %v160
    %v1401 = vunpack.c.l.b16 %v161
    %v1402 = vunpack.c.h.b16 %v161
    %v1403 = vunpack.c.l.b16 %v162
    %v1404 = vunpack.c.h.b16 %v162
    %v1405 = vunpack.c.l.b16 %v163
    %v1406 = vunpack.c.h.b16 %v163
    %v1407 = vunpack.c.l.b16 %v164
    %v1408 = vunpack.c.h.b16 %v164
    %v1409 = vunpack.c.l.b16 %v165
    %v1410 = vunpack.c.h.b16 %v165
    %v1411 = vunpack.c.l.b16 %v166
    %v1412 = vunpack.c.h.b16 %v166
    %v1413 = vunpack.c.l.b16 %v167
    %v1414 = vunpack.c.h.b16 %v167
    %v1415 = vunpack.c.l.b16 %v168
    %v1416 = vunpack.c.h.b16 %v168
    %v1417 = vunpack.c.l.b16 %v169
    %v1418 = vunpack.c.h.b16 %v169
    %v1419 = vunpack.c.l.b16 %v170
    %v1420 = vunpack.c.h.b16 %v170
    %v1421 = vunpack.c.l.b16 %v171
    %v1422 = vunpack.c.h.b16 %v171
    %v1423 = vunpack.c.l.b16 %v172
    %v1424 = vunpack.c.h.b16 %v172
    %v1425 = vunpack.c.l.b16 %v173
    %v1426 = vunpack.c.h.b16 %v173
    %v1427 = vunpack.c.l.b16 %v174
    %v1428 = vunpack.c.h.b16 %v174
    %v1429 = vunpack.c.l.b16 %v175
    %v1430 = vunpack.c.h.b16 %v175
    %v1431 = vunpack.c.l.b16 %v176
    %v1432 = vunpack.c.h.b16 %v176
    %v1433 = vunpack.c.l.b16 %v177
    %v1434 = vunpack.c.h.b16 %v177
    %v1435 = vunpack.c.l.b16 %v178
    %v1436 = vunpack.c.h.b16 %v178
    %v1437 = vunpack.c.l.b16 %v179
    %v1438 = vunpack.c.h.b16 %v179
    %v1439 = vunpack.c.l.b16 %v180
    %v1440 = vunpack.c.h.b16 %v180
    %v1441 = vunpack.c.l.b16 %v181
    %v1442 = vunpack.c.h.b16 %v181
    %v1443 = vunpack.c.l.b16 %v182
    %v1444 = vunpack.c.h.b16 %v182
    %v1445 = vunpack.c.l.b16 %v183
    %v1446 = vunpack.c.h.b16 %v183
    %v1447 = vunpack.c.l.b16 %v184
    %v1448 = vunpack.c.h.b16 %v184
    %v1449 = vunpack.c.l.b16 %v185
    %v1450 = vunpack.c.h.b16 %v185
    %v1451 = vunpack.c.l.b16 %v186
    %v1452 = vunpack.c.h.b16 %v186
    %v1453 = vunpack.c.l.b16 %v187
    %v1454 = vunpack.c.h.b16 %v187
    %v1455 = vunpack.c.l.b16 %v188
    %v1456 = vunpack.c.h.b16 %v188
    %v1457 = vunpack.c.l.b16 %v189
    %v1458 = vunpack.c.h.b16 %v189
    %v1459 = vunpack.c.l.b16 %v190
    %v1460 = vunpack.c.h.b16 %v190
    %v1461 = vunpack.c.l.b16 %v191
    %v1462 = vunpack.c.h.b16 %v191
    %v1463 = vunpack.c.l.b16 %v192
    %v1464 = vunpack.c.h.b16 %v192
    %v1465 = vunpack.c.l.b16 %v193
    %v1466 = vunpack.c.h.b16 %v193
    %v1467 = vunpack.c.l.b16 %v194
    %v1468 = vunpack.c.h.b16 %v194
    %v1469 = vunpack.c.l.b16 %v195
    %v1470 = vunpack.c.h.b16 %v195
    %v1471 = vunpack.c.l.b16 %v196
    %v1472 = vunpack.c.h.b16 %v196
    %v1473 = vunpack.c.l.b16 %v197
    %v1474 = vunpack.c.h.b16 %v197
    %v1475 = vunpack.c.l.b16 %v198
    %v1476 = vunpack.c.h.b16 %v198
    %v1477 = vunpack.c.l.b16 %v199
    %v1478 = vunpack.c.h.b16 %v199
    %v1479 = vunpack.c.l.b16 %v200
    %v1480 = vunpack.c.h.b16 %v200
    %v1481 = vunpack.c.l.b16 %v201
    %v1482 = vunpack.c.h.b16 %v201
    %v1483 = vunpack.c.l.b16 %v202
    %v1484 = vunpack.c.h.b16 %v202
    %v1485 = vunpack.c.l.b16 %v203
    %v1486 = vunpack.c.h.b16 %v203
    %v1487 = vunpack.c.l.b16 %v204
    %v1488 = vunpack.c.h.b16 %v204
    %v1489 = vunpack.c.l.b16 %v205
    %v1490 = vunpack.c.h.b16 %v205
    %v1491 = vunpack.c.l.b16 %v206
    %v1492 = vunpack.c.h.b16 %v206
    %v1493 = vunpack.c.l.b16 %v207
    %v1494 = vunpack.c.h.b16 %v207
    %v1495 = vunpack.c.l.b16 %v208
    %v1496 = vunpack.c.h.b16 %v208
    %v1497 = vunpack.c.l.b16 %v209
    %v1498 = vunpack.c.h.b16 %v209
    %v1499 = vunpack.c.l.b16 %v210
    %v1500 = vunpack.c.h.b16 %v210
    %v1501 = vunpack.c.l.b16 %v211
    %v1502 = vunpack.c.h.b16 %v211
    %v1503 = vpack.c.b16 %v1251, %v1247
    %v1504 = vpack.c.b16 %v1252, %v1248
    %v1505 = vpack.c.b16 %v1253, %v1249
    %v1506 = vpack.c.b16 %v1254, %v1250
    %v1507 = vpack.c.b16 %v1259, %v1255
    %v1508 = vpack.c.b16 %v1260, %v1256
    %v1509 = vpack.c.b16 %v1261, %v1257
    %v1510 = vpack.c.b16 %v1262, %v1258
    %v1511 = vpack.c.b16 %v1267, %v1263
    %v1512 = vpack.c.b16 %v1268, %v1264
    %v1513 = vpack.c.b16 %v1269, %v1265
    %v1514 = vpack.c.b16 %v1270, %v1266
    %v1515 = vpack.c.b16 %v1275, %v1271
    %v1516 = vpack.c.b16 %v1276, %v1272
    %v1517 = vpack.c.b16 %v1277, %v1273
    %v1518 = vpack.c.b16 %v1278, %v1274
    %v1519 = vpack.c.b16 %v1283, %v1279
    %v1520 = vpack.c.b16 %v1284, %v1280
    %v1521 = vpack.c.b16 %v1285, %v1281
    %v1522 = vpack.c.b16 %v1286, %v1282
    %v1523 = vpack.c.b16 %v1291, %v1287
    %v1524 = vpack.c.b16 %v1292, %v1288
    %v1525 = vpack.c.b16 %v1293, %v1289
    %v1526 = vpack.c.b16 %v1294, %v1290
    %v1527 = vpack.c.b16 %v1299, %v1295
    %v1528 = vpack.c.b16 %v1300, %v1296
    %v1529 = vpack.c.b16 %v1301, %v1297
    %v1530 = vpack.c.b16 %v1302, %v1298
    %v1531 = vpack.c.b16 %v1307, %v1303
    %v1532 = vpack.c.b16 %v1308, %v1304
    %v1533 = vpack.c.b16 %v1309, %v1305
    %v1534 = vpack.c.b16 %v1310, %v1306
    %v1535 = vpack.c.b16 %v1315, %v1311
    %v1536 = vpack.c.b16 %v1316, %v1312
    %v1537 = vpack.c.b16 %v1317, %v1313
    %v1538 = vpack.c.b16 %v1318, %v1314
    %v1539 = vpack.c.b16 %v1323, %v1319
    %v1540 = vpack.c.b16 %v1324, %v1320
    %v1541 = vpack.c.b16 %v1325, %v1321
    %v1542 = vpack.c.b16 %v1326, %v1322
    %v1543 = vpack.c.b16 %v1331, %v1327
    %v1544 = vpack.c.b16 %v1332, %v1328
    %v1545 = vpack.c.b16 %v1333, %v1329
    %v1546 = vpack.c.b16 %v1334, %v1330
    %v1547 = vpack.c.b16 %v1339, %v1335
    %v1548 = vpack.c.b16 %v1340, %v1336
    %v1549 = vpack.c.b16 %v1341, %v1337
    %v1550 = vpack.c.b16 %v1342, %v1338
    %v1551 = vpack.c.b16 %v1347, %v1343
    %v1552 = vpack.c.b16 %v1348, %v1344
    %v1553 = vpack.c.b16 %v1349, %v1345
    %v1554 = vpack.c.b16 %v1350, %v1346
    %v1555 = vpack.c.b16 %v1355, %v1351
    %v1556 = vpack.c.b16 %v1356, %v1352
    %v1557 = vpack.c.b16 %v1357, %v1353
    %v1558 = vpack.c.b16 %v1358, %v1354
    %v1559 = vpack.c.b16 %v1363, %v1359
    %v1560 = vpack.c.b16 %v1364, %v1360
    %v1561 = vpack.c.b16 %v1365, %v1361
    %v1562 = vpack.c.b16 %v1366, %v1362
    %v1563 = vpack.c.b16 %v1371, %v1367
    %v1564 = vpack.c.b16 %v1372, %v1368
    %v1565 = vpack.c.b16 %v1373, %v1369
    %v1566 = vpack.c.b16 %v1374, %v1370
    %v1567 = vpack.c.b16 %v1379, %v1375
    %v1568 = vpack.c.b16 %v1380, %v1376
    %v1569 = vpack.c.b16 %v1381, %v1377
    %v1570 = vpack.c.b16 %v1382, %v1378
    %v1571 = vpack.c.b16 %v1387, %v1383
    %v1572 = vpack.c.b16 %v1388, %v1384
    %v1573 = vpack.c.b16 %v1389, %v1385
    %v1574 = vpack.c.b16 %v1390, %v1386
    %v1575 = vpack.c.b16 %v1395, %v1391
    %v1576 = vpack.c.b16 %v1396, %v1392
    %v1577 = vpack.c.b16 %v1397, %v1393
    %v1578 = vpack.c.b16 %v1398, %v1394
    %v1579 = vpack.c.b16 %v1403, %v1399
    %v1580 = vpack.c.b16 %v1404, %v1400
    %v1581 = vpack.c.b16 %v1405, %v1401
    %v1582 = vpack.c.b16 %v1406, %v1402
    %v1583 = vpack.c.b16 %v1411, %v1407
    %v1584 = vpack.c.b16 %v1412, %v1408
    %v1585 = vpack.c.b16 %v1413, %v1409
    %v1586 = vpack.c.b16 %v1414, %v1410
    %v1587 = vpack.c.b16 %v1419, %v1415
    %v1588 = vpack.c.b16 %v1420, %v1416
    %v1589 = vpack.c.b16 %v1421, %v1417
    %v1590 = vpack.c.b16 %v1422, %v1418
    %v1591 = vpack.c.b16 %v1427, %v1423
    %v1592 = vpack.c.b16 %v1428, %v1424
    %v1593 = vpack.c.b16 %v1429, %v1425
    %v1594 = vpack.c.b16 %v1430, %v1426
    %v1595 = vpack.c.b16 %v1435, %v1431
    %v1596 = vpack.c.b16 %v1436, %v1432
    %v1597 = vpack.c.b16 %v1437, %v1433
    %v1598 = vpack.c.b16 %v1438, %v1434
    %v1599 = vpack.c.b16 %v1443, %v1439
    %v1600 = vpack.c.b16 %v1444, %v1440
    %v1601 = vpack.c.b16 %v1445, %v1441
    %v1602 = vpack.c.b16 %v1446, %v1442
    %v1603 = vpack.c.b16 %v1451, %v1447
    %v1604 = vpack.c.b16 %v1452, %v1448
    %v1605 = vpack.c.b16 %v1453, %v1449
    %v1606 = vpack.c.b16 %v1454, %v1450
    %v1607 = vpack.c.b16 %v1459, %v1455
    %v1608 = vpack.c.b16 %v1460, %v1456
    %v1609 = vpack.c.b16 %v1461, %v1457
    %v1610 = vpack.c.b16 %v1462, %v1458
    %v1611 = vpack.c.b16 %v1467, %v1463
    %v1612 = vpack.c.b16 %v1468, %v1464
    %v1613 = vpack.c.b16 %v1469, %v1465
    %v1614 = vpack.c.b16 %v1470, %v1466
    %v1615 = vpack.c.b16 %v1475, %v1471
    %v1616 = vpack.c.b16 %v1476, %v1472
    %v1617 = vpack.c.b16 %v1477, %v1473
    %v1618 = vpack.c.b16 %v1478, %v1474
    %v1619 = vpack.c.b16 %v1483, %v1479
    %v1620 = vpack.c.b16 %v1484, %v1480
    %v1621 = vpack.c.b16 %v1485, %v1481
    %v1622 = vpack.c.b16 %v1486, %v1482
    %v1623 = vpack.c.b16 %v1491, %v1487
    %v1624 = vpack.c.b16 %v1492, %v1488
    %v1625 = vpack.c.b16 %v1493, %v1489
    %v1626 = vpack.c.b16 %v1494, %v1490
    %v1627 = vpack.c.b16 %v1499, %v1495
    %v1628 = vpack.c.b16 %v1500, %v1496
    %v1629 = vpack.c.b16 %v1501, %v1497
    %v1630 = vpack.c.b16 %v1502, %v1498
    %1759 = vmatprep.subr.bf16.mxu0 %v1504
    %1760 = vmatpush1.bf16.msra.mxu0 %v1503
    %1761 = vmatprep.subr.bf16.mxu0 %v1508
    %1762 = vmatpush1.bf16.msra.mxu0 %v1507
    %1763 = vmatprep.subr.bf16.mxu0 %v1512
    %1764 = vmatpush1.bf16.msra.mxu0 %v1511
    %1765 = vmatprep.subr.bf16.mxu0 %v1516
    %1766 = vmatpush1.bf16.msra.mxu0 %v1515
    %1767 = vmatprep.subr.bf16.mxu0 %v1520
    %1768 = vmatpush1.bf16.msra.mxu0 %v1519
    %1769 = vmatprep.subr.bf16.mxu0 %v1524
    %1770 = vmatpush1.bf16.msra.mxu0 %v1523
    %1771 = vmatprep.subr.bf16.mxu0 %v1528
    %1772 = vmatpush1.bf16.msra.mxu0 %v1527
    %1773 = vmatprep.subr.bf16.mxu0 %v1532
    %1774 = vmatpush1.bf16.msra.mxu0 %v1531
    %1775 = vmatprep.subr.bf16.mxu0 %v1536
    %1776 = vmatpush1.bf16.msra.mxu0 %v1535
    %1777 = vmatprep.subr.bf16.mxu0 %v1540
    %1778 = vmatpush1.bf16.msra.mxu0 %v1539
    %1779 = vmatprep.subr.bf16.mxu0 %v1544
    %1780 = vmatpush1.bf16.msra.mxu0 %v1543
    %1781 = vmatprep.subr.bf16.mxu0 %v1548
    %1782 = vmatpush1.bf16.msra.mxu0 %v1547
    %1783 = vmatprep.subr.bf16.mxu0 %v1552
    %1784 = vmatpush1.bf16.msra.mxu0 %v1551
    %1785 = vmatprep.subr.bf16.mxu0 %v1556
    %1786 = vmatpush1.bf16.msra.mxu0 %v1555
    %1787 = vmatprep.subr.bf16.mxu0 %v1560
    %1788 = vmatpush1.bf16.msra.mxu0 %v1559
    %1789 = vmatprep.subr.bf16.mxu0 %v1564
    %1790 = vmatpush1.bf16.msra.mxu0 %v1563
    %1791 = vmatprep.mubr.bf16.mxu0 %v1100
    %1792 = vmatmul.mubr.bf16.gmra.mrb[0].mxu0 %v1099
    %v1793 = vpop.f32.mrb[0].mxu0
    %v1794 = vadd.f32 %v1106, %v1793
    %v1795 = vpop.f32.mrb[0].mxu0
    %v1796 = vadd.f32 %v1110, %v1795
    %v1797 = vpop.f32.mrb[0].mxu0
    %v1798 = vadd.f32 %v1106, %v1797
    %v1799 = vpop.f32.mrb[0].mxu0
    %v1800 = vadd.f32 %v1110, %v1799
    %1801 = vdwg.mxu0
    %1802 = vmatprep.subr.bf16.mxu0 %v1568
    %1803 = vmatpush1.bf16.msra.mxu0 %v1567
    %1804 = vmatprep.subr.bf16.mxu0 %v1572
    %1805 = vmatpush1.bf16.msra.mxu0 %v1571
    %1806 = vmatprep.subr.bf16.mxu0 %v1576
    %1807 = vmatpush1.bf16.msra.mxu0 %v1575
    %1808 = vmatprep.subr.bf16.mxu0 %v1580
    %1809 = vmatpush1.bf16.msra.mxu0 %v1579
    %1810 = vmatprep.subr.bf16.mxu0 %v1584
    %1811 = vmatpush1.bf16.msra.mxu0 %v1583
    %1812 = vmatprep.subr.bf16.mxu0 %v1588
    %1813 = vmatpush1.bf16.msra.mxu0 %v1587
    %1814 = vmatprep.subr.bf16.mxu0 %v1592
    %1815 = vmatpush1.bf16.msra.mxu0 %v1591
    %1816 = vmatprep.subr.bf16.mxu0 %v1596
    %1817 = vmatpush1.bf16.msra.mxu0 %v1595
    %1818 = vmatprep.subr.bf16.mxu0 %v1600
    %1819 = vmatpush1.bf16.msra.mxu0 %v1599
    %1820 = vmatprep.subr.bf16.mxu0 %v1604
    %1821 = vmatpush1.bf16.msra.mxu0 %v1603
    %1822 = vmatprep.subr.bf16.mxu0 %v1608
    %1823 = vmatpush1.bf16.msra.mxu0 %v1607
    %1824 = vmatprep.subr.bf16.mxu0 %v1612
    %1825 = vmatpush1.bf16.msra.mxu0 %v1611
    %1826 = vmatprep.subr.bf16.mxu0 %v1616
    %1827 = vmatpush1.bf16.msra.mxu0 %v1615
    %1828 = vmatprep.subr.bf16.mxu0 %v1620
    %1829 = vmatpush1.bf16.msra.mxu0 %v1619
    %1830 = vmatprep.subr.bf16.mxu0 %v1624
    %1831 = vmatpush1.bf16.msra.mxu0 %v1623
    %1832 = vmatprep.subr.bf16.mxu0 %v1628
    %1833 = vmatpush1.bf16.msra.mxu0 %v1627
    %1834 = vmatprep.mubr.bf16.mxu0 %v1102
    %1835 = vmatmul.mubr.bf16.gmra.mrb[0].mxu0 %v1101
    %v1836 = vpop.f32.mrb[0].mxu0
    %v1837 = vadd.f32 %v1794, %v1836
    %v1838 = vpop.f32.mrb[0].mxu0
    %v1839 = vadd.f32 %v1796, %v1838
    %v1840 = vpop.f32.mrb[0].mxu0
    %v1841 = vadd.f32 %v1798, %v1840
    %v1842 = vpop.f32.mrb[0].mxu0
    %v1843 = vadd.f32 %v1800, %v1842
    %1844 = vdwg.mxu0
    %1845 = vmatprep.subr.bf16.mxu0 %v1506
    %1846 = vmatpush1.bf16.msra.mxu0 %v1505
    %1847 = vmatprep.subr.bf16.mxu0 %v1510
    %1848 = vmatpush1.bf16.msra.mxu0 %v1509
    %1849 = vmatprep.subr.bf16.mxu0 %v1514
    %1850 = vmatpush1.bf16.msra.mxu0 %v1513
    %1851 = vmatprep.subr.bf16.mxu0 %v1518
    %1852 = vmatpush1.bf16.msra.mxu0 %v1517
    %1853 = vmatprep.subr.bf16.mxu0 %v1522
    %1854 = vmatpush1.bf16.msra.mxu0 %v1521
    %1855 = vmatprep.subr.bf16.mxu0 %v1526
    %1856 = vmatpush1.bf16.msra.mxu0 %v1525
    %1857 = vmatprep.subr.bf16.mxu0 %v1530
    %1858 = vmatpush1.bf16.msra.mxu0 %v1529
    %1859 = vmatprep.subr.bf16.mxu0 %v1534
    %1860 = vmatpush1.bf16.msra.mxu0 %v1533
    %1861 = vmatprep.subr.bf16.mxu0 %v1538
    %1862 = vmatpush1.bf16.msra.mxu0 %v1537
    %1863 = vmatprep.subr.bf16.mxu0 %v1542
    %1864 = vmatpush1.bf16.msra.mxu0 %v1541
    %1865 = vmatprep.subr.bf16.mxu0 %v1546
    %1866 = vmatpush1.bf16.msra.mxu0 %v1545
    %1867 = vmatprep.subr.bf16.mxu0 %v1550
    %1868 = vmatpush1.bf16.msra.mxu0 %v1549
    %1869 = vmatprep.subr.bf16.mxu0 %v1554
    %1870 = vmatpush1.bf16.msra.mxu0 %v1553
    %1871 = vmatprep.subr.bf16.mxu0 %v1558
    %1872 = vmatpush1.bf16.msra.mxu0 %v1557
    %1873 = vmatprep.subr.bf16.mxu0 %v1562
    %1874 = vmatpush1.bf16.msra.mxu0 %v1561
    %1875 = vmatprep.subr.bf16.mxu0 %v1566
    %1876 = vmatpush1.bf16.msra.mxu0 %v1565
    %1877 = vmatprep.mubr.bf16.mxu0 %v1100
    %1878 = vmatmul.mubr.bf16.gmra.mrb[0].mxu0 %v1099
    %v1879 = vpop.f32.mrb[0].mxu0
    %v1880 = vadd.f32 %v1114, %v1879
    %v1881 = vpop.f32.mrb[0].mxu0
    %v1882 = vadd.f32 %v1118, %v1881
    %v1883 = vpop.f32.mrb[0].mxu0
    %v1884 = vadd.f32 %v1114, %v1883
    %v1885 = vpop.f32.mrb[0].mxu0
    %v1886 = vadd.f32 %v1118, %v1885
    %1887 = vdwg.mxu0
    %1888 = vmatprep.subr.bf16.mxu0 %v1570
    %1889 = vmatpush1.bf16.msra.mxu0 %v1569
    %1890 = vmatprep.subr.bf16.mxu0 %v1574
    %1891 = vmatpush1.bf16.msra.mxu0 %v1573
    %1892 = vmatprep.subr.bf16.mxu0 %v1578
    %1893 = vmatpush1.bf16.msra.mxu0 %v1577
    %1894 = vmatprep.subr.bf16.mxu0 %v1582
    %1895 = vmatpush1.bf16.msra.mxu0 %v1581
    %1896 = vmatprep.subr.bf16.mxu0 %v1586
    %1897 = vmatpush1.bf16.msra.mxu0 %v1585
    %1898 = vmatprep.subr.bf16.mxu0 %v1590
    %1899 = vmatpush1.bf16.msra.mxu0 %v1589
    %1900 = vmatprep.subr.bf16.mxu0 %v1594
    %1901 = vmatpush1.bf16.msra.mxu0 %v1593
    %1902 = vmatprep.subr.bf16.mxu0 %v1598
    %1903 = vmatpush1.bf16.msra.mxu0 %v1597
    %1904 = vmatprep.subr.bf16.mxu0 %v1602
    %1905 = vmatpush1.bf16.msra.mxu0 %v1601
    %1906 = vmatprep.subr.bf16.mxu0 %v1606
    %1907 = vmatpush1.bf16.msra.mxu0 %v1605
    %1908 = vmatprep.subr.bf16.mxu0 %v1610
    %1909 = vmatpush1.bf16.msra.mxu0 %v1609
    %1910 = vmatprep.subr.bf16.mxu0 %v1614
    %1911 = vmatpush1.bf16.msra.mxu0 %v1613
    %1912 = vmatprep.subr.bf16.mxu0 %v1618
    %1913 = vmatpush1.bf16.msra.mxu0 %v1617
    %1914 = vmatprep.subr.bf16.mxu0 %v1622
    %1915 = vmatpush1.bf16.msra.mxu0 %v1621
    %1916 = vmatprep.subr.bf16.mxu0 %v1626
    %1917 = vmatpush1.bf16.msra.mxu0 %v1625
    %1918 = vmatprep.subr.bf16.mxu0 %v1630
    %1919 = vmatpush1.bf16.msra.mxu0 %v1629
    %1920 = vmatprep.mubr.bf16.mxu0 %v1102
    %1921 = vmatmul.mubr.bf16.gmra.mrb[0].mxu0 %v1101
    %v1922 = vpop.f32.mrb[0].mxu0
    %v1923 = vadd.f32 %v1880, %v1922
    %v1924 = vpop.f32.mrb[0].mxu0
    %v1925 = vadd.f32 %v1882, %v1924
    %v1926 = vpop.f32.mrb[0].mxu0
    %v1927 = vadd.f32 %v1884, %v1926
    %v1928 = vpop.f32.mrb[0].mxu0
    %v1929 = vadd.f32 %v1886, %v1928
    %1930 = vdwg.mxu0
    %v1931 = vmul.f32 %v1837, %v1837
    %v1932 = vmul.f32 %v1839, %v1839
    %v1933 = vmul.f32 %v1923, %v1923
    %v1934 = vmul.f32 %v1925, %v1925
    %v1935 = vmul.f32 %v1841, %v1841
    %v1936 = vmul.f32 %v1843, %v1843
    %v1937 = vmul.f32 %v1927, %v1927
    %v1938 = vmul.f32 %v1929, %v1929
    %v1939 = vmul.f32 %v1837, %v1931
    %v1940 = vmul.f32 %v1839, %v1932
    %v1941 = vmul.f32 %v1923, %v1933
    %v1942 = vmul.f32 %v1925, %v1934
    %v1943 = vmul.f32 %v1841, %v1935
    %v1944 = vmul.f32 %v1843, %v1936
    %v1945 = vmul.f32 %v1927, %v1937
    %v1946 = vmul.f32 %v1929, %v1938
    %v1947 = vmul.f32 %v1939, 0.044715
    %v1948 = vmul.f32 %v1940, 0.044715
    %v1949 = vmul.f32 %v1941, 0.044715
    %v1950 = vmul.f32 %v1942, 0.044715
    %v1951 = vmul.f32 %v1943, 0.044715
    %v1952 = vmul.f32 %v1944, 0.044715
    %v1953 = vmul.f32 %v1945, 0.044715
    %v1954 = vmul.f32 %v1946, 0.044715
    %v1955 = vadd.f32 %v1837, %v1947
    %v1956 = vadd.f32 %v1839, %v1948
    %v1957 = vadd.f32 %v1923, %v1949
    %v1958 = vadd.f32 %v1925, %v1950
    %v1959 = vadd.f32 %v1841, %v1951
    %v1960 = vadd.f32 %v1843, %v1952
    %v1961 = vadd.f32 %v1927, %v1953
    %v1962 = vadd.f32 %v1929, %v1954
    %v1963 = vmul.f32 %v1955, 0.7978846
    %v1964 = vmul.f32 %v1956, 0.7978846
    %v1965 = vmul.f32 %v1957, 0.7978846
    %v1966 = vmul.f32 %v1958, 0.7978846
    %v1967 = vmul.f32 %v1959, 0.7978846
    %v1968 = vmul.f32 %v1960, 0.7978846
    %v1969 = vmul.f32 %v1961, 0.7978846
    %v1970 = vmul.f32 %v1962, 0.7978846
    %v1971 = vtanh.pop %v1963
    %v1972 = vtanh.pop %v1964
    %v1973 = vtanh.pop %v1965
    %v1974 = vtanh.pop %v1966
    %v1975 = vtanh.pop %v1967
    %v1976 = vtanh.pop %v1968
    %v1977 = vtanh.pop %v1969
    %v1978 = vtanh.pop %v1970
    %v1979 = vadd.f32 %v1971, 1.0
    %v1980 = vadd.f32 %v1972, 1.0
    %v1981 = vadd.f32 %v1973, 1.0
    %v1982 = vadd.f32 %v1974, 1.0
    %v1983 = vadd.f32 %v1975, 1.0
    %v1984 = vadd.f32 %v1976, 1.0
    %v1985 = vadd.f32 %v1977, 1.0
    %v1986 = vadd.f32 %v1978, 1.0
    %v1987 = vmul.f32 %v1979, 0.5
    %v1988 = vmul.f32 %v1980, 0.5
    %v1989 = vmul.f32 %v1981, 0.5
    %v1990 = vmul.f32 %v1982, 0.5
    %v1991 = vmul.f32 %v1983, 0.5
    %v1992 = vmul.f32 %v1984, 0.5
    %v1993 = vmul.f32 %v1985, 0.5
    %v1994 = vmul.f32 %v1986, 0.5
    %v1995 = vmul.f32 %v1837, %v1987
    %v1996 = vmul.f32 %v1839, %v1988
    %v1997 = vmul.f32 %v1923, %v1989
    %v1998 = vmul.f32 %v1925, %v1990
    %v1999 = vmul.f32 %v1841, %v1991
    %v2000 = vmul.f32 %v1843, %v1992
    %v2001 = vmul.f32 %v1927, %v1993
    %v2002 = vmul.f32 %v1929, %v1994
    %v2003 = vpack.c.bf16 %v1999, %v1995
    %v2004 = vpack.c.bf16 %v2000, %v1996
    %v2005 = vpack.c.bf16 %v2001, %v1997
    %v2006 = vpack.c.bf16 %v2002, %v1998
    %v2007 = vlaneseq
    %v2008 = vshrl.u32 %v2007, 7
    %v2009 = vsub.s32 4, %v2008
    %v2010 = vrot.slane %v44, %v2009
    %v2011 = vlaneseq
    %v2012 = vshrl.u32 %v2011, 7
    %v2013 = vsub.s32 4, %v2012
    %v2014 = vrot.slane %v45, %v2013
    %v2015 = vlaneseq
    %v2016 = vshrl.u32 %v2015, 7
    %v2017 = vsub.s32 4, %v2016
    %v2018 = vrot.slane %v46, %v2017
    %v2019 = vlaneseq
    %v2020 = vshrl.u32 %v2019, 7
    %v2021 = vsub.s32 4, %v2020
    %v2022 = vrot.slane %v47, %v2021
    %v2151 = vunpack.c.l.b16 %v212
    %v2152 = vunpack.c.h.b16 %v212
    %v2153 = vunpack.c.l.b16 %v213
    %v2154 = vunpack.c.h.b16 %v213
    %v2155 = vunpack.c.l.b16 %v214
    %v2156 = vunpack.c.h.b16 %v214
    %v2157 = vunpack.c.l.b16 %v215
    %v2158 = vunpack.c.h.b16 %v215
    %v2159 = vunpack.c.l.b16 %v216
    %v2160 = vunpack.c.h.b16 %v216
    %v2161 = vunpack.c.l.b16 %v217
    %v2162 = vunpack.c.h.b16 %v217
    %v2163 = vunpack.c.l.b16 %v218
    %v2164 = vunpack.c.h.b16 %v218
    %v2165 = vunpack.c.l.b16 %v219
    %v2166 = vunpack.c.h.b16 %v219
    %v2167 = vunpack.c.l.b16 %v220
    %v2168 = vunpack.c.h.b16 %v220
    %v2169 = vunpack.c.l.b16 %v221
    %v2170 = vunpack.c.h.b16 %v221
    %v2171 = vunpack.c.l.b16 %v222
    %v2172 = vunpack.c.h.b16 %v222
    %v2173 = vunpack.c.l.b16 %v223
    %v2174 = vunpack.c.h.b16 %v223
    %v2175 = vunpack.c.l.b16 %v224
    %v2176 = vunpack.c.h.b16 %v224
    %v2177 = vunpack.c.l.b16 %v225
    %v2178 = vunpack.c.h.b16 %v225
    %v2179 = vunpack.c.l.b16 %v226
    %v2180 = vunpack.c.h.b16 %v226
    %v2181 = vunpack.c.l.b16 %v227
    %v2182 = vunpack.c.h.b16 %v227
    %v2183 = vunpack.c.l.b16 %v228
    %v2184 = vunpack.c.h.b16 %v228
    %v2185 = vunpack.c.l.b16 %v229
    %v2186 = vunpack.c.h.b16 %v229
    %v2187 = vunpack.c.l.b16 %v230
    %v2188 = vunpack.c.h.b16 %v230
    %v2189 = vunpack.c.l.b16 %v231
    %v2190 = vunpack.c.h.b16 %v231
    %v2191 = vunpack.c.l.b16 %v232
    %v2192 = vunpack.c.h.b16 %v232
    %v2193 = vunpack.c.l.b16 %v233
    %v2194 = vunpack.c.h.b16 %v233
    %v2195 = vunpack.c.l.b16 %v234
    %v2196 = vunpack.c.h.b16 %v234
    %v2197 = vunpack.c.l.b16 %v235
    %v2198 = vunpack.c.h.b16 %v235
    %v2199 = vunpack.c.l.b16 %v236
    %v2200 = vunpack.c.h.b16 %v236
    %v2201 = vunpack.c.l.b16 %v237
    %v2202 = vunpack.c.h.b16 %v237
    %v2203 = vunpack.c.l.b16 %v238
    %v2204 = vunpack.c.h.b16 %v238
    %v2205 = vunpack.c.l.b16 %v239
    %v2206 = vunpack.c.h.b16 %v239
    %v2207 = vunpack.c.l.b16 %v240
    %v2208 = vunpack.c.h.b16 %v240
    %v2209 = vunpack.c.l.b16 %v241
    %v2210 = vunpack.c.h.b16 %v241
    %v2211 = vunpack.c.l.b16 %v242
    %v2212 = vunpack.c.h.b16 %v242
    %v2213 = vunpack.c.l.b16 %v243
    %v2214 = vunpack.c.h.b16 %v243
    %v2215 = vunpack.c.l.b16 %v244
    %v2216 = vunpack.c.h.b16 %v244
    %v2217 = vunpack.c.l.b16 %v245
    %v2218 = vunpack.c.h.b16 %v245
    %v2219 = vunpack.c.l.b16 %v246
    %v2220 = vunpack.c.h.b16 %v246
    %v2221 = vunpack.c.l.b16 %v247
    %v2222 = vunpack.c.h.b16 %v247
    %v2223 = vunpack.c.l.b16 %v248
    %v2224 = vunpack.c.h.b16 %v248
    %v2225 = vunpack.c.l.b16 %v249
    %v2226 = vunpack.c.h.b16 %v249
    %v2227 = vunpack.c.l.b16 %v250
    %v2228 = vunpack.c.h.b16 %v250
    %v2229 = vunpack.c.l.b16 %v251
    %v2230 = vunpack.c.h.b16 %v251
    %v2231 = vunpack.c.l.b16 %v252
    %v2232 = vunpack.c.h.b16 %v252
    %v2233 = vunpack.c.l.b16 %v253
    %v2234 = vunpack.c.h.b16 %v253
    %v2235 = vunpack.c.l.b16 %v254
    %v2236 = vunpack.c.h.b16 %v254
    %v2237 = vunpack.c.l.b16 %v255
    %v2238 = vunpack.c.h.b16 %v255
    %v2239 = vunpack.c.l.b16 %v256
    %v2240 = vunpack.c.h.b16 %v256
    %v2241 = vunpack.c.l.b16 %v257
    %v2242 = vunpack.c.h.b16 %v257
    %v2243 = vunpack.c.l.b16 %v258
    %v2244 = vunpack.c.h.b16 %v258
    %v2245 = vunpack.c.l.b16 %v259
    %v2246 = vunpack.c.h.b16 %v259
    %v2247 = vunpack.c.l.b16 %v260
    %v2248 = vunpack.c.h.b16 %v260
    %v2249 = vunpack.c.l.b16 %v261
    %v2250 = vunpack.c.h.b16 %v261
    %v2251 = vunpack.c.l.b16 %v262
    %v2252 = vunpack.c.h.b16 %v262
    %v2253 = vunpack.c.l.b16 %v263
    %v2254 = vunpack.c.h.b16 %v263
    %v2255 = vunpack.c.l.b16 %v264
    %v2256 = vunpack.c.h.b16 %v264
    %v2257 = vunpack.c.l.b16 %v265
    %v2258 = vunpack.c.h.b16 %v265
    %v2259 = vunpack.c.l.b16 %v266
    %v2260 = vunpack.c.h.b16 %v266
    %v2261 = vunpack.c.l.b16 %v267
    %v2262 = vunpack.c.h.b16 %v267
    %v2263 = vunpack.c.l.b16 %v268
    %v2264 = vunpack.c.h.b16 %v268
    %v2265 = vunpack.c.l.b16 %v269
    %v2266 = vunpack.c.h.b16 %v269
    %v2267 = vunpack.c.l.b16 %v270
    %v2268 = vunpack.c.h.b16 %v270
    %v2269 = vunpack.c.l.b16 %v271
    %v2270 = vunpack.c.h.b16 %v271
    %v2271 = vunpack.c.l.b16 %v272
    %v2272 = vunpack.c.h.b16 %v272
    %v2273 = vunpack.c.l.b16 %v273
    %v2274 = vunpack.c.h.b16 %v273
    %v2275 = vunpack.c.l.b16 %v274
    %v2276 = vunpack.c.h.b16 %v274
    %v2277 = vunpack.c.l.b16 %v275
    %v2278 = vunpack.c.h.b16 %v275
    %v2279 = vunpack.c.l.b16 %v276
    %v2280 = vunpack.c.h.b16 %v276
    %v2281 = vunpack.c.l.b16 %v277
    %v2282 = vunpack.c.h.b16 %v277
    %v2283 = vunpack.c.l.b16 %v278
    %v2284 = vunpack.c.h.b16 %v278
    %v2285 = vunpack.c.l.b16 %v279
    %v2286 = vunpack.c.h.b16 %v279
    %v2287 = vunpack.c.l.b16 %v280
    %v2288 = vunpack.c.h.b16 %v280
    %v2289 = vunpack.c.l.b16 %v281
    %v2290 = vunpack.c.h.b16 %v281
    %v2291 = vunpack.c.l.b16 %v282
    %v2292 = vunpack.c.h.b16 %v282
    %v2293 = vunpack.c.l.b16 %v283
    %v2294 = vunpack.c.h.b16 %v283
    %v2295 = vunpack.c.l.b16 %v284
    %v2296 = vunpack.c.h.b16 %v284
    %v2297 = vunpack.c.l.b16 %v285
    %v2298 = vunpack.c.h.b16 %v285
    %v2299 = vunpack.c.l.b16 %v286
    %v2300 = vunpack.c.h.b16 %v286
    %v2301 = vunpack.c.l.b16 %v287
    %v2302 = vunpack.c.h.b16 %v287
    %v2303 = vunpack.c.l.b16 %v288
    %v2304 = vunpack.c.h.b16 %v288
    %v2305 = vunpack.c.l.b16 %v289
    %v2306 = vunpack.c.h.b16 %v289
    %v2307 = vunpack.c.l.b16 %v290
    %v2308 = vunpack.c.h.b16 %v290
    %v2309 = vunpack.c.l.b16 %v291
    %v2310 = vunpack.c.h.b16 %v291
    %v2311 = vunpack.c.l.b16 %v292
    %v2312 = vunpack.c.h.b16 %v292
    %v2313 = vunpack.c.l.b16 %v293
    %v2314 = vunpack.c.h.b16 %v293
    %v2315 = vunpack.c.l.b16 %v294
    %v2316 = vunpack.c.h.b16 %v294
    %v2317 = vunpack.c.l.b16 %v295
    %v2318 = vunpack.c.h.b16 %v295
    %v2319 = vunpack.c.l.b16 %v296
    %v2320 = vunpack.c.h.b16 %v296
    %v2321 = vunpack.c.l.b16 %v297
    %v2322 = vunpack.c.h.b16 %v297
    %v2323 = vunpack.c.l.b16 %v298
    %v2324 = vunpack.c.h.b16 %v298
    %v2325 = vunpack.c.l.b16 %v299
    %v2326 = vunpack.c.h.b16 %v299
    %v2327 = vunpack.c.l.b16 %v300
    %v2328 = vunpack.c.h.b16 %v300
    %v2329 = vunpack.c.l.b16 %v301
    %v2330 = vunpack.c.h.b16 %v301
    %v2331 = vunpack.c.l.b16 %v302
    %v2332 = vunpack.c.h.b16 %v302
    %v2333 = vunpack.c.l.b16 %v303
    %v2334 = vunpack.c.h.b16 %v303
    %v2335 = vunpack.c.l.b16 %v304
    %v2336 = vunpack.c.h.b16 %v304
    %v2337 = vunpack.c.l.b16 %v305
    %v2338 = vunpack.c.h.b16 %v305
    %v2339 = vunpack.c.l.b16 %v306
    %v2340 = vunpack.c.h.b16 %v306
    %v2341 = vunpack.c.l.b16 %v307
    %v2342 = vunpack.c.h.b16 %v307
    %v2343 = vunpack.c.l.b16 %v308
    %v2344 = vunpack.c.h.b16 %v308
    %v2345 = vunpack.c.l.b16 %v309
    %v2346 = vunpack.c.h.b16 %v309
    %v2347 = vunpack.c.l.b16 %v310
    %v2348 = vunpack.c.h.b16 %v310
    %v2349 = vunpack.c.l.b16 %v311
    %v2350 = vunpack.c.h.b16 %v311
    %v2351 = vunpack.c.l.b16 %v312
    %v2352 = vunpack.c.h.b16 %v312
    %v2353 = vunpack.c.l.b16 %v313
    %v2354 = vunpack.c.h.b16 %v313
    %v2355 = vunpack.c.l.b16 %v314
    %v2356 = vunpack.c.h.b16 %v314
    %v2357 = vunpack.c.l.b16 %v315
    %v2358 = vunpack.c.h.b16 %v315
    %v2359 = vunpack.c.l.b16 %v316
    %v2360 = vunpack.c.h.b16 %v316
    %v2361 = vunpack.c.l.b16 %v317
    %v2362 = vunpack.c.h.b16 %v317
    %v2363 = vunpack.c.l.b16 %v318
    %v2364 = vunpack.c.h.b16 %v318
    %v2365 = vunpack.c.l.b16 %v319
    %v2366 = vunpack.c.h.b16 %v319
    %v2367 = vunpack.c.l.b16 %v320
    %v2368 = vunpack.c.h.b16 %v320
    %v2369 = vunpack.c.l.b16 %v321
    %v2370 = vunpack.c.h.b16 %v321
    %v2371 = vunpack.c.l.b16 %v322
    %v2372 = vunpack.c.h.b16 %v322
    %v2373 = vunpack.c.l.b16 %v323
    %v2374 = vunpack.c.h.b16 %v323
    %v2375 = vunpack.c.l.b16 %v324
    %v2376 = vunpack.c.h.b16 %v324
    %v2377 = vunpack.c.l.b16 %v325
    %v2378 = vunpack.c.h.b16 %v325
    %v2379 = vunpack.c.l.b16 %v326
    %v2380 = vunpack.c.h.b16 %v326
    %v2381 = vunpack.c.l.b16 %v327
    %v2382 = vunpack.c.h.b16 %v327
    %v2383 = vunpack.c.l.b16 %v328
    %v2384 = vunpack.c.h.b16 %v328
    %v2385 = vunpack.c.l.b16 %v329
    %v2386 = vunpack.c.h.b16 %v329
    %v2387 = vunpack.c.l.b16 %v330
    %v2388 = vunpack.c.h.b16 %v330
    %v2389 = vunpack.c.l.b16 %v331
    %v2390 = vunpack.c.h.b16 %v331
    %v2391 = vunpack.c.l.b16 %v332
    %v2392 = vunpack.c.h.b16 %v332
    %v2393 = vunpack.c.l.b16 %v333
    %v2394 = vunpack.c.h.b16 %v333
    %v2395 = vunpack.c.l.b16 %v334
    %v2396 = vunpack.c.h.b16 %v334
    %v2397 = vunpack.c.l.b16 %v335
    %v2398 = vunpack.c.h.b16 %v335
    %v2399 = vunpack.c.l.b16 %v336
    %v2400 = vunpack.c.h.b16 %v336
    %v2401 = vunpack.c.l.b16 %v337
    %v2402 = vunpack.c.h.b16 %v337
    %v2403 = vunpack.c.l.b16 %v338
    %v2404 = vunpack.c.h.b16 %v338
    %v2405 = vunpack.c.l.b16 %v339
    %v2406 = vunpack.c.h.b16 %v339
    %v2407 = vpack.c.b16 %v2155, %v2151
    %v2408 = vpack.c.b16 %v2156, %v2152
    %v2409 = vpack.c.b16 %v2157, %v2153
    %v2410 = vpack.c.b16 %v2158, %v2154
    %v2411 = vpack.c.b16 %v2163, %v2159
    %v2412 = vpack.c.b16 %v2164, %v2160
    %v2413 = vpack.c.b16 %v2165, %v2161
    %v2414 = vpack.c.b16 %v2166, %v2162
    %v2415 = vpack.c.b16 %v2171, %v2167
    %v2416 = vpack.c.b16 %v2172, %v2168
    %v2417 = vpack.c.b16 %v2173, %v2169
    %v2418 = vpack.c.b16 %v2174, %v2170
    %v2419 = vpack.c.b16 %v2179, %v2175
    %v2420 = vpack.c.b16 %v2180, %v2176
    %v2421 = vpack.c.b16 %v2181, %v2177
    %v2422 = vpack.c.b16 %v2182, %v2178
    %v2423 = vpack.c.b16 %v2187, %v2183
    %v2424 = vpack.c.b16 %v2188, %v2184
    %v2425 = vpack.c.b16 %v2189, %v2185
    %v2426 = vpack.c.b16 %v2190, %v2186
    %v2427 = vpack.c.b16 %v2195, %v2191
    %v2428 = vpack.c.b16 %v2196, %v2192
    %v2429 = vpack.c.b16 %v2197, %v2193
    %v2430 = vpack.c.b16 %v2198, %v2194
    %v2431 = vpack.c.b16 %v2203, %v2199
    %v2432 = vpack.c.b16 %v2204, %v2200
    %v2433 = vpack.c.b16 %v2205, %v2201
    %v2434 = vpack.c.b16 %v2206, %v2202
    %v2435 = vpack.c.b16 %v2211, %v2207
    %v2436 = vpack.c.b16 %v2212, %v2208
    %v2437 = vpack.c.b16 %v2213, %v2209
    %v2438 = vpack.c.b16 %v2214, %v2210
    %v2439 = vpack.c.b16 %v2219, %v2215
    %v2440 = vpack.c.b16 %v2220, %v2216
    %v2441 = vpack.c.b16 %v2221, %v2217
    %v2442 = vpack.c.b16 %v2222, %v2218
    %v2443 = vpack.c.b16 %v2227, %v2223
    %v2444 = vpack.c.b16 %v2228, %v2224
    %v2445 = vpack.c.b16 %v2229, %v2225
    %v2446 = vpack.c.b16 %v2230, %v2226
    %v2447 = vpack.c.b16 %v2235, %v2231
    %v2448 = vpack.c.b16 %v2236, %v2232
    %v2449 = vpack.c.b16 %v2237, %v2233
    %v2450 = vpack.c.b16 %v2238, %v2234
    %v2451 = vpack.c.b16 %v2243, %v2239
    %v2452 = vpack.c.b16 %v2244, %v2240
    %v2453 = vpack.c.b16 %v2245, %v2241
    %v2454 = vpack.c.b16 %v2246, %v2242
    %v2455 = vpack.c.b16 %v2251, %v2247
    %v2456 = vpack.c.b16 %v2252, %v2248
    %v2457 = vpack.c.b16 %v2253, %v2249
    %v2458 = vpack.c.b16 %v2254, %v2250
    %v2459 = vpack.c.b16 %v2259, %v2255
    %v2460 = vpack.c.b16 %v2260, %v2256
    %v2461 = vpack.c.b16 %v2261, %v2257
    %v2462 = vpack.c.b16 %v2262, %v2258
    %v2463 = vpack.c.b16 %v2267, %v2263
    %v2464 = vpack.c.b16 %v2268, %v2264
    %v2465 = vpack.c.b16 %v2269, %v2265
    %v2466 = vpack.c.b16 %v2270, %v2266
    %v2467 = vpack.c.b16 %v2275, %v2271
    %v2468 = vpack.c.b16 %v2276, %v2272
    %v2469 = vpack.c.b16 %v2277, %v2273
    %v2470 = vpack.c.b16 %v2278, %v2274
    %v2471 = vpack.c.b16 %v2283, %v2279
    %v2472 = vpack.c.b16 %v2284, %v2280
    %v2473 = vpack.c.b16 %v2285, %v2281
    %v2474 = vpack.c.b16 %v2286, %v2282
    %v2475 = vpack.c.b16 %v2291, %v2287
    %v2476 = vpack.c.b16 %v2292, %v2288
    %v2477 = vpack.c.b16 %v2293, %v2289
    %v2478 = vpack.c.b16 %v2294, %v2290
    %v2479 = vpack.c.b16 %v2299, %v2295
    %v2480 = vpack.c.b16 %v2300, %v2296
    %v2481 = vpack.c.b16 %v2301, %v2297
    %v2482 = vpack.c.b16 %v2302, %v2298
    %v2483 = vpack.c.b16 %v2307, %v2303
    %v2484 = vpack.c.b16 %v2308, %v2304
    %v2485 = vpack.c.b16 %v2309, %v2305
    %v2486 = vpack.c.b16 %v2310, %v2306
    %v2487 = vpack.c.b16 %v2315, %v2311
    %v2488 = vpack.c.b16 %v2316, %v2312
    %v2489 = vpack.c.b16 %v2317, %v2313
    %v2490 = vpack.c.b16 %v2318, %v2314
    %v2491 = vpack.c.b16 %v2323, %v2319
    %v2492 = vpack.c.b16 %v2324, %v2320
    %v2493 = vpack.c.b16 %v2325, %v2321
    %v2494 = vpack.c.b16 %v2326, %v2322
    %v2495 = vpack.c.b16 %v2331, %v2327
    %v2496 = vpack.c.b16 %v2332, %v2328
    %v2497 = vpack.c.b16 %v2333, %v2329
    %v2498 = vpack.c.b16 %v2334, %v2330
    %v2499 = vpack.c.b16 %v2339, %v2335
    %v2500 = vpack.c.b16 %v2340, %v2336
    %v2501 = vpack.c.b16 %v2341, %v2337
    %v2502 = vpack.c.b16 %v2342, %v2338
    %v2503 = vpack.c.b16 %v2347, %v2343
    %v2504 = vpack.c.b16 %v2348, %v2344
    %v2505 = vpack.c.b16 %v2349, %v2345
    %v2506 = vpack.c.b16 %v2350, %v2346
    %v2507 = vpack.c.b16 %v2355, %v2351
    %v2508 = vpack.c.b16 %v2356, %v2352
    %v2509 = vpack.c.b16 %v2357, %v2353
    %v2510 = vpack.c.b16 %v2358, %v2354
    %v2511 = vpack.c.b16 %v2363, %v2359
    %v2512 = vpack.c.b16 %v2364, %v2360
    %v2513 = vpack.c.b16 %v2365, %v2361
    %v2514 = vpack.c.b16 %v2366, %v2362
    %v2515 = vpack.c.b16 %v2371, %v2367
    %v2516 = vpack.c.b16 %v2372, %v2368
    %v2517 = vpack.c.b16 %v2373, %v2369
    %v2518 = vpack.c.b16 %v2374, %v2370
    %v2519 = vpack.c.b16 %v2379, %v2375
    %v2520 = vpack.c.b16 %v2380, %v2376
    %v2521 = vpack.c.b16 %v2381, %v2377
    %v2522 = vpack.c.b16 %v2382, %v2378
    %v2523 = vpack.c.b16 %v2387, %v2383
    %v2524 = vpack.c.b16 %v2388, %v2384
    %v2525 = vpack.c.b16 %v2389, %v2385
    %v2526 = vpack.c.b16 %v2390, %v2386
    %v2527 = vpack.c.b16 %v2395, %v2391
    %v2528 = vpack.c.b16 %v2396, %v2392
    %v2529 = vpack.c.b16 %v2397, %v2393
    %v2530 = vpack.c.b16 %v2398, %v2394
    %v2531 = vpack.c.b16 %v2403, %v2399
    %v2532 = vpack.c.b16 %v2404, %v2400
    %v2533 = vpack.c.b16 %v2405, %v2401
    %v2534 = vpack.c.b16 %v2406, %v2402
    %2663 = vmatprep.subr.bf16.mxu0 %v2408
    %2664 = vmatpush1.bf16.msra.mxu0 %v2407
    %2665 = vmatprep.subr.bf16.mxu0 %v2412
    %2666 = vmatpush1.bf16.msra.mxu0 %v2411
    %2667 = vmatprep.subr.bf16.mxu0 %v2416
    %2668 = vmatpush1.bf16.msra.mxu0 %v2415
    %2669 = vmatprep.subr.bf16.mxu0 %v2420
    %2670 = vmatpush1.bf16.msra.mxu0 %v2419
    %2671 = vmatprep.subr.bf16.mxu0 %v2424
    %2672 = vmatpush1.bf16.msra.mxu0 %v2423
    %2673 = vmatprep.subr.bf16.mxu0 %v2428
    %2674 = vmatpush1.bf16.msra.mxu0 %v2427
    %2675 = vmatprep.subr.bf16.mxu0 %v2432
    %2676 = vmatpush1.bf16.msra.mxu0 %v2431
    %2677 = vmatprep.subr.bf16.mxu0 %v2436
    %2678 = vmatpush1.bf16.msra.mxu0 %v2435
    %2679 = vmatprep.subr.bf16.mxu0 %v2440
    %2680 = vmatpush1.bf16.msra.mxu0 %v2439
    %2681 = vmatprep.subr.bf16.mxu0 %v2444
    %2682 = vmatpush1.bf16.msra.mxu0 %v2443
    %2683 = vmatprep.subr.bf16.mxu0 %v2448
    %2684 = vmatpush1.bf16.msra.mxu0 %v2447
    %2685 = vmatprep.subr.bf16.mxu0 %v2452
    %2686 = vmatpush1.bf16.msra.mxu0 %v2451
    %2687 = vmatprep.subr.bf16.mxu0 %v2456
    %2688 = vmatpush1.bf16.msra.mxu0 %v2455
    %2689 = vmatprep.subr.bf16.mxu0 %v2460
    %2690 = vmatpush1.bf16.msra.mxu0 %v2459
    %2691 = vmatprep.subr.bf16.mxu0 %v2464
    %2692 = vmatpush1.bf16.msra.mxu0 %v2463
    %2693 = vmatprep.subr.bf16.mxu0 %v2468
    %2694 = vmatpush1.bf16.msra.mxu0 %v2467
    %2695 = vmatprep.mubr.bf16.mxu0 %v2004
    %2696 = vmatmul.mubr.bf16.gmra.mrb[0].mxu0 %v2003
    %v2697 = vpop.f32.mrb[0].mxu0
    %v2698 = vadd.f32 %v2010, %v2697
    %v2699 = vpop.f32.mrb[0].mxu0
    %v2700 = vadd.f32 %v2014, %v2699
    %v2701 = vpop.f32.mrb[0].mxu0
    %v2702 = vadd.f32 %v2010, %v2701
    %v2703 = vpop.f32.mrb[0].mxu0
    %v2704 = vadd.f32 %v2014, %v2703
    %2705 = vdwg.mxu0
    %2706 = vmatprep.subr.bf16.mxu0 %v2472
    %2707 = vmatpush1.bf16.msra.mxu0 %v2471
    %2708 = vmatprep.subr.bf16.mxu0 %v2476
    %2709 = vmatpush1.bf16.msra.mxu0 %v2475
    %2710 = vmatprep.subr.bf16.mxu0 %v2480
    %2711 = vmatpush1.bf16.msra.mxu0 %v2479
    %2712 = vmatprep.subr.bf16.mxu0 %v2484
    %2713 = vmatpush1.bf16.msra.mxu0 %v2483
    %2714 = vmatprep.subr.bf16.mxu0 %v2488
    %2715 = vmatpush1.bf16.msra.mxu0 %v2487
    %2716 = vmatprep.subr.bf16.mxu0 %v2492
    %2717 = vmatpush1.bf16.msra.mxu0 %v2491
    %2718 = vmatprep.subr.bf16.mxu0 %v2496
    %2719 = vmatpush1.bf16.msra.mxu0 %v2495
    %2720 = vmatprep.subr.bf16.mxu0 %v2500
    %2721 = vmatpush1.bf16.msra.mxu0 %v2499
    %2722 = vmatprep.subr.bf16.mxu0 %v2504
    %2723 = vmatpush1.bf16.msra.mxu0 %v2503
    %2724 = vmatprep.subr.bf16.mxu0 %v2508
    %2725 = vmatpush1.bf16.msra.mxu0 %v2507
    %2726 = vmatprep.subr.bf16.mxu0 %v2512
    %2727 = vmatpush1.bf16.msra.mxu0 %v2511
    %2728 = vmatprep.subr.bf16.mxu0 %v2516
    %2729 = vmatpush1.bf16.msra.mxu0 %v2515
    %2730 = vmatprep.subr.bf16.mxu0 %v2520
    %2731 = vmatpush1.bf16.msra.mxu0 %v2519
    %2732 = vmatprep.subr.bf16.mxu0 %v2524
    %2733 = vmatpush1.bf16.msra.mxu0 %v2523
    %2734 = vmatprep.subr.bf16.mxu0 %v2528
    %2735 = vmatpush1.bf16.msra.mxu0 %v2527
    %2736 = vmatprep.subr.bf16.mxu0 %v2532
    %2737 = vmatpush1.bf16.msra.mxu0 %v2531
    %2738 = vmatprep.mubr.bf16.mxu0 %v2006
    %2739 = vmatmul.mubr.bf16.gmra.mrb[0].mxu0 %v2005
    %v2740 = vpop.f32.mrb[0].mxu0
    %v2741 = vadd.f32 %v2698, %v2740
    %v2742 = vpop.f32.mrb[0].mxu0
    %v2743 = vadd.f32 %v2700, %v2742
    %v2744 = vpop.f32.mrb[0].mxu0
    %v2745 = vadd.f32 %v2702, %v2744
    %v2746 = vpop.f32.mrb[0].mxu0
    %v2747 = vadd.f32 %v2704, %v2746
    %2748 = vdwg.mxu0
    %2749 = vmatprep.subr.bf16.mxu0 %v2410
    %2750 = vmatpush1.bf16.msra.mxu0 %v2409
    %2751 = vmatprep.subr.bf16.mxu0 %v2414
    %2752 = vmatpush1.bf16.msra.mxu0 %v2413
    %2753 = vmatprep.subr.bf16.mxu0 %v2418
    %2754 = vmatpush1.bf16.msra.mxu0 %v2417
    %2755 = vmatprep.subr.bf16.mxu0 %v2422
    %2756 = vmatpush1.bf16.msra.mxu0 %v2421
    %2757 = vmatprep.subr.bf16.mxu0 %v2426
    %2758 = vmatpush1.bf16.msra.mxu0 %v2425
    %2759 = vmatprep.subr.bf16.mxu0 %v2430
    %2760 = vmatpush1.bf16.msra.mxu0 %v2429
    %2761 = vmatprep.subr.bf16.mxu0 %v2434
    %2762 = vmatpush1.bf16.msra.mxu0 %v2433
    %2763 = vmatprep.subr.bf16.mxu0 %v2438
    %2764 = vmatpush1.bf16.msra.mxu0 %v2437
    %2765 = vmatprep.subr.bf16.mxu0 %v2442
    %2766 = vmatpush1.bf16.msra.mxu0 %v2441
    %2767 = vmatprep.subr.bf16.mxu0 %v2446
    %2768 = vmatpush1.bf16.msra.mxu0 %v2445
    %2769 = vmatprep.subr.bf16.mxu0 %v2450
    %2770 = vmatpush1.bf16.msra.mxu0 %v2449
    %2771 = vmatprep.subr.bf16.mxu0 %v2454
    %2772 = vmatpush1.bf16.msra.mxu0 %v2453
    %2773 = vmatprep.subr.bf16.mxu0 %v2458
    %2774 = vmatpush1.bf16.msra.mxu0 %v2457
    %2775 = vmatprep.subr.bf16.mxu0 %v2462
    %2776 = vmatpush1.bf16.msra.mxu0 %v2461
    %2777 = vmatprep.subr.bf16.mxu0 %v2466
    %2778 = vmatpush1.bf16.msra.mxu0 %v2465
    %2779 = vmatprep.subr.bf16.mxu0 %v2470
    %2780 = vmatpush1.bf16.msra.mxu0 %v2469
    %2781 = vmatprep.mubr.bf16.mxu0 %v2004
    %2782 = vmatmul.mubr.bf16.gmra.mrb[0].mxu0 %v2003
    %v2783 = vpop.f32.mrb[0].mxu0
    %v2784 = vadd.f32 %v2018, %v2783
    %v2785 = vpop.f32.mrb[0].mxu0
    %v2786 = vadd.f32 %v2022, %v2785
    %v2787 = vpop.f32.mrb[0].mxu0
    %v2788 = vadd.f32 %v2018, %v2787
    %v2789 = vpop.f32.mrb[0].mxu0
    %v2790 = vadd.f32 %v2022, %v2789
    %2791 = vdwg.mxu0
    %2792 = vmatprep.subr.bf16.mxu0 %v2474
    %2793 = vmatpush1.bf16.msra.mxu0 %v2473
    %2794 = vmatprep.subr.bf16.mxu0 %v2478
    %2795 = vmatpush1.bf16.msra.mxu0 %v2477
    %2796 = vmatprep.subr.bf16.mxu0 %v2482
    %2797 = vmatpush1.bf16.msra.mxu0 %v2481
    %2798 = vmatprep.subr.bf16.mxu0 %v2486
    %2799 = vmatpush1.bf16.msra.mxu0 %v2485
    %2800 = vmatprep.subr.bf16.mxu0 %v2490
    %2801 = vmatpush1.bf16.msra.mxu0 %v2489
    %2802 = vmatprep.subr.bf16.mxu0 %v2494
    %2803 = vmatpush1.bf16.msra.mxu0 %v2493
    %2804 = vmatprep.subr.bf16.mxu0 %v2498
    %2805 = vmatpush1.bf16.msra.mxu0 %v2497
    %2806 = vmatprep.subr.bf16.mxu0 %v2502
    %2807 = vmatpush1.bf16.msra.mxu0 %v2501
    %2808 = vmatprep.subr.bf16.mxu0 %v2506
    %2809 = vmatpush1.bf16.msra.mxu0 %v2505
    %2810 = vmatprep.subr.bf16.mxu0 %v2510
    %2811 = vmatpush1.bf16.msra.mxu0 %v2509
    %2812 = vmatprep.subr.bf16.mxu0 %v2514
    %2813 = vmatpush1.bf16.msra.mxu0 %v2513
    %2814 = vmatprep.subr.bf16.mxu0 %v2518
    %2815 = vmatpush1.bf16.msra.mxu0 %v2517
    %2816 = vmatprep.subr.bf16.mxu0 %v2522
    %2817 = vmatpush1.bf16.msra.mxu0 %v2521
    %2818 = vmatprep.subr.bf16.mxu0 %v2526
    %2819 = vmatpush1.bf16.msra.mxu0 %v2525
    %2820 = vmatprep.subr.bf16.mxu0 %v2530
    %2821 = vmatpush1.bf16.msra.mxu0 %v2529
    %2822 = vmatprep.subr.bf16.mxu0 %v2534
    %2823 = vmatpush1.bf16.msra.mxu0 %v2533
    %2824 = vmatprep.mubr.bf16.mxu0 %v2006
    %2825 = vmatmul.mubr.bf16.gmra.mrb[0].mxu0 %v2005
    %v2826 = vpop.f32.mrb[0].mxu0
    %v2827 = vadd.f32 %v2784, %v2826
    %v2828 = vpop.f32.mrb[0].mxu0
    %v2829 = vadd.f32 %v2786, %v2828
    %v2830 = vpop.f32.mrb[0].mxu0
    %v2831 = vadd.f32 %v2788, %v2830
    %v2832 = vpop.f32.mrb[0].mxu0
    %v2833 = vadd.f32 %v2790, %v2832
    %2834 = vdwg.mxu0
    %v2835 = vadd.f32 %v943, %v2741
    %v2836 = vadd.f32 %v945, %v2743
    %v2837 = vadd.f32 %v986, %v2827
    %v2838 = vadd.f32 %v988, %v2829
    %v2839 = vadd.f32 %v947, %v2745
    %v2840 = vadd.f32 %v949, %v2747
    %v2841 = vadd.f32 %v990, %v2831
    %v2842 = vadd.f32 %v992, %v2833
    %v2843 = vadd.f32 %v2835, %v2836
    %v2844 = vadd.f32 %v2843, %v2837
    %v2845 = vadd.f32 %v2844, %v2838
    %2846 = vadd.xlane.f32.xlu0 %v2845
    %v2847 = vpop.xlane.xlu0 %2846
    %v2848 = vadd.f32 %v2839, %v2840
    %v2849 = vadd.f32 %v2848, %v2841
    %v2850 = vadd.f32 %v2849, %v2842
    %2851 = vadd.xlane.f32.xlu0 %v2850
    %v2852 = vpop.xlane.xlu0 %2851
    %v2853 = vmul.f32 %v2847, %v1004
    %v2854 = vmul.f32 %v2852, %v1004
    %v2855 = vmul.f32 %v2835, %v2835
    %v2856 = vmul.f32 %v2836, %v2836
    %v2857 = vmul.f32 %v2837, %v2837
    %v2858 = vmul.f32 %v2838, %v2838
    %v2859 = vmul.f32 %v2839, %v2839
    %v2860 = vmul.f32 %v2840, %v2840
    %v2861 = vmul.f32 %v2841, %v2841
    %v2862 = vmul.f32 %v2842, %v2842
    %v2863 = vadd.f32 %v2855, %v2856
    %v2864 = vadd.f32 %v2863, %v2857
    %v2865 = vadd.f32 %v2864, %v2858
    %2866 = vadd.xlane.f32.xlu0 %v2865
    %v2867 = vpop.xlane.xlu0 %2866
    %v2868 = vadd.f32 %v2859, %v2860
    %v2869 = vadd.f32 %v2868, %v2861
    %v2870 = vadd.f32 %v2869, %v2862
    %2871 = vadd.xlane.f32.xlu0 %v2870
    %v2872 = vpop.xlane.xlu0 %2871
    %v2873 = vmul.f32 %v2867, %v1004
    %v2874 = vmul.f32 %v2872, %v1004
    %v2875 = vmul.f32 %v2853, %v2853
    %v2876 = vmul.f32 %v2854, %v2854
    %v2877 = vsub.f32 %v2873, %v2875
    %v2878 = vsub.f32 %v2874, %v2876
    %v2879 = vsub.f32 %v2835, %v2853
    %v2880 = vsub.f32 %v2836, %v2853
    %v2881 = vsub.f32 %v2837, %v2853
    %v2882 = vsub.f32 %v2838, %v2853
    %v2883 = vsub.f32 %v2839, %v2854
    %v2884 = vsub.f32 %v2840, %v2854
    %v2885 = vsub.f32 %v2841, %v2854
    %v2886 = vsub.f32 %v2842, %v2854
    %v2887 = vadd.f32 %v2877, 1e-05
    %v2888 = vadd.f32 %v2878, 1e-05
    %v2889 = vrsqrt.pop %v2887
    %v2890 = vrsqrt.pop %v2888
    %v2891 = vmul.f32 %v2879, %v2889
    %v2892 = vmul.f32 %v2880, %v2889
    %v2893 = vmul.f32 %v2881, %v2889
    %v2894 = vmul.f32 %v2882, %v2889
    %v2895 = vmul.f32 %v2883, %v2890
    %v2896 = vmul.f32 %v2884, %v2890
    %v2897 = vmul.f32 %v2885, %v2890
    %v2898 = vmul.f32 %v2886, %v2890
    %v2899 = vlaneseq
    %v2900 = vshrl.u32 %v2899, 7
    %v2901 = vsub.s32 5, %v2900
    %v2902 = vrot.slane %v44, %v2901
    %v2903 = vlaneseq
    %v2904 = vshrl.u32 %v2903, 7
    %v2905 = vsub.s32 5, %v2904
    %v2906 = vrot.slane %v45, %v2905
    %v2907 = vlaneseq
    %v2908 = vshrl.u32 %v2907, 7
    %v2909 = vsub.s32 5, %v2908
    %v2910 = vrot.slane %v46, %v2909
    %v2911 = vlaneseq
    %v2912 = vshrl.u32 %v2911, 7
    %v2913 = vsub.s32 5, %v2912
    %v2914 = vrot.slane %v47, %v2913
    %v2915 = vmul.f32 %v2891, %v2902
    %v2916 = vmul.f32 %v2892, %v2906
    %v2917 = vmul.f32 %v2893, %v2910
    %v2918 = vmul.f32 %v2894, %v2914
    %v2919 = vmul.f32 %v2895, %v2902
    %v2920 = vmul.f32 %v2896, %v2906
    %v2921 = vmul.f32 %v2897, %v2910
    %v2922 = vmul.f32 %v2898, %v2914
    %v2923 = vlaneseq
    %v2924 = vshrl.u32 %v2923, 7
    %v2925 = vsub.s32 6, %v2924
    %v2926 = vrot.slane %v44, %v2925
    %v2927 = vlaneseq
    %v2928 = vshrl.u32 %v2927, 7
    %v2929 = vsub.s32 6, %v2928
    %v2930 = vrot.slane %v45, %v2929
    %v2931 = vlaneseq
    %v2932 = vshrl.u32 %v2931, 7
    %v2933 = vsub.s32 6, %v2932
    %v2934 = vrot.slane %v46, %v2933
    %v2935 = vlaneseq
    %v2936 = vshrl.u32 %v2935, 7
    %v2937 = vsub.s32 6, %v2936
    %v2938 = vrot.slane %v47, %v2937
    %v2939 = vadd.f32 %v2915, %v2926
    %v2940 = vadd.f32 %v2916, %v2930
    %v2941 = vadd.f32 %v2917, %v2934
    %v2942 = vadd.f32 %v2918, %v2938
    %v2943 = vadd.f32 %v2919, %v2926
    %v2944 = vadd.f32 %v2920, %v2930
    %v2945 = vadd.f32 %v2921, %v2934
    %v2946 = vadd.f32 %v2922, %v2938
    %v2947 = vpack.c.bf16 %v2943, %v2939
    %v2948 = vpack.c.bf16 %v2944, %v2940
    %v2949 = vpack.c.bf16 %v2945, %v2941
    %v2950 = vpack.c.bf16 %v2946, %v2942
    %v2951 = vlaneseq
    %v2952 = vshrl.u32 %v2951, 7
    %v2953 = vsub.s32 7, %v2952
    %v2954 = vrot.slane %v44, %v2953
    %v2955 = vlaneseq
    %v2956 = vshrl.u32 %v2955, 7
    %v2957 = vsub.s32 7, %v2956
    %v2958 = vrot.slane %v45, %v2957
    %v2959 = vlaneseq
    %v2960 = vshrl.u32 %v2959, 7
    %v2961 = vsub.s32 7, %v2960
    %v2962 = vrot.slane %v46, %v2961
    %v2963 = vlaneseq
    %v2964 = vshrl.u32 %v2963, 7
    %v2965 = vsub.s32 7, %v2964
    %v2966 = vrot.slane %v47, %v2965
    %v3095 = vunpack.c.l.b16 %v340
    %v3096 = vunpack.c.h.b16 %v340
    %v3097 = vunpack.c.l.b16 %v341
    %v3098 = vunpack.c.h.b16 %v341
    %v3099 = vunpack.c.l.b16 %v342
    %v3100 = vunpack.c.h.b16 %v342
    %v3101 = vunpack.c.l.b16 %v343
    %v3102 = vunpack.c.h.b16 %v343
    %v3103 = vunpack.c.l.b16 %v344
    %v3104 = vunpack.c.h.b16 %v344
    %v3105 = vunpack.c.l.b16 %v345
    %v3106 = vunpack.c.h.b16 %v345
    %v3107 = vunpack.c.l.b16 %v346
    %v3108 = vunpack.c.h.b16 %v346
    %v3109 = vunpack.c.l.b16 %v347
    %v3110 = vunpack.c.h.b16 %v347
    %v3111 = vunpack.c.l.b16 %v348
    %v3112 = vunpack.c.h.b16 %v348
    %v3113 = vunpack.c.l.b16 %v349
    %v3114 = vunpack.c.h.b16 %v349
    %v3115 = vunpack.c.l.b16 %v350
    %v3116 = vunpack.c.h.b16 %v350
    %v3117 = vunpack.c.l.b16 %v351
    %v3118 = vunpack.c.h.b16 %v351
    %v3119 = vunpack.c.l.b16 %v352
    %v3120 = vunpack.c.h.b16 %v352
    %v3121 = vunpack.c.l.b16 %v353
    %v3122 = vunpack.c.h.b16 %v353
    %v3123 = vunpack.c.l.b16 %v354
    %v3124 = vunpack.c.h.b16 %v354
    %v3125 = vunpack.c.l.b16 %v355
    %v3126 = vunpack.c.h.b16 %v355
    %v3127 = vunpack.c.l.b16 %v356
    %v3128 = vunpack.c.h.b16 %v356
    %v3129 = vunpack.c.l.b16 %v357
    %v3130 = vunpack.c.h.b16 %v357
    %v3131 = vunpack.c.l.b16 %v358
    %v3132 = vunpack.c.h.b16 %v358
    %v3133 = vunpack.c.l.b16 %v359
    %v3134 = vunpack.c.h.b16 %v359
    %v3135 = vunpack.c.l.b16 %v360
    %v3136 = vunpack.c.h.b16 %v360
    %v3137 = vunpack.c.l.b16 %v361
    %v3138 = vunpack.c.h.b16 %v361
    %v3139 = vunpack.c.l.b16 %v362
    %v3140 = vunpack.c.h.b16 %v362
    %v3141 = vunpack.c.l.b16 %v363
    %v3142 = vunpack.c.h.b16 %v363
    %v3143 = vunpack.c.l.b16 %v364
    %v3144 = vunpack.c.h.b16 %v364
    %v3145 = vunpack.c.l.b16 %v365
    %v3146 = vunpack.c.h.b16 %v365
    %v3147 = vunpack.c.l.b16 %v366
    %v3148 = vunpack.c.h.b16 %v366
    %v3149 = vunpack.c.l.b16 %v367
    %v3150 = vunpack.c.h.b16 %v367
    %v3151 = vunpack.c.l.b16 %v368
    %v3152 = vunpack.c.h.b16 %v368
    %v3153 = vunpack.c.l.b16 %v369
    %v3154 = vunpack.c.h.b16 %v369
    %v3155 = vunpack.c.l.b16 %v370
    %v3156 = vunpack.c.h.b16 %v370
    %v3157 = vunpack.c.l.b16 %v371
    %v3158 = vunpack.c.h.b16 %v371
    %v3159 = vunpack.c.l.b16 %v372
    %v3160 = vunpack.c.h.b16 %v372
    %v3161 = vunpack.c.l.b16 %v373
    %v3162 = vunpack.c.h.b16 %v373
    %v3163 = vunpack.c.l.b16 %v374
    %v3164 = vunpack.c.h.b16 %v374
    %v3165 = vunpack.c.l.b16 %v375
    %v3166 = vunpack.c.h.b16 %v375
    %v3167 = vunpack.c.l.b16 %v376
    %v3168 = vunpack.c.h.b16 %v376
    %v3169 = vunpack.c.l.b16 %v377
    %v3170 = vunpack.c.h.b16 %v377
    %v3171 = vunpack.c.l.b16 %v378
    %v3172 = vunpack.c.h.b16 %v378
    %v3173 = vunpack.c.l.b16 %v379
    %v3174 = vunpack.c.h.b16 %v379
    %v3175 = vunpack.c.l.b16 %v380
    %v3176 = vunpack.c.h.b16 %v380
    %v3177 = vunpack.c.l.b16 %v381
    %v3178 = vunpack.c.h.b16 %v381
    %v3179 = vunpack.c.l.b16 %v382
    %v3180 = vunpack.c.h.b16 %v382
    %v3181 = vunpack.c.l.b16 %v383
    %v3182 = vunpack.c.h.b16 %v383
    %v3183 = vunpack.c.l.b16 %v384
    %v3184 = vunpack.c.h.b16 %v384
    %v3185 = vunpack.c.l.b16 %v385
    %v3186 = vunpack.c.h.b16 %v385
    %v3187 = vunpack.c.l.b16 %v386
    %v3188 = vunpack.c.h.b16 %v386
    %v3189 = vunpack.c.l.b16 %v387
    %v3190 = vunpack.c.h.b16 %v387
    %v3191 = vunpack.c.l.b16 %v388
    %v3192 = vunpack.c.h.b16 %v388
    %v3193 = vunpack.c.l.b16 %v389
    %v3194 = vunpack.c.h.b16 %v389
    %v3195 = vunpack.c.l.b16 %v390
    %v3196 = vunpack.c.h.b16 %v390
    %v3197 = vunpack.c.l.b16 %v391
    %v3198 = vunpack.c.h.b16 %v391
    %v3199 = vunpack.c.l.b16 %v392
    %v3200 = vunpack.c.h.b16 %v392
    %v3201 = vunpack.c.l.b16 %v393
    %v3202 = vunpack.c.h.b16 %v393
    %v3203 = vunpack.c.l.b16 %v394
    %v3204 = vunpack.c.h.b16 %v394
    %v3205 = vunpack.c.l.b16 %v395
    %v3206 = vunpack.c.h.b16 %v395
    %v3207 = vunpack.c.l.b16 %v396
    %v3208 = vunpack.c.h.b16 %v396
    %v3209 = vunpack.c.l.b16 %v397
    %v3210 = vunpack.c.h.b16 %v397
    %v3211 = vunpack.c.l.b16 %v398
    %v3212 = vunpack.c.h.b16 %v398
    %v3213 = vunpack.c.l.b16 %v399
    %v3214 = vunpack.c.h.b16 %v399
    %v3215 = vunpack.c.l.b16 %v400
    %v3216 = vunpack.c.h.b16 %v400
    %v3217 = vunpack.c.l.b16 %v401
    %v3218 = vunpack.c.h.b16 %v401
    %v3219 = vunpack.c.l.b16 %v402
    %v3220 = vunpack.c.h.b16 %v402
    %v3221 = vunpack.c.l.b16 %v403
    %v3222 = vunpack.c.h.b16 %v403
    %v3223 = vunpack.c.l.b16 %v404
    %v3224 = vunpack.c.h.b16 %v404
    %v3225 = vunpack.c.l.b16 %v405
    %v3226 = vunpack.c.h.b16 %v405
    %v3227 = vunpack.c.l.b16 %v406
    %v3228 = vunpack.c.h.b16 %v406
    %v3229 = vunpack.c.l.b16 %v407
    %v3230 = vunpack.c.h.b16 %v407
    %v3231 = vunpack.c.l.b16 %v408
    %v3232 = vunpack.c.h.b16 %v408
    %v3233 = vunpack.c.l.b16 %v409
    %v3234 = vunpack.c.h.b16 %v409
    %v3235 = vunpack.c.l.b16 %v410
    %v3236 = vunpack.c.h.b16 %v410
    %v3237 = vunpack.c.l.b16 %v411
    %v3238 = vunpack.c.h.b16 %v411
    %v3239 = vunpack.c.l.b16 %v412
    %v3240 = vunpack.c.h.b16 %v412
    %v3241 = vunpack.c.l.b16 %v413
    %v3242 = vunpack.c.h.b16 %v413
    %v3243 = vunpack.c.l.b16 %v414
    %v3244 = vunpack.c.h.b16 %v414
    %v3245 = vunpack.c.l.b16 %v415
    %v3246 = vunpack.c.h.b16 %v415
    %v3247 = vunpack.c.l.b16 %v416
    %v3248 = vunpack.c.h.b16 %v416
    %v3249 = vunpack.c.l.b16 %v417
    %v3250 = vunpack.c.h.b16 %v417
    %v3251 = vunpack.c.l.b16 %v418
    %v3252 = vunpack.c.h.b16 %v418
    %v3253 = vunpack.c.l.b16 %v419
    %v3254 = vunpack.c.h.b16 %v419
    %v3255 = vunpack.c.l.b16 %v420
    %v3256 = vunpack.c.h.b16 %v420
    %v3257 = vunpack.c.l.b16 %v421
    %v3258 = vunpack.c.h.b16 %v421
    %v3259 = vunpack.c.l.b16 %v422
    %v3260 = vunpack.c.h.b16 %v422
    %v3261 = vunpack.c.l.b16 %v423
    %v3262 = vunpack.c.h.b16 %v423
    %v3263 = vunpack.c.l.b16 %v424
    %v3264 = vunpack.c.h.b16 %v424
    %v3265 = vunpack.c.l.b16 %v425
    %v3266 = vunpack.c.h.b16 %v425
    %v3267 = vunpack.c.l.b16 %v426
    %v3268 = vunpack.c.h.b16 %v426
    %v3269 = vunpack.c.l.b16 %v427
    %v3270 = vunpack.c.h.b16 %v427
    %v3271 = vunpack.c.l.b16 %v428
    %v3272 = vunpack.c.h.b16 %v428
    %v3273 = vunpack.c.l.b16 %v429
    %v3274 = vunpack.c.h.b16 %v429
    %v3275 = vunpack.c.l.b16 %v430
    %v3276 = vunpack.c.h.b16 %v430
    %v3277 = vunpack.c.l.b16 %v431
    %v3278 = vunpack.c.h.b16 %v431
    %v3279 = vunpack.c.l.b16 %v432
    %v3280 = vunpack.c.h.b16 %v432
    %v3281 = vunpack.c.l.b16 %v433
    %v3282 = vunpack.c.h.b16 %v433
    %v3283 = vunpack.c.l.b16 %v434
    %v3284 = vunpack.c.h.b16 %v434
    %v3285 = vunpack.c.l.b16 %v435
    %v3286 = vunpack.c.h.b16 %v435
    %v3287 = vunpack.c.l.b16 %v436
    %v3288 = vunpack.c.h.b16 %v436
    %v3289 = vunpack.c.l.b16 %v437
    %v3290 = vunpack.c.h.b16 %v437
    %v3291 = vunpack.c.l.b16 %v438
    %v3292 = vunpack.c.h.b16 %v438
    %v3293 = vunpack.c.l.b16 %v439
    %v3294 = vunpack.c.h.b16 %v439
    %v3295 = vunpack.c.l.b16 %v440
    %v3296 = vunpack.c.h.b16 %v440
    %v3297 = vunpack.c.l.b16 %v441
    %v3298 = vunpack.c.h.b16 %v441
    %v3299 = vunpack.c.l.b16 %v442
    %v3300 = vunpack.c.h.b16 %v442
    %v3301 = vunpack.c.l.b16 %v443
    %v3302 = vunpack.c.h.b16 %v443
    %v3303 = vunpack.c.l.b16 %v444
    %v3304 = vunpack.c.h.b16 %v444
    %v3305 = vunpack.c.l.b16 %v445
    %v3306 = vunpack.c.h.b16 %v445
    %v3307 = vunpack.c.l.b16 %v446
    %v3308 = vunpack.c.h.b16 %v446
    %v3309 = vunpack.c.l.b16 %v447
    %v3310 = vunpack.c.h.b16 %v447
    %v3311 = vunpack.c.l.b16 %v448
    %v3312 = vunpack.c.h.b16 %v448
    %v3313 = vunpack.c.l.b16 %v449
    %v3314 = vunpack.c.h.b16 %v449
    %v3315 = vunpack.c.l.b16 %v450
    %v3316 = vunpack.c.h.b16 %v450
    %v3317 = vunpack.c.l.b16 %v451
    %v3318 = vunpack.c.h.b16 %v451
    %v3319 = vunpack.c.l.b16 %v452
    %v3320 = vunpack.c.h.b16 %v452
    %v3321 = vunpack.c.l.b16 %v453
    %v3322 = vunpack.c.h.b16 %v453
    %v3323 = vunpack.c.l.b16 %v454
    %v3324 = vunpack.c.h.b16 %v454
    %v3325 = vunpack.c.l.b16 %v455
    %v3326 = vunpack.c.h.b16 %v455
    %v3327 = vunpack.c.l.b16 %v456
    %v3328 = vunpack.c.h.b16 %v456
    %v3329 = vunpack.c.l.b16 %v457
    %v3330 = vunpack.c.h.b16 %v457
    %v3331 = vunpack.c.l.b16 %v458
    %v3332 = vunpack.c.h.b16 %v458
    %v3333 = vunpack.c.l.b16 %v459
    %v3334 = vunpack.c.h.b16 %v459
    %v3335 = vunpack.c.l.b16 %v460
    %v3336 = vunpack.c.h.b16 %v460
    %v3337 = vunpack.c.l.b16 %v461
    %v3338 = vunpack.c.h.b16 %v461
    %v3339 = vunpack.c.l.b16 %v462
    %v3340 = vunpack.c.h.b16 %v462
    %v3341 = vunpack.c.l.b16 %v463
    %v3342 = vunpack.c.h.b16 %v463
    %v3343 = vunpack.c.l.b16 %v464
    %v3344 = vunpack.c.h.b16 %v464
    %v3345 = vunpack.c.l.b16 %v465
    %v3346 = vunpack.c.h.b16 %v465
    %v3347 = vunpack.c.l.b16 %v466
    %v3348 = vunpack.c.h.b16 %v466
    %v3349 = vunpack.c.l.b16 %v467
    %v3350 = vunpack.c.h.b16 %v467
    %v3351 = vpack.c.b16 %v3099, %v3095
    %v3352 = vpack.c.b16 %v3100, %v3096
    %v3353 = vpack.c.b16 %v3101, %v3097
    %v3354 = vpack.c.b16 %v3102, %v3098
    %v3355 = vpack.c.b16 %v3107, %v3103
    %v3356 = vpack.c.b16 %v3108, %v3104
    %v3357 = vpack.c.b16 %v3109, %v3105
    %v3358 = vpack.c.b16 %v3110, %v3106
    %v3359 = vpack.c.b16 %v3115, %v3111
    %v3360 = vpack.c.b16 %v3116, %v3112
    %v3361 = vpack.c.b16 %v3117, %v3113
    %v3362 = vpack.c.b16 %v3118, %v3114
    %v3363 = vpack.c.b16 %v3123, %v3119
    %v3364 = vpack.c.b16 %v3124, %v3120
    %v3365 = vpack.c.b16 %v3125, %v3121
    %v3366 = vpack.c.b16 %v3126, %v3122
    %v3367 = vpack.c.b16 %v3131, %v3127
    %v3368 = vpack.c.b16 %v3132, %v3128
    %v3369 = vpack.c.b16 %v3133, %v3129
    %v3370 = vpack.c.b16 %v3134, %v3130
    %v3371 = vpack.c.b16 %v3139, %v3135
    %v3372 = vpack.c.b16 %v3140, %v3136
    %v3373 = vpack.c.b16 %v3141, %v3137
    %v3374 = vpack.c.b16 %v3142, %v3138
    %v3375 = vpack.c.b16 %v3147, %v3143
    %v3376 = vpack.c.b16 %v3148, %v3144
    %v3377 = vpack.c.b16 %v3149, %v3145
    %v3378 = vpack.c.b16 %v3150, %v3146
    %v3379 = vpack.c.b16 %v3155, %v3151
    %v3380 = vpack.c.b16 %v3156, %v3152
    %v3381 = vpack.c.b16 %v3157, %v3153
    %v3382 = vpack.c.b16 %v3158, %v3154
    %v3383 = vpack.c.b16 %v3163, %v3159
    %v3384 = vpack.c.b16 %v3164, %v3160
    %v3385 = vpack.c.b16 %v3165, %v3161
    %v3386 = vpack.c.b16 %v3166, %v3162
    %v3387 = vpack.c.b16 %v3171, %v3167
    %v3388 = vpack.c.b16 %v3172, %v3168
    %v3389 = vpack.c.b16 %v3173, %v3169
    %v3390 = vpack.c.b16 %v3174, %v3170
    %v3391 = vpack.c.b16 %v3179, %v3175
    %v3392 = vpack.c.b16 %v3180, %v3176
    %v3393 = vpack.c.b16 %v3181, %v3177
    %v3394 = vpack.c.b16 %v3182, %v3178
    %v3395 = vpack.c.b16 %v3187, %v3183
    %v3396 = vpack.c.b16 %v3188, %v3184
    %v3397 = vpack.c.b16 %v3189, %v3185
    %v3398 = vpack.c.b16 %v3190, %v3186
    %v3399 = vpack.c.b16 %v3195, %v3191
    %v3400 = vpack.c.b16 %v3196, %v3192
    %v3401 = vpack.c.b16 %v3197, %v3193
    %v3402 = vpack.c.b16 %v3198, %v3194
    %v3403 = vpack.c.b16 %v3203, %v3199
    %v3404 = vpack.c.b16 %v3204, %v3200
    %v3405 = vpack.c.b16 %v3205, %v3201
    %v3406 = vpack.c.b16 %v3206, %v3202
    %v3407 = vpack.c.b16 %v3211, %v3207
    %v3408 = vpack.c.b16 %v3212, %v3208
    %v3409 = vpack.c.b16 %v3213, %v3209
    %v3410 = vpack.c.b16 %v3214, %v3210
    %v3411 = vpack.c.b16 %v3219, %v3215
    %v3412 = vpack.c.b16 %v3220, %v3216
    %v3413 = vpack.c.b16 %v3221, %v3217
    %v3414 = vpack.c.b16 %v3222, %v3218
    %v3415 = vpack.c.b16 %v3227, %v3223
    %v3416 = vpack.c.b16 %v3228, %v3224
    %v3417 = vpack.c.b16 %v3229, %v3225
    %v3418 = vpack.c.b16 %v3230, %v3226
    %v3419 = vpack.c.b16 %v3235, %v3231
    %v3420 = vpack.c.b16 %v3236, %v3232
    %v3421 = vpack.c.b16 %v3237, %v3233
    %v3422 = vpack.c.b16 %v3238, %v3234
    %v3423 = vpack.c.b16 %v3243, %v3239
    %v3424 = vpack.c.b16 %v3244, %v3240
    %v3425 = vpack.c.b16 %v3245, %v3241
    %v3426 = vpack.c.b16 %v3246, %v3242
    %v3427 = vpack.c.b16 %v3251, %v3247
    %v3428 = vpack.c.b16 %v3252, %v3248
    %v3429 = vpack.c.b16 %v3253, %v3249
    %v3430 = vpack.c.b16 %v3254, %v3250
    %v3431 = vpack.c.b16 %v3259, %v3255
    %v3432 = vpack.c.b16 %v3260, %v3256
    %v3433 = vpack.c.b16 %v3261, %v3257
    %v3434 = vpack.c.b16 %v3262, %v3258
    %v3435 = vpack.c.b16 %v3267, %v3263
    %v3436 = vpack.c.b16 %v3268, %v3264
    %v3437 = vpack.c.b16 %v3269, %v3265
    %v3438 = vpack.c.b16 %v3270, %v3266
    %v3439 = vpack.c.b16 %v3275, %v3271
    %v3440 = vpack.c.b16 %v3276, %v3272
    %v3441 = vpack.c.b16 %v3277, %v3273
    %v3442 = vpack.c.b16 %v3278, %v3274
    %v3443 = vpack.c.b16 %v3283, %v3279
    %v3444 = vpack.c.b16 %v3284, %v3280
    %v3445 = vpack.c.b16 %v3285, %v3281
    %v3446 = vpack.c.b16 %v3286, %v3282
    %v3447 = vpack.c.b16 %v3291, %v3287
    %v3448 = vpack.c.b16 %v3292, %v3288
    %v3449 = vpack.c.b16 %v3293, %v3289
    %v3450 = vpack.c.b16 %v3294, %v3290
    %v3451 = vpack.c.b16 %v3299, %v3295
    %v3452 = vpack.c.b16 %v3300, %v3296
    %v3453 = vpack.c.b16 %v3301, %v3297
    %v3454 = vpack.c.b16 %v3302, %v3298
    %v3455 = vpack.c.b16 %v3307, %v3303
    %v3456 = vpack.c.b16 %v3308, %v3304
    %v3457 = vpack.c.b16 %v3309, %v3305
    %v3458 = vpack.c.b16 %v3310, %v3306
    %v3459 = vpack.c.b16 %v3315, %v3311
    %v3460 = vpack.c.b16 %v3316, %v3312
    %v3461 = vpack.c.b16 %v3317, %v3313
    %v3462 = vpack.c.b16 %v3318, %v3314
    %v3463 = vpack.c.b16 %v3323, %v3319
    %v3464 = vpack.c.b16 %v3324, %v3320
    %v3465 = vpack.c.b16 %v3325, %v3321
    %v3466 = vpack.c.b16 %v3326, %v3322
    %v3467 = vpack.c.b16 %v3331, %v3327
    %v3468 = vpack.c.b16 %v3332, %v3328
    %v3469 = vpack.c.b16 %v3333, %v3329
    %v3470 = vpack.c.b16 %v3334, %v3330
    %v3471 = vpack.c.b16 %v3339, %v3335
    %v3472 = vpack.c.b16 %v3340, %v3336
    %v3473 = vpack.c.b16 %v3341, %v3337
    %v3474 = vpack.c.b16 %v3342, %v3338
    %v3475 = vpack.c.b16 %v3347, %v3343
    %v3476 = vpack.c.b16 %v3348, %v3344
    %v3477 = vpack.c.b16 %v3349, %v3345
    %v3478 = vpack.c.b16 %v3350, %v3346
    %3607 = vmatprep.subr.bf16.mxu0 %v3352
    %3608 = vmatpush1.bf16.msra.mxu0 %v3351
    %3609 = vmatprep.subr.bf16.mxu0 %v3356
    %3610 = vmatpush1.bf16.msra.mxu0 %v3355
    %3611 = vmatprep.subr.bf16.mxu0 %v3360
    %3612 = vmatpush1.bf16.msra.mxu0 %v3359
    %3613 = vmatprep.subr.bf16.mxu0 %v3364
    %3614 = vmatpush1.bf16.msra.mxu0 %v3363
    %3615 = vmatprep.subr.bf16.mxu0 %v3368
    %3616 = vmatpush1.bf16.msra.mxu0 %v3367
    %3617 = vmatprep.subr.bf16.mxu0 %v3372
    %3618 = vmatpush1.bf16.msra.mxu0 %v3371
    %3619 = vmatprep.subr.bf16.mxu0 %v3376
    %3620 = vmatpush1.bf16.msra.mxu0 %v3375
    %3621 = vmatprep.subr.bf16.mxu0 %v3380
    %3622 = vmatpush1.bf16.msra.mxu0 %v3379
    %3623 = vmatprep.subr.bf16.mxu0 %v3384
    %3624 = vmatpush1.bf16.msra.mxu0 %v3383
    %3625 = vmatprep.subr.bf16.mxu0 %v3388
    %3626 = vmatpush1.bf16.msra.mxu0 %v3387
    %3627 = vmatprep.subr.bf16.mxu0 %v3392
    %3628 = vmatpush1.bf16.msra.mxu0 %v3391
    %3629 = vmatprep.subr.bf16.mxu0 %v3396
    %3630 = vmatpush1.bf16.msra.mxu0 %v3395
    %3631 = vmatprep.subr.bf16.mxu0 %v3400
    %3632 = vmatpush1.bf16.msra.mxu0 %v3399
    %3633 = vmatprep.subr.bf16.mxu0 %v3404
    %3634 = vmatpush1.bf16.msra.mxu0 %v3403
    %3635 = vmatprep.subr.bf16.mxu0 %v3408
    %3636 = vmatpush1.bf16.msra.mxu0 %v3407
    %3637 = vmatprep.subr.bf16.mxu0 %v3412
    %3638 = vmatpush1.bf16.msra.mxu0 %v3411
    %3639 = vmatprep.mubr.bf16.mxu0 %v2948
    %3640 = vmatmul.mubr.bf16.gmra.mrb[0].mxu0 %v2947
    %v3641 = vpop.f32.mrb[0].mxu0
    %v3642 = vadd.f32 %v2954, %v3641
    %v3643 = vpop.f32.mrb[0].mxu0
    %v3644 = vadd.f32 %v2958, %v3643
    %v3645 = vpop.f32.mrb[0].mxu0
    %v3646 = vadd.f32 %v2954, %v3645
    %v3647 = vpop.f32.mrb[0].mxu0
    %v3648 = vadd.f32 %v2958, %v3647
    %3649 = vdwg.mxu0
    %3650 = vmatprep.subr.bf16.mxu0 %v3416
    %3651 = vmatpush1.bf16.msra.mxu0 %v3415
    %3652 = vmatprep.subr.bf16.mxu0 %v3420
    %3653 = vmatpush1.bf16.msra.mxu0 %v3419
    %3654 = vmatprep.subr.bf16.mxu0 %v3424
    %3655 = vmatpush1.bf16.msra.mxu0 %v3423
    %3656 = vmatprep.subr.bf16.mxu0 %v3428
    %3657 = vmatpush1.bf16.msra.mxu0 %v3427
    %3658 = vmatprep.subr.bf16.mxu0 %v3432
    %3659 = vmatpush1.bf16.msra.mxu0 %v3431
    %3660 = vmatprep.subr.bf16.mxu0 %v3436
    %3661 = vmatpush1.bf16.msra.mxu0 %v3435
    %3662 = vmatprep.subr.bf16.mxu0 %v3440
    %3663 = vmatpush1.bf16.msra.mxu0 %v3439
    %3664 = vmatprep.subr.bf16.mxu0 %v3444
    %3665 = vmatpush1.bf16.msra.mxu0 %v3443
    %3666 = vmatprep.subr.bf16.mxu0 %v3448
    %3667 = vmatpush1.bf16.msra.mxu0 %v3447
    %3668 = vmatprep.subr.bf16.mxu0 %v3452
    %3669 = vmatpush1.bf16.msra.mxu0 %v3451
    %3670 = vmatprep.subr.bf16.mxu0 %v3456
    %3671 = vmatpush1.bf16.msra.mxu0 %v3455
    %3672 = vmatprep.subr.bf16.mxu0 %v3460
    %3673 = vmatpush1.bf16.msra.mxu0 %v3459
    %3674 = vmatprep.subr.bf16.mxu0 %v3464
    %3675 = vmatpush1.bf16.msra.mxu0 %v3463
    %3676 = vmatprep.subr.bf16.mxu0 %v3468
    %3677 = vmatpush1.bf16.msra.mxu0 %v3467
    %3678 = vmatprep.subr.bf16.mxu0 %v3472
    %3679 = vmatpush1.bf16.msra.mxu0 %v3471
    %3680 = vmatprep.subr.bf16.mxu0 %v3476
    %3681 = vmatpush1.bf16.msra.mxu0 %v3475
    %3682 = vmatprep.mubr.bf16.mxu0 %v2950
    %3683 = vmatmul.mubr.bf16.gmra.mrb[0].mxu0 %v2949
    %v3684 = vpop.f32.mrb[0].mxu0
    %v3685 = vadd.f32 %v3642, %v3684
    %v3686 = vpop.f32.mrb[0].mxu0
    %v3687 = vadd.f32 %v3644, %v3686
    %v3688 = vpop.f32.mrb[0].mxu0
    %v3689 = vadd.f32 %v3646, %v3688
    %v3690 = vpop.f32.mrb[0].mxu0
    %v3691 = vadd.f32 %v3648, %v3690
    %3692 = vdwg.mxu0
    %3693 = vmatprep.subr.bf16.mxu0 %v3354
    %3694 = vmatpush1.bf16.msra.mxu0 %v3353
    %3695 = vmatprep.subr.bf16.mxu0 %v3358
    %3696 = vmatpush1.bf16.msra.mxu0 %v3357
    %3697 = vmatprep.subr.bf16.mxu0 %v3362
    %3698 = vmatpush1.bf16.msra.mxu0 %v3361
    %3699 = vmatprep.subr.bf16.mxu0 %v3366
    %3700 = vmatpush1.bf16.msra.mxu0 %v3365
    %3701 = vmatprep.subr.bf16.mxu0 %v3370
    %3702 = vmatpush1.bf16.msra.mxu0 %v3369
    %3703 = vmatprep.subr.bf16.mxu0 %v3374
    %3704 = vmatpush1.bf16.msra.mxu0 %v3373
    %3705 = vmatprep.subr.bf16.mxu0 %v3378
    %3706 = vmatpush1.bf16.msra.mxu0 %v3377
    %3707 = vmatprep.subr.bf16.mxu0 %v3382
    %3708 = vmatpush1.bf16.msra.mxu0 %v3381
    %3709 = vmatprep.subr.bf16.mxu0 %v3386
    %3710 = vmatpush1.bf16.msra.mxu0 %v3385
    %3711 = vmatprep.subr.bf16.mxu0 %v3390
    %3712 = vmatpush1.bf16.msra.mxu0 %v3389
    %3713 = vmatprep.subr.bf16.mxu0 %v3394
    %3714 = vmatpush1.bf16.msra.mxu0 %v3393
    %3715 = vmatprep.subr.bf16.mxu0 %v3398
    %3716 = vmatpush1.bf16.msra.mxu0 %v3397
    %3717 = vmatprep.subr.bf16.mxu0 %v3402
    %3718 = vmatpush1.bf16.msra.mxu0 %v3401
    %3719 = vmatprep.subr.bf16.mxu0 %v3406
    %3720 = vmatpush1.bf16.msra.mxu0 %v3405
    %3721 = vmatprep.subr.bf16.mxu0 %v3410
    %3722 = vmatpush1.bf16.msra.mxu0 %v3409
    %3723 = vmatprep.subr.bf16.mxu0 %v3414
    %3724 = vmatpush1.bf16.msra.mxu0 %v3413
    %3725 = vmatprep.mubr.bf16.mxu0 %v2948
    %3726 = vmatmul.mubr.bf16.gmra.mrb[0].mxu0 %v2947
    %v3727 = vpop.f32.mrb[0].mxu0
    %v3728 = vadd.f32 %v2962, %v3727
    %v3729 = vpop.f32.mrb[0].mxu0
    %v3730 = vadd.f32 %v2966, %v3729
    %v3731 = vpop.f32.mrb[0].mxu0
    %v3732 = vadd.f32 %v2962, %v3731
    %v3733 = vpop.f32.mrb[0].mxu0
    %v3734 = vadd.f32 %v2966, %v3733
    %3735 = vdwg.mxu0
    %3736 = vmatprep.subr.bf16.mxu0 %v3418
    %3737 = vmatpush1.bf16.msra.mxu0 %v3417
    %3738 = vmatprep.subr.bf16.mxu0 %v3422
    %3739 = vmatpush1.bf16.msra.mxu0 %v3421
    %3740 = vmatprep.subr.bf16.mxu0 %v3426
    %3741 = vmatpush1.bf16.msra.mxu0 %v3425
    %3742 = vmatprep.subr.bf16.mxu0 %v3430
    %3743 = vmatpush1.bf16.msra.mxu0 %v3429
    %3744 = vmatprep.subr.bf16.mxu0 %v3434
    %3745 = vmatpush1.bf16.msra.mxu0 %v3433
    %3746 = vmatprep.subr.bf16.mxu0 %v3438
    %3747 = vmatpush1.bf16.msra.mxu0 %v3437
    %3748 = vmatprep.subr.bf16.mxu0 %v3442
    %3749 = vmatpush1.bf16.msra.mxu0 %v3441
    %3750 = vmatprep.subr.bf16.mxu0 %v3446
    %3751 = vmatpush1.bf16.msra.mxu0 %v3445
    %3752 = vmatprep.subr.bf16.mxu0 %v3450
    %3753 = vmatpush1.bf16.msra.mxu0 %v3449
    %3754 = vmatprep.subr.bf16.mxu0 %v3454
    %3755 = vmatpush1.bf16.msra.mxu0 %v3453
    %3756 = vmatprep.subr.bf16.mxu0 %v3458
    %3757 = vmatpush1.bf16.msra.mxu0 %v3457
    %3758 = vmatprep.subr.bf16.mxu0 %v3462
    %3759 = vmatpush1.bf16.msra.mxu0 %v3461
    %3760 = vmatprep.subr.bf16.mxu0 %v3466
    %3761 = vmatpush1.bf16.msra.mxu0 %v3465
    %3762 = vmatprep.subr.bf16.mxu0 %v3470
    %3763 = vmatpush1.bf16.msra.mxu0 %v3469
    %3764 = vmatprep.subr.bf16.mxu0 %v3474
    %3765 = vmatpush1.bf16.msra.mxu0 %v3473
    %3766 = vmatprep.subr.bf16.mxu0 %v3478
    %3767 = vmatpush1.bf16.msra.mxu0 %v3477
    %3768 = vmatprep.mubr.bf16.mxu0 %v2950
    %3769 = vmatmul.mubr.bf16.gmra.mrb[0].mxu0 %v2949
    %v3770 = vpop.f32.mrb[0].mxu0
    %v3771 = vadd.f32 %v3728, %v3770
    %v3772 = vpop.f32.mrb[0].mxu0
    %v3773 = vadd.f32 %v3730, %v3772
    %v3774 = vpop.f32.mrb[0].mxu0
    %v3775 = vadd.f32 %v3732, %v3774
    %v3776 = vpop.f32.mrb[0].mxu0
    %v3777 = vadd.f32 %v3734, %v3776
    %3778 = vdwg.mxu0
    %v3779 = vmul.f32 %v3685, %v3685
    %v3780 = vmul.f32 %v3687, %v3687
    %v3781 = vmul.f32 %v3771, %v3771
    %v3782 = vmul.f32 %v3773, %v3773
    %v3783 = vmul.f32 %v3689, %v3689
    %v3784 = vmul.f32 %v3691, %v3691
    %v3785 = vmul.f32 %v3775, %v3775
    %v3786 = vmul.f32 %v3777, %v3777
    %v3787 = vmul.f32 %v3685, %v3779
    %v3788 = vmul.f32 %v3687, %v3780
    %v3789 = vmul.f32 %v3771, %v3781
    %v3790 = vmul.f32 %v3773, %v3782
    %v3791 = vmul.f32 %v3689, %v3783
    %v3792 = vmul.f32 %v3691, %v3784
    %v3793 = vmul.f32 %v3775, %v3785
    %v3794 = vmul.f32 %v3777, %v3786
    %v3795 = vmul.f32 %v3787, 0.044715
    %v3796 = vmul.f32 %v3788, 0.044715
    %v3797 = vmul.f32 %v3789, 0.044715
    %v3798 = vmul.f32 %v3790, 0.044715
    %v3799 = vmul.f32 %v3791, 0.044715
    %v3800 = vmul.f32 %v3792, 0.044715
    %v3801 = vmul.f32 %v3793, 0.044715
    %v3802 = vmul.f32 %v3794, 0.044715
    %v3803 = vadd.f32 %v3685, %v3795
    %v3804 = vadd.f32 %v3687, %v3796
    %v3805 = vadd.f32 %v3771, %v3797
    %v3806 = vadd.f32 %v3773, %v3798
    %v3807 = vadd.f32 %v3689, %v3799
    %v3808 = vadd.f32 %v3691, %v3800
    %v3809 = vadd.f32 %v3775, %v3801
    %v3810 = vadd.f32 %v3777, %v3802
    %v3811 = vmul.f32 %v3803, 0.7978846
    %v3812 = vmul.f32 %v3804, 0.7978846
    %v3813 = vmul.f32 %v3805, 0.7978846
    %v3814 = vmul.f32 %v3806, 0.7978846
    %v3815 = vmul.f32 %v3807, 0.7978846
    %v3816 = vmul.f32 %v3808, 0.7978846
    %v3817 = vmul.f32 %v3809, 0.7978846
    %v3818 = vmul.f32 %v3810, 0.7978846
    %v3819 = vtanh.pop %v3811
    %v3820 = vtanh.pop %v3812
    %v3821 = vtanh.pop %v3813
    %v3822 = vtanh.pop %v3814
    %v3823 = vtanh.pop %v3815
    %v3824 = vtanh.pop %v3816
    %v3825 = vtanh.pop %v3817
    %v3826 = vtanh.pop %v3818
    %v3827 = vadd.f32 %v3819, 1.0
    %v3828 = vadd.f32 %v3820, 1.0
    %v3829 = vadd.f32 %v3821, 1.0
    %v3830 = vadd.f32 %v3822, 1.0
    %v3831 = vadd.f32 %v3823, 1.0
    %v3832 = vadd.f32 %v3824, 1.0
    %v3833 = vadd.f32 %v3825, 1.0
    %v3834 = vadd.f32 %v3826, 1.0
    %v3835 = vmul.f32 %v3827, 0.5
    %v3836 = vmul.f32 %v3828, 0.5
    %v3837 = vmul.f32 %v3829, 0.5
    %v3838 = vmul.f32 %v3830, 0.5
    %v3839 = vmul.f32 %v3831, 0.5
    %v3840 = vmul.f32 %v3832, 0.5
    %v3841 = vmul.f32 %v3833, 0.5
    %v3842 = vmul.f32 %v3834, 0.5
    %v3843 = vmul.f32 %v3685, %v3835
    %v3844 = vmul.f32 %v3687, %v3836
    %v3845 = vmul.f32 %v3771, %v3837
    %v3846 = vmul.f32 %v3773, %v3838
    %v3847 = vmul.f32 %v3689, %v3839
    %v3848 = vmul.f32 %v3691, %v3840
    %v3849 = vmul.f32 %v3775, %v3841
    %v3850 = vmul.f32 %v3777, %v3842
    %v3851 = vpack.c.bf16 %v3847, %v3843
    %v3852 = vpack.c.bf16 %v3848, %v3844
    %v3853 = vpack.c.bf16 %v3849, %v3845
    %v3854 = vpack.c.bf16 %v3850, %v3846
    %v3855 = vlaneseq
    %v3856 = vshrl.u32 %v3855, 7
    %v3857 = vsub.s32 0, %v3856
    %v3858 = vrot.slane %v48, %v3857
    %v3859 = vlaneseq
    %v3860 = vshrl.u32 %v3859, 7
    %v3861 = vsub.s32 0, %v3860
    %v3862 = vrot.slane %v49, %v3861
    %v3863 = vlaneseq
    %v3864 = vshrl.u32 %v3863, 7
    %v3865 = vsub.s32 0, %v3864
    %v3866 = vrot.slane %v50, %v3865
    %v3867 = vlaneseq
    %v3868 = vshrl.u32 %v3867, 7
    %v3869 = vsub.s32 0, %v3868
    %v3870 = vrot.slane %v51, %v3869
    %v3999 = vunpack.c.l.b16 %v468
    %v4000 = vunpack.c.h.b16 %v468
    %v4001 = vunpack.c.l.b16 %v469
    %v4002 = vunpack.c.h.b16 %v469
    %v4003 = vunpack.c.l.b16 %v470
    %v4004 = vunpack.c.h.b16 %v470
    %v4005 = vunpack.c.l.b16 %v471
    %v4006 = vunpack.c.h.b16 %v471
    %v4007 = vunpack.c.l.b16 %v472
    %v4008 = vunpack.c.h.b16 %v472
    %v4009 = vunpack.c.l.b16 %v473
    %v4010 = vunpack.c.h.b16 %v473
    %v4011 = vunpack.c.l.b16 %v474
    %v4012 = vunpack.c.h.b16 %v474
    %v4013 = vunpack.c.l.b16 %v475
    %v4014 = vunpack.c.h.b16 %v475
    %v4015 = vunpack.c.l.b16 %v476
    %v4016 = vunpack.c.h.b16 %v476
    %v4017 = vunpack.c.l.b16 %v477
    %v4018 = vunpack.c.h.b16 %v477
    %v4019 = vunpack.c.l.b16 %v478
    %v4020 = vunpack.c.h.b16 %v478
    %v4021 = vunpack.c.l.b16 %v479
    %v4022 = vunpack.c.h.b16 %v479
    %v4023 = vunpack.c.l.b16 %v480
    %v4024 = vunpack.c.h.b16 %v480
    %v4025 = vunpack.c.l.b16 %v481
    %v4026 = vunpack.c.h.b16 %v481
    %v4027 = vunpack.c.l.b16 %v482
    %v4028 = vunpack.c.h.b16 %v482
    %v4029 = vunpack.c.l.b16 %v483
    %v4030 = vunpack.c.h.b16 %v483
    %v4031 = vunpack.c.l.b16 %v484
    %v4032 = vunpack.c.h.b16 %v484
    %v4033 = vunpack.c.l.b16 %v485
    %v4034 = vunpack.c.h.b16 %v485
    %v4035 = vunpack.c.l.b16 %v486
    %v4036 = vunpack.c.h.b16 %v486
    %v4037 = vunpack.c.l.b16 %v487
    %v4038 = vunpack.c.h.b16 %v487
    %v4039 = vunpack.c.l.b16 %v488
    %v4040 = vunpack.c.h.b16 %v488
    %v4041 = vunpack.c.l.b16 %v489
    %v4042 = vunpack.c.h.b16 %v489
    %v4043 = vunpack.c.l.b16 %v490
    %v4044 = vunpack.c.h.b16 %v490
    %v4045 = vunpack.c.l.b16 %v491
    %v4046 = vunpack.c.h.b16 %v491
    %v4047 = vunpack.c.l.b16 %v492
    %v4048 = vunpack.c.h.b16 %v492
    %v4049 = vunpack.c.l.b16 %v493
    %v4050 = vunpack.c.h.b16 %v493
    %v4051 = vunpack.c.l.b16 %v494
    %v4052 = vunpack.c.h.b16 %v494
    %v4053 = vunpack.c.l.b16 %v495
    %v4054 = vunpack.c.h.b16 %v495
    %v4055 = vunpack.c.l.b16 %v496
    %v4056 = vunpack.c.h.b16 %v496
    %v4057 = vunpack.c.l.b16 %v497
    %v4058 = vunpack.c.h.b16 %v497
    %v4059 = vunpack.c.l.b16 %v498
    %v4060 = vunpack.c.h.b16 %v498
    %v4061 = vunpack.c.l.b16 %v499
    %v4062 = vunpack.c.h.b16 %v499
    %v4063 = vunpack.c.l.b16 %v500
    %v4064 = vunpack.c.h.b16 %v500
    %v4065 = vunpack.c.l.b16 %v501
    %v4066 = vunpack.c.h.b16 %v501
    %v4067 = vunpack.c.l.b16 %v502
    %v4068 = vunpack.c.h.b16 %v502
    %v4069 = vunpack.c.l.b16 %v503
    %v4070 = vunpack.c.h.b16 %v503
    %v4071 = vunpack.c.l.b16 %v504
    %v4072 = vunpack.c.h.b16 %v504
    %v4073 = vunpack.c.l.b16 %v505
    %v4074 = vunpack.c.h.b16 %v505
    %v4075 = vunpack.c.l.b16 %v506
    %v4076 = vunpack.c.h.b16 %v506
    %v4077 = vunpack.c.l.b16 %v507
    %v4078 = vunpack.c.h.b16 %v507
    %v4079 = vunpack.c.l.b16 %v508
    %v4080 = vunpack.c.h.b16 %v508
    %v4081 = vunpack.c.l.b16 %v509
    %v4082 = vunpack.c.h.b16 %v509
    %v4083 = vunpack.c.l.b16 %v510
    %v4084 = vunpack.c.h.b16 %v510
    %v4085 = vunpack.c.l.b16 %v511
    %v4086 = vunpack.c.h.b16 %v511
    %v4087 = vunpack.c.l.b16 %v512
    %v4088 = vunpack.c.h.b16 %v512
    %v4089 = vunpack.c.l.b16 %v513
    %v4090 = vunpack.c.h.b16 %v513
    %v4091 = vunpack.c.l.b16 %v514
    %v4092 = vunpack.c.h.b16 %v514
    %v4093 = vunpack.c.l.b16 %v515
    %v4094 = vunpack.c.h.b16 %v515
    %v4095 = vunpack.c.l.b16 %v516
    %v4096 = vunpack.c.h.b16 %v516
    %v4097 = vunpack.c.l.b16 %v517
    %v4098 = vunpack.c.h.b16 %v517
    %v4099 = vunpack.c.l.b16 %v518
    %v4100 = vunpack.c.h.b16 %v518
    %v4101 = vunpack.c.l.b16 %v519
    %v4102 = vunpack.c.h.b16 %v519
    %v4103 = vunpack.c.l.b16 %v520
    %v4104 = vunpack.c.h.b16 %v520
    %v4105 = vunpack.c.l.b16 %v521
    %v4106 = vunpack.c.h.b16 %v521
    %v4107 = vunpack.c.l.b16 %v522
    %v4108 = vunpack.c.h.b16 %v522
    %v4109 = vunpack.c.l.b16 %v523
    %v4110 = vunpack.c.h.b16 %v523
    %v4111 = vunpack.c.l.b16 %v524
    %v4112 = vunpack.c.h.b16 %v524
    %v4113 = vunpack.c.l.b16 %v525
    %v4114 = vunpack.c.h.b16 %v525
    %v4115 = vunpack.c.l.b16 %v526
    %v4116 = vunpack.c.h.b16 %v526
    %v4117 = vunpack.c.l.b16 %v527
    %v4118 = vunpack.c.h.b16 %v527
    %v4119 = vunpack.c.l.b16 %v528
    %v4120 = vunpack.c.h.b16 %v528
    %v4121 = vunpack.c.l.b16 %v529
    %v4122 = vunpack.c.h.b16 %v529
    %v4123 = vunpack.c.l.b16 %v530
    %v4124 = vunpack.c.h.b16 %v530
    %v4125 = vunpack.c.l.b16 %v531
    %v4126 = vunpack.c.h.b16 %v531
    %v4127 = vunpack.c.l.b16 %v532
    %v4128 = vunpack.c.h.b16 %v532
    %v4129 = vunpack.c.l.b16 %v533
    %v4130 = vunpack.c.h.b16 %v533
    %v4131 = vunpack.c.l.b16 %v534
    %v4132 = vunpack.c.h.b16 %v534
    %v4133 = vunpack.c.l.b16 %v535
    %v4134 = vunpack.c.h.b16 %v535
    %v4135 = vunpack.c.l.b16 %v536
    %v4136 = vunpack.c.h.b16 %v536
    %v4137 = vunpack.c.l.b16 %v537
    %v4138 = vunpack.c.h.b16 %v537
    %v4139 = vunpack.c.l.b16 %v538
    %v4140 = vunpack.c.h.b16 %v538
    %v4141 = vunpack.c.l.b16 %v539
    %v4142 = vunpack.c.h.b16 %v539
    %v4143 = vunpack.c.l.b16 %v540
    %v4144 = vunpack.c.h.b16 %v540
    %v4145 = vunpack.c.l.b16 %v541
    %v4146 = vunpack.c.h.b16 %v541
    %v4147 = vunpack.c.l.b16 %v542
    %v4148 = vunpack.c.h.b16 %v542
    %v4149 = vunpack.c.l.b16 %v543
    %v4150 = vunpack.c.h.b16 %v543
    %v4151 = vunpack.c.l.b16 %v544
    %v4152 = vunpack.c.h.b16 %v544
    %v4153 = vunpack.c.l.b16 %v545
    %v4154 = vunpack.c.h.b16 %v545
    %v4155 = vunpack.c.l.b16 %v546
    %v4156 = vunpack.c.h.b16 %v546
    %v4157 = vunpack.c.l.b16 %v547
    %v4158 = vunpack.c.h.b16 %v547
    %v4159 = vunpack.c.l.b16 %v548
    %v4160 = vunpack.c.h.b16 %v548
    %v4161 = vunpack.c.l.b16 %v549
    %v4162 = vunpack.c.h.b16 %v549
    %v4163 = vunpack.c.l.b16 %v550
    %v4164 = vunpack.c.h.b16 %v550
    %v4165 = vunpack.c.l.b16 %v551
    %v4166 = vunpack.c.h.b16 %v551
    %v4167 = vunpack.c.l.b16 %v552
    %v4168 = vunpack.c.h.b16 %v552
    %v4169 = vunpack.c.l.b16 %v553
    %v4170 = vunpack.c.h.b16 %v553
    %v4171 = vunpack.c.l.b16 %v554
    %v4172 = vunpack.c.h.b16 %v554
    %v4173 = vunpack.c.l.b16 %v555
    %v4174 = vunpack.c.h.b16 %v555
    %v4175 = vunpack.c.l.b16 %v556
    %v4176 = vunpack.c.h.b16 %v556
    %v4177 = vunpack.c.l.b16 %v557
    %v4178 = vunpack.c.h.b16 %v557
    %v4179 = vunpack.c.l.b16 %v558
    %v4180 = vunpack.c.h.b16 %v558
    %v4181 = vunpack.c.l.b16 %v559
    %v4182 = vunpack.c.h.b16 %v559
    %v4183 = vunpack.c.l.b16 %v560
    %v4184 = vunpack.c.h.b16 %v560
    %v4185 = vunpack.c.l.b16 %v561
    %v4186 = vunpack.c.h.b16 %v561
    %v4187 = vunpack.c.l.b16 %v562
    %v4188 = vunpack.c.h.b16 %v562
    %v4189 = vunpack.c.l.b16 %v563
    %v4190 = vunpack.c.h.b16 %v563
    %v4191 = vunpack.c.l.b16 %v564
    %v4192 = vunpack.c.h.b16 %v564
    %v4193 = vunpack.c.l.b16 %v565
    %v4194 = vunpack.c.h.b16 %v565
    %v4195 = vunpack.c.l.b16 %v566
    %v4196 = vunpack.c.h.b16 %v566
    %v4197 = vunpack.c.l.b16 %v567
    %v4198 = vunpack.c.h.b16 %v567
    %v4199 = vunpack.c.l.b16 %v568
    %v4200 = vunpack.c.h.b16 %v568
    %v4201 = vunpack.c.l.b16 %v569
    %v4202 = vunpack.c.h.b16 %v569
    %v4203 = vunpack.c.l.b16 %v570
    %v4204 = vunpack.c.h.b16 %v570
    %v4205 = vunpack.c.l.b16 %v571
    %v4206 = vunpack.c.h.b16 %v571
    %v4207 = vunpack.c.l.b16 %v572
    %v4208 = vunpack.c.h.b16 %v572
    %v4209 = vunpack.c.l.b16 %v573
    %v4210 = vunpack.c.h.b16 %v573
    %v4211 = vunpack.c.l.b16 %v574
    %v4212 = vunpack.c.h.b16 %v574
    %v4213 = vunpack.c.l.b16 %v575
    %v4214 = vunpack.c.h.b16 %v575
    %v4215 = vunpack.c.l.b16 %v576
    %v4216 = vunpack.c.h.b16 %v576
    %v4217 = vunpack.c.l.b16 %v577
    %v4218 = vunpack.c.h.b16 %v577
    %v4219 = vunpack.c.l.b16 %v578
    %v4220 = vunpack.c.h.b16 %v578
    %v4221 = vunpack.c.l.b16 %v579
    %v4222 = vunpack.c.h.b16 %v579
    %v4223 = vunpack.c.l.b16 %v580
    %v4224 = vunpack.c.h.b16 %v580
    %v4225 = vunpack.c.l.b16 %v581
    %v4226 = vunpack.c.h.b16 %v581
    %v4227 = vunpack.c.l.b16 %v582
    %v4228 = vunpack.c.h.b16 %v582
    %v4229 = vunpack.c.l.b16 %v583
    %v4230 = vunpack.c.h.b16 %v583
    %v4231 = vunpack.c.l.b16 %v584
    %v4232 = vunpack.c.h.b16 %v584
    %v4233 = vunpack.c.l.b16 %v585
    %v4234 = vunpack.c.h.b16 %v585
    %v4235 = vunpack.c.l.b16 %v586
    %v4236 = vunpack.c.h.b16 %v586
    %v4237 = vunpack.c.l.b16 %v587
    %v4238 = vunpack.c.h.b16 %v587
    %v4239 = vunpack.c.l.b16 %v588
    %v4240 = vunpack.c.h.b16 %v588
    %v4241 = vunpack.c.l.b16 %v589
    %v4242 = vunpack.c.h.b16 %v589
    %v4243 = vunpack.c.l.b16 %v590
    %v4244 = vunpack.c.h.b16 %v590
    %v4245 = vunpack.c.l.b16 %v591
    %v4246 = vunpack.c.h.b16 %v591
    %v4247 = vunpack.c.l.b16 %v592
    %v4248 = vunpack.c.h.b16 %v592
    %v4249 = vunpack.c.l.b16 %v593
    %v4250 = vunpack.c.h.b16 %v593
    %v4251 = vunpack.c.l.b16 %v594
    %v4252 = vunpack.c.h.b16 %v594
    %v4253 = vunpack.c.l.b16 %v595
    %v4254 = vunpack.c.h.b16 %v595
    %v4255 = vpack.c.b16 %v4003, %v3999
    %v4256 = vpack.c.b16 %v4004, %v4000
    %v4257 = vpack.c.b16 %v4005, %v4001
    %v4258 = vpack.c.b16 %v4006, %v4002
    %v4259 = vpack.c.b16 %v4011, %v4007
    %v4260 = vpack.c.b16 %v4012, %v4008
    %v4261 = vpack.c.b16 %v4013, %v4009
    %v4262 = vpack.c.b16 %v4014, %v4010
    %v4263 = vpack.c.b16 %v4019, %v4015
    %v4264 = vpack.c.b16 %v4020, %v4016
    %v4265 = vpack.c.b16 %v4021, %v4017
    %v4266 = vpack.c.b16 %v4022, %v4018
    %v4267 = vpack.c.b16 %v4027, %v4023
    %v4268 = vpack.c.b16 %v4028, %v4024
    %v4269 = vpack.c.b16 %v4029, %v4025
    %v4270 = vpack.c.b16 %v4030, %v4026
    %v4271 = vpack.c.b16 %v4035, %v4031
    %v4272 = vpack.c.b16 %v4036, %v4032
    %v4273 = vpack.c.b16 %v4037, %v4033
    %v4274 = vpack.c.b16 %v4038, %v4034
    %v4275 = vpack.c.b16 %v4043, %v4039
    %v4276 = vpack.c.b16 %v4044, %v4040
    %v4277 = vpack.c.b16 %v4045, %v4041
    %v4278 = vpack.c.b16 %v4046, %v4042
    %v4279 = vpack.c.b16 %v4051, %v4047
    %v4280 = vpack.c.b16 %v4052, %v4048
    %v4281 = vpack.c.b16 %v4053, %v4049
    %v4282 = vpack.c.b16 %v4054, %v4050
    %v4283 = vpack.c.b16 %v4059, %v4055
    %v4284 = vpack.c.b16 %v4060, %v4056
    %v4285 = vpack.c.b16 %v4061, %v4057
    %v4286 = vpack.c.b16 %v4062, %v4058
    %v4287 = vpack.c.b16 %v4067, %v4063
    %v4288 = vpack.c.b16 %v4068, %v4064
    %v4289 = vpack.c.b16 %v4069, %v4065
    %v4290 = vpack.c.b16 %v4070, %v4066
    %v4291 = vpack.c.b16 %v4075, %v4071
    %v4292 = vpack.c.b16 %v4076, %v4072
    %v4293 = vpack.c.b16 %v4077, %v4073
    %v4294 = vpack.c.b16 %v4078, %v4074
    %v4295 = vpack.c.b16 %v4083, %v4079
    %v4296 = vpack.c.b16 %v4084, %v4080
    %v4297 = vpack.c.b16 %v4085, %v4081
    %v4298 = vpack.c.b16 %v4086, %v4082
    %v4299 = vpack.c.b16 %v4091, %v4087
    %v4300 = vpack.c.b16 %v4092, %v4088
    %v4301 = vpack.c.b16 %v4093, %v4089
    %v4302 = vpack.c.b16 %v4094, %v4090
    %v4303 = vpack.c.b16 %v4099, %v4095
    %v4304 = vpack.c.b16 %v4100, %v4096
    %v4305 = vpack.c.b16 %v4101, %v4097
    %v4306 = vpack.c.b16 %v4102, %v4098
    %v4307 = vpack.c.b16 %v4107, %v4103
    %v4308 = vpack.c.b16 %v4108, %v4104
    %v4309 = vpack.c.b16 %v4109, %v4105
    %v4310 = vpack.c.b16 %v4110, %v4106
    %v4311 = vpack.c.b16 %v4115, %v4111
    %v4312 = vpack.c.b16 %v4116, %v4112
    %v4313 = vpack.c.b16 %v4117, %v4113
    %v4314 = vpack.c.b16 %v4118, %v4114
    %v4315 = vpack.c.b16 %v4123, %v4119
    %v4316 = vpack.c.b16 %v4124, %v4120
    %v4317 = vpack.c.b16 %v4125, %v4121
    %v4318 = vpack.c.b16 %v4126, %v4122
    %v4319 = vpack.c.b16 %v4131, %v4127
    %v4320 = vpack.c.b16 %v4132, %v4128
    %v4321 = vpack.c.b16 %v4133, %v4129
    %v4322 = vpack.c.b16 %v4134, %v4130
    %v4323 = vpack.c.b16 %v4139, %v4135
    %v4324 = vpack.c.b16 %v4140, %v4136
    %v4325 = vpack.c.b16 %v4141, %v4137
    %v4326 = vpack.c.b16 %v4142, %v4138
    %v4327 = vpack.c.b16 %v4147, %v4143
    %v4328 = vpack.c.b16 %v4148, %v4144
    %v4329 = vpack.c.b16 %v4149, %v4145
    %v4330 = vpack.c.b16 %v4150, %v4146
    %v4331 = vpack.c.b16 %v4155, %v4151
    %v4332 = vpack.c.b16 %v4156, %v4152
    %v4333 = vpack.c.b16 %v4157, %v4153
    %v4334 = vpack.c.b16 %v4158, %v4154
    %v4335 = vpack.c.b16 %v4163, %v4159
    %v4336 = vpack.c.b16 %v4164, %v4160
    %v4337 = vpack.c.b16 %v4165, %v4161
    %v4338 = vpack.c.b16 %v4166, %v4162
    %v4339 = vpack.c.b16 %v4171, %v4167
    %v4340 = vpack.c.b16 %v4172, %v4168
    %v4341 = vpack.c.b16 %v4173, %v4169
    %v4342 = vpack.c.b16 %v4174, %v4170
    %v4343 = vpack.c.b16 %v4179, %v4175
    %v4344 = vpack.c.b16 %v4180, %v4176
    %v4345 = vpack.c.b16 %v4181, %v4177
    %v4346 = vpack.c.b16 %v4182, %v4178
    %v4347 = vpack.c.b16 %v4187, %v4183
    %v4348 = vpack.c.b16 %v4188, %v4184
    %v4349 = vpack.c.b16 %v4189, %v4185
    %v4350 = vpack.c.b16 %v4190, %v4186
    %v4351 = vpack.c.b16 %v4195, %v4191
    %v4352 = vpack.c.b16 %v4196, %v4192
    %v4353 = vpack.c.b16 %v4197, %v4193
    %v4354 = vpack.c.b16 %v4198, %v4194
    %v4355 = vpack.c.b16 %v4203, %v4199
    %v4356 = vpack.c.b16 %v4204, %v4200
    %v4357 = vpack.c.b16 %v4205, %v4201
    %v4358 = vpack.c.b16 %v4206, %v4202
    %v4359 = vpack.c.b16 %v4211, %v4207
    %v4360 = vpack.c.b16 %v4212, %v4208
    %v4361 = vpack.c.b16 %v4213, %v4209
    %v4362 = vpack.c.b16 %v4214, %v4210
    %v4363 = vpack.c.b16 %v4219, %v4215
    %v4364 = vpack.c.b16 %v4220, %v4216
    %v4365 = vpack.c.b16 %v4221, %v4217
    %v4366 = vpack.c.b16 %v4222, %v4218
    %v4367 = vpack.c.b16 %v4227, %v4223
    %v4368 = vpack.c.b16 %v4228, %v4224
    %v4369 = vpack.c.b16 %v4229, %v4225
    %v4370 = vpack.c.b16 %v4230, %v4226
    %v4371 = vpack.c.b16 %v4235, %v4231
    %v4372 = vpack.c.b16 %v4236, %v4232
    %v4373 = vpack.c.b16 %v4237, %v4233
    %v4374 = vpack.c.b16 %v4238, %v4234
    %v4375 = vpack.c.b16 %v4243, %v4239
    %v4376 = vpack.c.b16 %v4244, %v4240
    %v4377 = vpack.c.b16 %v4245, %v4241
    %v4378 = vpack.c.b16 %v4246, %v4242
    %v4379 = vpack.c.b16 %v4251, %v4247
    %v4380 = vpack.c.b16 %v4252, %v4248
    %v4381 = vpack.c.b16 %v4253, %v4249
    %v4382 = vpack.c.b16 %v4254, %v4250
    %4511 = vmatprep.subr.bf16.mxu0 %v4256
    %4512 = vmatpush1.bf16.msra.mxu0 %v4255
    %4513 = vmatprep.subr.bf16.mxu0 %v4260
    %4514 = vmatpush1.bf16.msra.mxu0 %v4259
    %4515 = vmatprep.subr.bf16.mxu0 %v4264
    %4516 = vmatpush1.bf16.msra.mxu0 %v4263
    %4517 = vmatprep.subr.bf16.mxu0 %v4268
    %4518 = vmatpush1.bf16.msra.mxu0 %v4267
    %4519 = vmatprep.subr.bf16.mxu0 %v4272
    %4520 = vmatpush1.bf16.msra.mxu0 %v4271
    %4521 = vmatprep.subr.bf16.mxu0 %v4276
    %4522 = vmatpush1.bf16.msra.mxu0 %v4275
    %4523 = vmatprep.subr.bf16.mxu0 %v4280
    %4524 = vmatpush1.bf16.msra.mxu0 %v4279
    %4525 = vmatprep.subr.bf16.mxu0 %v4284
    %4526 = vmatpush1.bf16.msra.mxu0 %v4283
    %4527 = vmatprep.subr.bf16.mxu0 %v4288
    %4528 = vmatpush1.bf16.msra.mxu0 %v4287
    %4529 = vmatprep.subr.bf16.mxu0 %v4292
    %4530 = vmatpush1.bf16.msra.mxu0 %v4291
    %4531 = vmatprep.subr.bf16.mxu0 %v4296
    %4532 = vmatpush1.bf16.msra.mxu0 %v4295
    %4533 = vmatprep.subr.bf16.mxu0 %v4300
    %4534 = vmatpush1.bf16.msra.mxu0 %v4299
    %4535 = vmatprep.subr.bf16.mxu0 %v4304
    %4536 = vmatpush1.bf16.msra.mxu0 %v4303
    %4537 = vmatprep.subr.bf16.mxu0 %v4308
    %4538 = vmatpush1.bf16.msra.mxu0 %v4307
    %4539 = vmatprep.subr.bf16.mxu0 %v4312
    %4540 = vmatpush1.bf16.msra.mxu0 %v4311
    %4541 = vmatprep.subr.bf16.mxu0 %v4316
    %4542 = vmatpush1.bf16.msra.mxu0 %v4315
    %4543 = vmatprep.mubr.bf16.mxu0 %v3852
    %4544 = vmatmul.mubr.bf16.gmra.mrb[0].mxu0 %v3851
    %v4545 = vpop.f32.mrb[0].mxu0
    %v4546 = vadd.f32 %v3858, %v4545
    %v4547 = vpop.f32.mrb[0].mxu0
    %v4548 = vadd.f32 %v3862, %v4547
    %v4549 = vpop.f32.mrb[0].mxu0
    %v4550 = vadd.f32 %v3858, %v4549
    %v4551 = vpop.f32.mrb[0].mxu0
    %v4552 = vadd.f32 %v3862, %v4551
    %4553 = vdwg.mxu0
    %4554 = vmatprep.subr.bf16.mxu0 %v4320
    %4555 = vmatpush1.bf16.msra.mxu0 %v4319
    %4556 = vmatprep.subr.bf16.mxu0 %v4324
    %4557 = vmatpush1.bf16.msra.mxu0 %v4323
    %4558 = vmatprep.subr.bf16.mxu0 %v4328
    %4559 = vmatpush1.bf16.msra.mxu0 %v4327
    %4560 = vmatprep.subr.bf16.mxu0 %v4332
    %4561 = vmatpush1.bf16.msra.mxu0 %v4331
    %4562 = vmatprep.subr.bf16.mxu0 %v4336
    %4563 = vmatpush1.bf16.msra.mxu0 %v4335
    %4564 = vmatprep.subr.bf16.mxu0 %v4340
    %4565 = vmatpush1.bf16.msra.mxu0 %v4339
    %4566 = vmatprep.subr.bf16.mxu0 %v4344
    %4567 = vmatpush1.bf16.msra.mxu0 %v4343
    %4568 = vmatprep.subr.bf16.mxu0 %v4348
    %4569 = vmatpush1.bf16.msra.mxu0 %v4347
    %4570 = vmatprep.subr.bf16.mxu0 %v4352
    %4571 = vmatpush1.bf16.msra.mxu0 %v4351
    %4572 = vmatprep.subr.bf16.mxu0 %v4356
    %4573 = vmatpush1.bf16.msra.mxu0 %v4355
    %4574 = vmatprep.subr.bf16.mxu0 %v4360
    %4575 = vmatpush1.bf16.msra.mxu0 %v4359
    %4576 = vmatprep.subr.bf16.mxu0 %v4364
    %4577 = vmatpush1.bf16.msra.mxu0 %v4363
    %4578 = vmatprep.subr.bf16.mxu0 %v4368
    %4579 = vmatpush1.bf16.msra.mxu0 %v4367
    %4580 = vmatprep.subr.bf16.mxu0 %v4372
    %4581 = vmatpush1.bf16.msra.mxu0 %v4371
    %4582 = vmatprep.subr.bf16.mxu0 %v4376
    %4583 = vmatpush1.bf16.msra.mxu0 %v4375
    %4584 = vmatprep.subr.bf16.mxu0 %v4380
    %4585 = vmatpush1.bf16.msra.mxu0 %v4379
    %4586 = vmatprep.mubr.bf16.mxu0 %v3854
    %4587 = vmatmul.mubr.bf16.gmra.mrb[0].mxu0 %v3853
    %v4588 = vpop.f32.mrb[0].mxu0
    %v4589 = vadd.f32 %v4546, %v4588
    %v4590 = vpop.f32.mrb[0].mxu0
    %v4591 = vadd.f32 %v4548, %v4590
    %v4592 = vpop.f32.mrb[0].mxu0
    %v4593 = vadd.f32 %v4550, %v4592
    %v4594 = vpop.f32.mrb[0].mxu0
    %v4595 = vadd.f32 %v4552, %v4594
    %4596 = vdwg.mxu0
    %4597 = vmatprep.subr.bf16.mxu0 %v4258
    %4598 = vmatpush1.bf16.msra.mxu0 %v4257
    %4599 = vmatprep.subr.bf16.mxu0 %v4262
    %4600 = vmatpush1.bf16.msra.mxu0 %v4261
    %4601 = vmatprep.subr.bf16.mxu0 %v4266
    %4602 = vmatpush1.bf16.msra.mxu0 %v4265
    %4603 = vmatprep.subr.bf16.mxu0 %v4270
    %4604 = vmatpush1.bf16.msra.mxu0 %v4269
    %4605 = vmatprep.subr.bf16.mxu0 %v4274
    %4606 = vmatpush1.bf16.msra.mxu0 %v4273
    %4607 = vmatprep.subr.bf16.mxu0 %v4278
    %4608 = vmatpush1.bf16.msra.mxu0 %v4277
    %4609 = vmatprep.subr.bf16.mxu0 %v4282
    %4610 = vmatpush1.bf16.msra.mxu0 %v4281
    %4611 = vmatprep.subr.bf16.mxu0 %v4286
    %4612 = vmatpush1.bf16.msra.mxu0 %v4285
    %4613 = vmatprep.subr.bf16.mxu0 %v4290
    %4614 = vmatpush1.bf16.msra.mxu0 %v4289
    %4615 = vmatprep.subr.bf16.mxu0 %v4294
    %4616 = vmatpush1.bf16.msra.mxu0 %v4293
    %4617 = vmatprep.subr.bf16.mxu0 %v4298
    %4618 = vmatpush1.bf16.msra.mxu0 %v4297
    %4619 = vmatprep.subr.bf16.mxu0 %v4302
    %4620 = vmatpush1.bf16.msra.mxu0 %v4301
    %4621 = vmatprep.subr.bf16.mxu0 %v4306
    %4622 = vmatpush1.bf16.msra.mxu0 %v4305
    %4623 = vmatprep.subr.bf16.mxu0 %v4310
    %4624 = vmatpush1.bf16.msra.mxu0 %v4309
    %4625 = vmatprep.subr.bf16.mxu0 %v4314
    %4626 = vmatpush1.bf16.msra.mxu0 %v4313
    %4627 = vmatprep.subr.bf16.mxu0 %v4318
    %4628 = vmatpush1.bf16.msra.mxu0 %v4317
    %4629 = vmatprep.mubr.bf16.mxu0 %v3852
    %4630 = vmatmul.mubr.bf16.gmra.mrb[0].mxu0 %v3851
    %v4631 = vpop.f32.mrb[0].mxu0
    %v4632 = vadd.f32 %v3866, %v4631
    %v4633 = vpop.f32.mrb[0].mxu0
    %v4634 = vadd.f32 %v3870, %v4633
    %v4635 = vpop.f32.mrb[0].mxu0
    %v4636 = vadd.f32 %v3866, %v4635
    %v4637 = vpop.f32.mrb[0].mxu0
    %v4638 = vadd.f32 %v3870, %v4637
    %4639 = vdwg.mxu0
    %4640 = vmatprep.subr.bf16.mxu0 %v4322
    %4641 = vmatpush1.bf16.msra.mxu0 %v4321
    %4642 = vmatprep.subr.bf16.mxu0 %v4326
    %4643 = vmatpush1.bf16.msra.mxu0 %v4325
    %4644 = vmatprep.subr.bf16.mxu0 %v4330
    %4645 = vmatpush1.bf16.msra.mxu0 %v4329
    %4646 = vmatprep.subr.bf16.mxu0 %v4334
    %4647 = vmatpush1.bf16.msra.mxu0 %v4333
    %4648 = vmatprep.subr.bf16.mxu0 %v4338
    %4649 = vmatpush1.bf16.msra.mxu0 %v4337
    %4650 = vmatprep.subr.bf16.mxu0 %v4342
    %4651 = vmatpush1.bf16.msra.mxu0 %v4341
    %4652 = vmatprep.subr.bf16.mxu0 %v4346
    %4653 = vmatpush1.bf16.msra.mxu0 %v4345
    %4654 = vmatprep.subr.bf16.mxu0 %v4350
    %4655 = vmatpush1.bf16.msra.mxu0 %v4349
    %4656 = vmatprep.subr.bf16.mxu0 %v4354
    %4657 = vmatpush1.bf16.msra.mxu0 %v4353
    %4658 = vmatprep.subr.bf16.mxu0 %v4358
    %4659 = vmatpush1.bf16.msra.mxu0 %v4357
    %4660 = vmatprep.subr.bf16.mxu0 %v4362
    %4661 = vmatpush1.bf16.msra.mxu0 %v4361
    %4662 = vmatprep.subr.bf16.mxu0 %v4366
    %4663 = vmatpush1.bf16.msra.mxu0 %v4365
    %4664 = vmatprep.subr.bf16.mxu0 %v4370
    %4665 = vmatpush1.bf16.msra.mxu0 %v4369
    %4666 = vmatprep.subr.bf16.mxu0 %v4374
    %4667 = vmatpush1.bf16.msra.mxu0 %v4373
    %4668 = vmatprep.subr.bf16.mxu0 %v4378
    %4669 = vmatpush1.bf16.msra.mxu0 %v4377
    %4670 = vmatprep.subr.bf16.mxu0 %v4382
    %4671 = vmatpush1.bf16.msra.mxu0 %v4381
    %4672 = vmatprep.mubr.bf16.mxu0 %v3854
    %4673 = vmatmul.mubr.bf16.gmra.mrb[0].mxu0 %v3853
    %v4674 = vpop.f32.mrb[0].mxu0
    %v4675 = vadd.f32 %v4632, %v4674
    %v4676 = vpop.f32.mrb[0].mxu0
    %v4677 = vadd.f32 %v4634, %v4676
    %v4678 = vpop.f32.mrb[0].mxu0
    %v4679 = vadd.f32 %v4636, %v4678
    %v4680 = vpop.f32.mrb[0].mxu0
    %v4681 = vadd.f32 %v4638, %v4680
    %4682 = vdwg.mxu0
    %v4683 = vadd.f32 %v2835, %v4589
    %v4684 = vadd.f32 %v2836, %v4591
    %v4685 = vadd.f32 %v2837, %v4675
    %v4686 = vadd.f32 %v2838, %v4677
    %v4687 = vadd.f32 %v2839, %v4593
    %v4688 = vadd.f32 %v2840, %v4595
    %v4689 = vadd.f32 %v2841, %v4679
    %v4690 = vadd.f32 %v2842, %v4681
    %v4691 = vadd.f32 %v4683, %v4684
    %v4692 = vadd.f32 %v4691, %v4685
    %v4693 = vadd.f32 %v4692, %v4686
    %4694 = vadd.xlane.f32.xlu0 %v4693
    %v4695 = vpop.xlane.xlu0 %4694
    %v4696 = vadd.f32 %v4687, %v4688
    %v4697 = vadd.f32 %v4696, %v4689
    %v4698 = vadd.f32 %v4697, %v4690
    %4699 = vadd.xlane.f32.xlu0 %v4698
    %v4700 = vpop.xlane.xlu0 %4699
    %v4701 = vmul.f32 %v4695, %v1004
    %v4702 = vmul.f32 %v4700, %v1004
    %v4703 = vmul.f32 %v4683, %v4683
    %v4704 = vmul.f32 %v4684, %v4684
    %v4705 = vmul.f32 %v4685, %v4685
    %v4706 = vmul.f32 %v4686, %v4686
    %v4707 = vmul.f32 %v4687, %v4687
    %v4708 = vmul.f32 %v4688, %v4688
    %v4709 = vmul.f32 %v4689, %v4689
    %v4710 = vmul.f32 %v4690, %v4690
    %v4711 = vadd.f32 %v4703, %v4704
    %v4712 = vadd.f32 %v4711, %v4705
    %v4713 = vadd.f32 %v4712, %v4706
    %4714 = vadd.xlane.f32.xlu0 %v4713
    %v4715 = vpop.xlane.xlu0 %4714
    %v4716 = vadd.f32 %v4707, %v4708
    %v4717 = vadd.f32 %v4716, %v4709
    %v4718 = vadd.f32 %v4717, %v4710
    %4719 = vadd.xlane.f32.xlu0 %v4718
    %v4720 = vpop.xlane.xlu0 %4719
    %v4721 = vmul.f32 %v4715, %v1004
    %v4722 = vmul.f32 %v4720, %v1004
    %v4723 = vmul.f32 %v4701, %v4701
    %v4724 = vmul.f32 %v4702, %v4702
    %v4725 = vsub.f32 %v4721, %v4723
    %v4726 = vsub.f32 %v4722, %v4724
    %v4727 = vsub.f32 %v4683, %v4701
    %v4728 = vsub.f32 %v4684, %v4701
    %v4729 = vsub.f32 %v4685, %v4701
    %v4730 = vsub.f32 %v4686, %v4701
    %v4731 = vsub.f32 %v4687, %v4702
    %v4732 = vsub.f32 %v4688, %v4702
    %v4733 = vsub.f32 %v4689, %v4702
    %v4734 = vsub.f32 %v4690, %v4702
    %v4735 = vadd.f32 %v4725, 1e-05
    %v4736 = vadd.f32 %v4726, 1e-05
    %v4737 = vrsqrt.pop %v4735
    %v4738 = vrsqrt.pop %v4736
    %v4739 = vmul.f32 %v4727, %v4737
    %v4740 = vmul.f32 %v4728, %v4737
    %v4741 = vmul.f32 %v4729, %v4737
    %v4742 = vmul.f32 %v4730, %v4737
    %v4743 = vmul.f32 %v4731, %v4738
    %v4744 = vmul.f32 %v4732, %v4738
    %v4745 = vmul.f32 %v4733, %v4738
    %v4746 = vmul.f32 %v4734, %v4738
    %v4747 = vlaneseq
    %v4748 = vshrl.u32 %v4747, 7
    %v4749 = vsub.s32 1, %v4748
    %v4750 = vrot.slane %v48, %v4749
    %v4751 = vlaneseq
    %v4752 = vshrl.u32 %v4751, 7
    %v4753 = vsub.s32 1, %v4752
    %v4754 = vrot.slane %v49, %v4753
    %v4755 = vlaneseq
    %v4756 = vshrl.u32 %v4755, 7
    %v4757 = vsub.s32 1, %v4756
    %v4758 = vrot.slane %v50, %v4757
    %v4759 = vlaneseq
    %v4760 = vshrl.u32 %v4759, 7
    %v4761 = vsub.s32 1, %v4760
    %v4762 = vrot.slane %v51, %v4761
    %v4763 = vmul.f32 %v4739, %v4750
    %v4764 = vmul.f32 %v4740, %v4754
    %v4765 = vmul.f32 %v4741, %v4758
    %v4766 = vmul.f32 %v4742, %v4762
    %v4767 = vmul.f32 %v4743, %v4750
    %v4768 = vmul.f32 %v4744, %v4754
    %v4769 = vmul.f32 %v4745, %v4758
    %v4770 = vmul.f32 %v4746, %v4762
    %v4771 = vlaneseq
    %v4772 = vshrl.u32 %v4771, 7
    %v4773 = vsub.s32 2, %v4772
    %v4774 = vrot.slane %v48, %v4773
    %v4775 = vlaneseq
    %v4776 = vshrl.u32 %v4775, 7
    %v4777 = vsub.s32 2, %v4776
    %v4778 = vrot.slane %v49, %v4777
    %v4779 = vlaneseq
    %v4780 = vshrl.u32 %v4779, 7
    %v4781 = vsub.s32 2, %v4780
    %v4782 = vrot.slane %v50, %v4781
    %v4783 = vlaneseq
    %v4784 = vshrl.u32 %v4783, 7
    %v4785 = vsub.s32 2, %v4784
    %v4786 = vrot.slane %v51, %v4785
    %v4787 = vadd.f32 %v4763, %v4774
    %v4788 = vadd.f32 %v4764, %v4778
    %v4789 = vadd.f32 %v4765, %v4782
    %v4790 = vadd.f32 %v4766, %v4786
    %v4791 = vadd.f32 %v4767, %v4774
    %v4792 = vadd.f32 %v4768, %v4778
    %v4793 = vadd.f32 %v4769, %v4782
    %v4794 = vadd.f32 %v4770, %v4786
    %v4795 = vpack.c.bf16 %v4791, %v4787
    %v4796 = vpack.c.bf16 %v4792, %v4788
    %v4797 = vpack.c.bf16 %v4793, %v4789
    %v4798 = vpack.c.bf16 %v4794, %v4790
    %v4799 = vlaneseq
    %v4800 = vshrl.u32 %v4799, 7
    %v4801 = vsub.s32 3, %v4800
    %v4802 = vrot.slane %v48, %v4801
    %v4803 = vlaneseq
    %v4804 = vshrl.u32 %v4803, 7
    %v4805 = vsub.s32 3, %v4804
    %v4806 = vrot.slane %v49, %v4805
    %v4807 = vlaneseq
    %v4808 = vshrl.u32 %v4807, 7
    %v4809 = vsub.s32 3, %v4808
    %v4810 = vrot.slane %v50, %v4809
    %v4811 = vlaneseq
    %v4812 = vshrl.u32 %v4811, 7
    %v4813 = vsub.s32 3, %v4812
    %v4814 = vrot.slane %v51, %v4813
    %v4943 = vunpack.c.l.b16 %v596
    %v4944 = vunpack.c.h.b16 %v596
    %v4945 = vunpack.c.l.b16 %v597
    %v4946 = vunpack.c.h.b16 %v597
    %v4947 = vunpack.c.l.b16 %v598
    %v4948 = vunpack.c.h.b16 %v598
    %v4949 = vunpack.c.l.b16 %v599
    %v4950 = vunpack.c.h.b16 %v599
    %v4951 = vunpack.c.l.b16 %v600
    %v4952 = vunpack.c.h.b16 %v600
    %v4953 = vunpack.c.l.b16 %v601
    %v4954 = vunpack.c.h.b16 %v601
    %v4955 = vunpack.c.l.b16 %v602
    %v4956 = vunpack.c.h.b16 %v602
    %v4957 = vunpack.c.l.b16 %v603
    %v4958 = vunpack.c.h.b16 %v603
    %v4959 = vunpack.c.l.b16 %v604
    %v4960 = vunpack.c.h.b16 %v604
    %v4961 = vunpack.c.l.b16 %v605
    %v4962 = vunpack.c.h.b16 %v605
    %v4963 = vunpack.c.l.b16 %v606
    %v4964 = vunpack.c.h.b16 %v606
    %v4965 = vunpack.c.l.b16 %v607
    %v4966 = vunpack.c.h.b16 %v607
    %v4967 = vunpack.c.l.b16 %v608
    %v4968 = vunpack.c.h.b16 %v608
    %v4969 = vunpack.c.l.b16 %v609
    %v4970 = vunpack.c.h.b16 %v609
    %v4971 = vunpack.c.l.b16 %v610
    %v4972 = vunpack.c.h.b16 %v610
    %v4973 = vunpack.c.l.b16 %v611
    %v4974 = vunpack.c.h.b16 %v611
    %v4975 = vunpack.c.l.b16 %v612
    %v4976 = vunpack.c.h.b16 %v612
    %v4977 = vunpack.c.l.b16 %v613
    %v4978 = vunpack.c.h.b16 %v613
    %v4979 = vunpack.c.l.b16 %v614
    %v4980 = vunpack.c.h.b16 %v614
    %v4981 = vunpack.c.l.b16 %v615
    %v4982 = vunpack.c.h.b16 %v615
    %v4983 = vunpack.c.l.b16 %v616
    %v4984 = vunpack.c.h.b16 %v616
    %v4985 = vunpack.c.l.b16 %v617
    %v4986 = vunpack.c.h.b16 %v617
    %v4987 = vunpack.c.l.b16 %v618
    %v4988 = vunpack.c.h.b16 %v618
    %v4989 = vunpack.c.l.b16 %v619
    %v4990 = vunpack.c.h.b16 %v619
    %v4991 = vunpack.c.l.b16 %v620
    %v4992 = vunpack.c.h.b16 %v620
    %v4993 = vunpack.c.l.b16 %v621
    %v4994 = vunpack.c.h.b16 %v621
    %v4995 = vunpack.c.l.b16 %v622
    %v4996 = vunpack.c.h.b16 %v622
    %v4997 = vunpack.c.l.b16 %v623
    %v4998 = vunpack.c.h.b16 %v623
    %v4999 = vunpack.c.l.b16 %v624
    %v5000 = vunpack.c.h.b16 %v624
    %v5001 = vunpack.c.l.b16 %v625
    %v5002 = vunpack.c.h.b16 %v625
    %v5003 = vunpack.c.l.b16 %v626
    %v5004 = vunpack.c.h.b16 %v626
    %v5005 = vunpack.c.l.b16 %v627
    %v5006 = vunpack.c.h.b16 %v627
    %v5007 = vunpack.c.l.b16 %v628
    %v5008 = vunpack.c.h.b16 %v628
    %v5009 = vunpack.c.l.b16 %v629
    %v5010 = vunpack.c.h.b16 %v629
    %v5011 = vunpack.c.l.b16 %v630
    %v5012 = vunpack.c.h.b16 %v630
    %v5013 = vunpack.c.l.b16 %v631
    %v5014 = vunpack.c.h.b16 %v631
    %v5015 = vunpack.c.l.b16 %v632
    %v5016 = vunpack.c.h.b16 %v632
    %v5017 = vunpack.c.l.b16 %v633
    %v5018 = vunpack.c.h.b16 %v633
    %v5019 = vunpack.c.l.b16 %v634
    %v5020 = vunpack.c.h.b16 %v634
    %v5021 = vunpack.c.l.b16 %v635
    %v5022 = vunpack.c.h.b16 %v635
    %v5023 = vunpack.c.l.b16 %v636
    %v5024 = vunpack.c.h.b16 %v636
    %v5025 = vunpack.c.l.b16 %v637
    %v5026 = vunpack.c.h.b16 %v637
    %v5027 = vunpack.c.l.b16 %v638
    %v5028 = vunpack.c.h.b16 %v638
    %v5029 = vunpack.c.l.b16 %v639
    %v5030 = vunpack.c.h.b16 %v639
    %v5031 = vunpack.c.l.b16 %v640
    %v5032 = vunpack.c.h.b16 %v640
    %v5033 = vunpack.c.l.b16 %v641
    %v5034 = vunpack.c.h.b16 %v641
    %v5035 = vunpack.c.l.b16 %v642
    %v5036 = vunpack.c.h.b16 %v642
    %v5037 = vunpack.c.l.b16 %v643
    %v5038 = vunpack.c.h.b16 %v643
    %v5039 = vunpack.c.l.b16 %v644
    %v5040 = vunpack.c.h.b16 %v644
    %v5041 = vunpack.c.l.b16 %v645
    %v5042 = vunpack.c.h.b16 %v645
    %v5043 = vunpack.c.l.b16 %v646
    %v5044 = vunpack.c.h.b16 %v646
    %v5045 = vunpack.c.l.b16 %v647
    %v5046 = vunpack.c.h.b16 %v647
    %v5047 = vunpack.c.l.b16 %v648
    %v5048 = vunpack.c.h.b16 %v648
    %v5049 = vunpack.c.l.b16 %v649
    %v5050 = vunpack.c.h.b16 %v649
    %v5051 = vunpack.c.l.b16 %v650
    %v5052 = vunpack.c.h.b16 %v650
    %v5053 = vunpack.c.l.b16 %v651
    %v5054 = vunpack.c.h.b16 %v651
    %v5055 = vunpack.c.l.b16 %v652
    %v5056 = vunpack.c.h.b16 %v652
    %v5057 = vunpack.c.l.b16 %v653
    %v5058 = vunpack.c.h.b16 %v653
    %v5059 = vunpack.c.l.b16 %v654
    %v5060 = vunpack.c.h.b16 %v654
    %v5061 = vunpack.c.l.b16 %v655
    %v5062 = vunpack.c.h.b16 %v655
    %v5063 = vunpack.c.l.b16 %v656
    %v5064 = vunpack.c.h.b16 %v656
    %v5065 = vunpack.c.l.b16 %v657
    %v5066 = vunpack.c.h.b16 %v657
    %v5067 = vunpack.c.l.b16 %v658
    %v5068 = vunpack.c.h.b16 %v658
    %v5069 = vunpack.c.l.b16 %v659
    %v5070 = vunpack.c.h.b16 %v659
    %v5071 = vunpack.c.l.b16 %v660
    %v5072 = vunpack.c.h.b16 %v660
    %v5073 = vunpack.c.l.b16 %v661
    %v5074 = vunpack.c.h.b16 %v661
    %v5075 = vunpack.c.l.b16 %v662
    %v5076 = vunpack.c.h.b16 %v662
    %v5077 = vunpack.c.l.b16 %v663
    %v5078 = vunpack.c.h.b16 %v663
    %v5079 = vunpack.c.l.b16 %v664
    %v5080 = vunpack.c.h.b16 %v664
    %v5081 = vunpack.c.l.b16 %v665
    %v5082 = vunpack.c.h.b16 %v665
    %v5083 = vunpack.c.l.b16 %v666
    %v5084 = vunpack.c.h.b16 %v666
    %v5085 = vunpack.c.l.b16 %v667
    %v5086 = vunpack.c.h.b16 %v667
    %v5087 = vunpack.c.l.b16 %v668
    %v5088 = vunpack.c.h.b16 %v668
    %v5089 = vunpack.c.l.b16 %v669
    %v5090 = vunpack.c.h.b16 %v669
    %v5091 = vunpack.c.l.b16 %v670
    %v5092 = vunpack.c.h.b16 %v670
    %v5093 = vunpack.c.l.b16 %v671
    %v5094 = vunpack.c.h.b16 %v671
    %v5095 = vunpack.c.l.b16 %v672
    %v5096 = vunpack.c.h.b16 %v672
    %v5097 = vunpack.c.l.b16 %v673
    %v5098 = vunpack.c.h.b16 %v673
    %v5099 = vunpack.c.l.b16 %v674
    %v5100 = vunpack.c.h.b16 %v674
    %v5101 = vunpack.c.l.b16 %v675
    %v5102 = vunpack.c.h.b16 %v675
    %v5103 = vunpack.c.l.b16 %v676
    %v5104 = vunpack.c.h.b16 %v676
    %v5105 = vunpack.c.l.b16 %v677
    %v5106 = vunpack.c.h.b16 %v677
    %v5107 = vunpack.c.l.b16 %v678
    %v5108 = vunpack.c.h.b16 %v678
    %v5109 = vunpack.c.l.b16 %v679
    %v5110 = vunpack.c.h.b16 %v679
    %v5111 = vunpack.c.l.b16 %v680
    %v5112 = vunpack.c.h.b16 %v680
    %v5113 = vunpack.c.l.b16 %v681
    %v5114 = vunpack.c.h.b16 %v681
    %v5115 = vunpack.c.l.b16 %v682
    %v5116 = vunpack.c.h.b16 %v682
    %v5117 = vunpack.c.l.b16 %v683
    %v5118 = vunpack.c.h.b16 %v683
    %v5119 = vunpack.c.l.b16 %v684
    %v5120 = vunpack.c.h.b16 %v684
    %v5121 = vunpack.c.l.b16 %v685
    %v5122 = vunpack.c.h.b16 %v685
    %v5123 = vunpack.c.l.b16 %v686
    %v5124 = vunpack.c.h.b16 %v686
    %v5125 = vunpack.c.l.b16 %v687
    %v5126 = vunpack.c.h.b16 %v687
    %v5127 = vunpack.c.l.b16 %v688
    %v5128 = vunpack.c.h.b16 %v688
    %v5129 = vunpack.c.l.b16 %v689
    %v5130 = vunpack.c.h.b16 %v689
    %v5131 = vunpack.c.l.b16 %v690
    %v5132 = vunpack.c.h.b16 %v690
    %v5133 = vunpack.c.l.b16 %v691
    %v5134 = vunpack.c.h.b16 %v691
    %v5135 = vunpack.c.l.b16 %v692
    %v5136 = vunpack.c.h.b16 %v692
    %v5137 = vunpack.c.l.b16 %v693
    %v5138 = vunpack.c.h.b16 %v693
    %v5139 = vunpack.c.l.b16 %v694
    %v5140 = vunpack.c.h.b16 %v694
    %v5141 = vunpack.c.l.b16 %v695
    %v5142 = vunpack.c.h.b16 %v695
    %v5143 = vunpack.c.l.b16 %v696
    %v5144 = vunpack.c.h.b16 %v696
    %v5145 = vunpack.c.l.b16 %v697
    %v5146 = vunpack.c.h.b16 %v697
    %v5147 = vunpack.c.l.b16 %v698
    %v5148 = vunpack.c.h.b16 %v698
    %v5149 = vunpack.c.l.b16 %v699
    %v5150 = vunpack.c.h.b16 %v699
    %v5151 = vunpack.c.l.b16 %v700
    %v5152 = vunpack.c.h.b16 %v700
    %v5153 = vunpack.c.l.b16 %v701
    %v5154 = vunpack.c.h.b16 %v701
    %v5155 = vunpack.c.l.b16 %v702
    %v5156 = vunpack.c.h.b16 %v702
    %v5157 = vunpack.c.l.b16 %v703
    %v5158 = vunpack.c.h.b16 %v703
    %v5159 = vunpack.c.l.b16 %v704
    %v5160 = vunpack.c.h.b16 %v704
    %v5161 = vunpack.c.l.b16 %v705
    %v5162 = vunpack.c.h.b16 %v705
    %v5163 = vunpack.c.l.b16 %v706
    %v5164 = vunpack.c.h.b16 %v706
    %v5165 = vunpack.c.l.b16 %v707
    %v5166 = vunpack.c.h.b16 %v707
    %v5167 = vunpack.c.l.b16 %v708
    %v5168 = vunpack.c.h.b16 %v708
    %v5169 = vunpack.c.l.b16 %v709
    %v5170 = vunpack.c.h.b16 %v709
    %v5171 = vunpack.c.l.b16 %v710
    %v5172 = vunpack.c.h.b16 %v710
    %v5173 = vunpack.c.l.b16 %v711
    %v5174 = vunpack.c.h.b16 %v711
    %v5175 = vunpack.c.l.b16 %v712
    %v5176 = vunpack.c.h.b16 %v712
    %v5177 = vunpack.c.l.b16 %v713
    %v5178 = vunpack.c.h.b16 %v713
    %v5179 = vunpack.c.l.b16 %v714
    %v5180 = vunpack.c.h.b16 %v714
    %v5181 = vunpack.c.l.b16 %v715
    %v5182 = vunpack.c.h.b16 %v715
    %v5183 = vunpack.c.l.b16 %v716
    %v5184 = vunpack.c.h.b16 %v716
    %v5185 = vunpack.c.l.b16 %v717
    %v5186 = vunpack.c.h.b16 %v717
    %v5187 = vunpack.c.l.b16 %v718
    %v5188 = vunpack.c.h.b16 %v718
    %v5189 = vunpack.c.l.b16 %v719
    %v5190 = vunpack.c.h.b16 %v719
    %v5191 = vunpack.c.l.b16 %v720
    %v5192 = vunpack.c.h.b16 %v720
    %v5193 = vunpack.c.l.b16 %v721
    %v5194 = vunpack.c.h.b16 %v721
    %v5195 = vunpack.c.l.b16 %v722
    %v5196 = vunpack.c.h.b16 %v722
    %v5197 = vunpack.c.l.b16 %v723
    %v5198 = vunpack.c.h.b16 %v723
    %v5199 = vpack.c.b16 %v4947, %v4943
    %v5200 = vpack.c.b16 %v4948, %v4944
    %v5201 = vpack.c.b16 %v4949, %v4945
    %v5202 = vpack.c.b16 %v4950, %v4946
    %v5203 = vpack.c.b16 %v4955, %v4951
    %v5204 = vpack.c.b16 %v4956, %v4952
    %v5205 = vpack.c.b16 %v4957, %v4953
    %v5206 = vpack.c.b16 %v4958, %v4954
    %v5207 = vpack.c.b16 %v4963, %v4959
    %v5208 = vpack.c.b16 %v4964, %v4960
    %v5209 = vpack.c.b16 %v4965, %v4961
    %v5210 = vpack.c.b16 %v4966, %v4962
    %v5211 = vpack.c.b16 %v4971, %v4967
    %v5212 = vpack.c.b16 %v4972, %v4968
    %v5213 = vpack.c.b16 %v4973, %v4969
    %v5214 = vpack.c.b16 %v4974, %v4970
    %v5215 = vpack.c.b16 %v4979, %v4975
    %v5216 = vpack.c.b16 %v4980, %v4976
    %v5217 = vpack.c.b16 %v4981, %v4977
    %v5218 = vpack.c.b16 %v4982, %v4978
    %v5219 = vpack.c.b16 %v4987, %v4983
    %v5220 = vpack.c.b16 %v4988, %v4984
    %v5221 = vpack.c.b16 %v4989, %v4985
    %v5222 = vpack.c.b16 %v4990, %v4986
    %v5223 = vpack.c.b16 %v4995, %v4991
    %v5224 = vpack.c.b16 %v4996, %v4992
    %v5225 = vpack.c.b16 %v4997, %v4993
    %v5226 = vpack.c.b16 %v4998, %v4994
    %v5227 = vpack.c.b16 %v5003, %v4999
    %v5228 = vpack.c.b16 %v5004, %v5000
    %v5229 = vpack.c.b16 %v5005, %v5001
    %v5230 = vpack.c.b16 %v5006, %v5002
    %v5231 = vpack.c.b16 %v5011, %v5007
    %v5232 = vpack.c.b16 %v5012, %v5008
    %v5233 = vpack.c.b16 %v5013, %v5009
    %v5234 = vpack.c.b16 %v5014, %v5010
    %v5235 = vpack.c.b16 %v5019, %v5015
    %v5236 = vpack.c.b16 %v5020, %v5016
    %v5237 = vpack.c.b16 %v5021, %v5017
    %v5238 = vpack.c.b16 %v5022, %v5018
    %v5239 = vpack.c.b16 %v5027, %v5023
    %v5240 = vpack.c.b16 %v5028, %v5024
    %v5241 = vpack.c.b16 %v5029, %v5025
    %v5242 = vpack.c.b16 %v5030, %v5026
    %v5243 = vpack.c.b16 %v5035, %v5031
    %v5244 = vpack.c.b16 %v5036, %v5032
    %v5245 = vpack.c.b16 %v5037, %v5033
    %v5246 = vpack.c.b16 %v5038, %v5034
    %v5247 = vpack.c.b16 %v5043, %v5039
    %v5248 = vpack.c.b16 %v5044, %v5040
    %v5249 = vpack.c.b16 %v5045, %v5041
    %v5250 = vpack.c.b16 %v5046, %v5042
    %v5251 = vpack.c.b16 %v5051, %v5047
    %v5252 = vpack.c.b16 %v5052, %v5048
    %v5253 = vpack.c.b16 %v5053, %v5049
    %v5254 = vpack.c.b16 %v5054, %v5050
    %v5255 = vpack.c.b16 %v5059, %v5055
    %v5256 = vpack.c.b16 %v5060, %v5056
    %v5257 = vpack.c.b16 %v5061, %v5057
    %v5258 = vpack.c.b16 %v5062, %v5058
    %v5259 = vpack.c.b16 %v5067, %v5063
    %v5260 = vpack.c.b16 %v5068, %v5064
    %v5261 = vpack.c.b16 %v5069, %v5065
    %v5262 = vpack.c.b16 %v5070, %v5066
    %v5263 = vpack.c.b16 %v5075, %v5071
    %v5264 = vpack.c.b16 %v5076, %v5072
    %v5265 = vpack.c.b16 %v5077, %v5073
    %v5266 = vpack.c.b16 %v5078, %v5074
    %v5267 = vpack.c.b16 %v5083, %v5079
    %v5268 = vpack.c.b16 %v5084, %v5080
    %v5269 = vpack.c.b16 %v5085, %v5081
    %v5270 = vpack.c.b16 %v5086, %v5082
    %v5271 = vpack.c.b16 %v5091, %v5087
    %v5272 = vpack.c.b16 %v5092, %v5088
    %v5273 = vpack.c.b16 %v5093, %v5089
    %v5274 = vpack.c.b16 %v5094, %v5090
    %v5275 = vpack.c.b16 %v5099, %v5095
    %v5276 = vpack.c.b16 %v5100, %v5096
    %v5277 = vpack.c.b16 %v5101, %v5097
    %v5278 = vpack.c.b16 %v5102, %v5098
    %v5279 = vpack.c.b16 %v5107, %v5103
    %v5280 = vpack.c.b16 %v5108, %v5104
    %v5281 = vpack.c.b16 %v5109, %v5105
    %v5282 = vpack.c.b16 %v5110, %v5106
    %v5283 = vpack.c.b16 %v5115, %v5111
    %v5284 = vpack.c.b16 %v5116, %v5112
    %v5285 = vpack.c.b16 %v5117, %v5113
    %v5286 = vpack.c.b16 %v5118, %v5114
    %v5287 = vpack.c.b16 %v5123, %v5119
    %v5288 = vpack.c.b16 %v5124, %v5120
    %v5289 = vpack.c.b16 %v5125, %v5121
    %v5290 = vpack.c.b16 %v5126, %v5122
    %v5291 = vpack.c.b16 %v5131, %v5127
    %v5292 = vpack.c.b16 %v5132, %v5128
    %v5293 = vpack.c.b16 %v5133, %v5129
    %v5294 = vpack.c.b16 %v5134, %v5130
    %v5295 = vpack.c.b16 %v5139, %v5135
    %v5296 = vpack.c.b16 %v5140, %v5136
    %v5297 = vpack.c.b16 %v5141, %v5137
    %v5298 = vpack.c.b16 %v5142, %v5138
    %v5299 = vpack.c.b16 %v5147, %v5143
    %v5300 = vpack.c.b16 %v5148, %v5144
    %v5301 = vpack.c.b16 %v5149, %v5145
    %v5302 = vpack.c.b16 %v5150, %v5146
    %v5303 = vpack.c.b16 %v5155, %v5151
    %v5304 = vpack.c.b16 %v5156, %v5152
    %v5305 = vpack.c.b16 %v5157, %v5153
    %v5306 = vpack.c.b16 %v5158, %v5154
    %v5307 = vpack.c.b16 %v5163, %v5159
    %v5308 = vpack.c.b16 %v5164, %v5160
    %v5309 = vpack.c.b16 %v5165, %v5161
    %v5310 = vpack.c.b16 %v5166, %v5162
    %v5311 = vpack.c.b16 %v5171, %v5167
    %v5312 = vpack.c.b16 %v5172, %v5168
    %v5313 = vpack.c.b16 %v5173, %v5169
    %v5314 = vpack.c.b16 %v5174, %v5170
    %v5315 = vpack.c.b16 %v5179, %v5175
    %v5316 = vpack.c.b16 %v5180, %v5176
    %v5317 = vpack.c.b16 %v5181, %v5177
    %v5318 = vpack.c.b16 %v5182, %v5178
    %v5319 = vpack.c.b16 %v5187, %v5183
    %v5320 = vpack.c.b16 %v5188, %v5184
    %v5321 = vpack.c.b16 %v5189, %v5185
    %v5322 = vpack.c.b16 %v5190, %v5186
    %v5323 = vpack.c.b16 %v5195, %v5191
    %v5324 = vpack.c.b16 %v5196, %v5192
    %v5325 = vpack.c.b16 %v5197, %v5193
    %v5326 = vpack.c.b16 %v5198, %v5194
    %5455 = vmatprep.subr.bf16.mxu0 %v5200
    %5456 = vmatpush1.bf16.msra.mxu0 %v5199
    %5457 = vmatprep.subr.bf16.mxu0 %v5204
    %5458 = vmatpush1.bf16.msra.mxu0 %v5203
    %5459 = vmatprep.subr.bf16.mxu0 %v5208
    %5460 = vmatpush1.bf16.msra.mxu0 %v5207
    %5461 = vmatprep.subr.bf16.mxu0 %v5212
    %5462 = vmatpush1.bf16.msra.mxu0 %v5211
    %5463 = vmatprep.subr.bf16.mxu0 %v5216
    %5464 = vmatpush1.bf16.msra.mxu0 %v5215
    %5465 = vmatprep.subr.bf16.mxu0 %v5220
    %5466 = vmatpush1.bf16.msra.mxu0 %v5219
    %5467 = vmatprep.subr.bf16.mxu0 %v5224
    %5468 = vmatpush1.bf16.msra.mxu0 %v5223
    %5469 = vmatprep.subr.bf16.mxu0 %v5228
    %5470 = vmatpush1.bf16.msra.mxu0 %v5227
    %5471 = vmatprep.subr.bf16.mxu0 %v5232
    %5472 = vmatpush1.bf16.msra.mxu0 %v5231
    %5473 = vmatprep.subr.bf16.mxu0 %v5236
    %5474 = vmatpush1.bf16.msra.mxu0 %v5235
    %5475 = vmatprep.subr.bf16.mxu0 %v5240
    %5476 = vmatpush1.bf16.msra.mxu0 %v5239
    %5477 = vmatprep.subr.bf16.mxu0 %v5244
    %5478 = vmatpush1.bf16.msra.mxu0 %v5243
    %5479 = vmatprep.subr.bf16.mxu0 %v5248
    %5480 = vmatpush1.bf16.msra.mxu0 %v5247
    %5481 = vmatprep.subr.bf16.mxu0 %v5252
    %5482 = vmatpush1.bf16.msra.mxu0 %v5251
    %5483 = vmatprep.subr.bf16.mxu0 %v5256
    %5484 = vmatpush1.bf16.msra.mxu0 %v5255
    %5485 = vmatprep.subr.bf16.mxu0 %v5260
    %5486 = vmatpush1.bf16.msra.mxu0 %v5259
    %5487 = vmatprep.mubr.bf16.mxu0 %v4796
    %5488 = vmatmul.mubr.bf16.gmra.mrb[0].mxu0 %v4795
    %v5489 = vpop.f32.mrb[0].mxu0
    %v5490 = vadd.f32 %v4802, %v5489
    %v5491 = vpop.f32.mrb[0].mxu0
    %v5492 = vadd.f32 %v4806, %v5491
    %v5493 = vpop.f32.mrb[0].mxu0
    %v5494 = vadd.f32 %v4802, %v5493
    %v5495 = vpop.f32.mrb[0].mxu0
    %v5496 = vadd.f32 %v4806, %v5495
    %5497 = vdwg.mxu0
    %5498 = vmatprep.subr.bf16.mxu0 %v5264
    %5499 = vmatpush1.bf16.msra.mxu0 %v5263
    %5500 = vmatprep.subr.bf16.mxu0 %v5268
    %5501 = vmatpush1.bf16.msra.mxu0 %v5267
    %5502 = vmatprep.subr.bf16.mxu0 %v5272
    %5503 = vmatpush1.bf16.msra.mxu0 %v5271
    %5504 = vmatprep.subr.bf16.mxu0 %v5276
    %5505 = vmatpush1.bf16.msra.mxu0 %v5275
    %5506 = vmatprep.subr.bf16.mxu0 %v5280
    %5507 = vmatpush1.bf16.msra.mxu0 %v5279
    %5508 = vmatprep.subr.bf16.mxu0 %v5284
    %5509 = vmatpush1.bf16.msra.mxu0 %v5283
    %5510 = vmatprep.subr.bf16.mxu0 %v5288
    %5511 = vmatpush1.bf16.msra.mxu0 %v5287
    %5512 = vmatprep.subr.bf16.mxu0 %v5292
    %5513 = vmatpush1.bf16.msra.mxu0 %v5291
    %5514 = vmatprep.subr.bf16.mxu0 %v5296
    %5515 = vmatpush1.bf16.msra.mxu0 %v5295
    %5516 = vmatprep.subr.bf16.mxu0 %v5300
    %5517 = vmatpush1.bf16.msra.mxu0 %v5299
    %5518 = vmatprep.subr.bf16.mxu0 %v5304
    %5519 = vmatpush1.bf16.msra.mxu0 %v5303
    %5520 = vmatprep.subr.bf16.mxu0 %v5308
    %5521 = vmatpush1.bf16.msra.mxu0 %v5307
    %5522 = vmatprep.subr.bf16.mxu0 %v5312
    %5523 = vmatpush1.bf16.msra.mxu0 %v5311
    %5524 = vmatprep.subr.bf16.mxu0 %v5316
    %5525 = vmatpush1.bf16.msra.mxu0 %v5315
    %5526 = vmatprep.subr.bf16.mxu0 %v5320
    %5527 = vmatpush1.bf16.msra.mxu0 %v5319
    %5528 = vmatprep.subr.bf16.mxu0 %v5324
    %5529 = vmatpush1.bf16.msra.mxu0 %v5323
    %5530 = vmatprep.mubr.bf16.mxu0 %v4798
    %5531 = vmatmul.mubr.bf16.gmra.mrb[0].mxu0 %v4797
    %v5532 = vpop.f32.mrb[0].mxu0
    %v5533 = vadd.f32 %v5490, %v5532
    %v5534 = vpop.f32.mrb[0].mxu0
    %v5535 = vadd.f32 %v5492, %v5534
    %v5536 = vpop.f32.mrb[0].mxu0
    %v5537 = vadd.f32 %v5494, %v5536
    %v5538 = vpop.f32.mrb[0].mxu0
    %v5539 = vadd.f32 %v5496, %v5538
    %5540 = vdwg.mxu0
    %5541 = vmatprep.subr.bf16.mxu0 %v5202
    %5542 = vmatpush1.bf16.msra.mxu0 %v5201
    %5543 = vmatprep.subr.bf16.mxu0 %v5206
    %5544 = vmatpush1.bf16.msra.mxu0 %v5205
    %5545 = vmatprep.subr.bf16.mxu0 %v5210
    %5546 = vmatpush1.bf16.msra.mxu0 %v5209
    %5547 = vmatprep.subr.bf16.mxu0 %v5214
    %5548 = vmatpush1.bf16.msra.mxu0 %v5213
    %5549 = vmatprep.subr.bf16.mxu0 %v5218
    %5550 = vmatpush1.bf16.msra.mxu0 %v5217
    %5551 = vmatprep.subr.bf16.mxu0 %v5222
    %5552 = vmatpush1.bf16.msra.mxu0 %v5221
    %5553 = vmatprep.subr.bf16.mxu0 %v5226
    %5554 = vmatpush1.bf16.msra.mxu0 %v5225
    %5555 = vmatprep.subr.bf16.mxu0 %v5230
    %5556 = vmatpush1.bf16.msra.mxu0 %v5229
    %5557 = vmatprep.subr.bf16.mxu0 %v5234
    %5558 = vmatpush1.bf16.msra.mxu0 %v5233
    %5559 = vmatprep.subr.bf16.mxu0 %v5238
    %5560 = vmatpush1.bf16.msra.mxu0 %v5237
    %5561 = vmatprep.subr.bf16.mxu0 %v5242
    %5562 = vmatpush1.bf16.msra.mxu0 %v5241
    %5563 = vmatprep.subr.bf16.mxu0 %v5246
    %5564 = vmatpush1.bf16.msra.mxu0 %v5245
    %5565 = vmatprep.subr.bf16.mxu0 %v5250
    %5566 = vmatpush1.bf16.msra.mxu0 %v5249
    %5567 = vmatprep.subr.bf16.mxu0 %v5254
    %5568 = vmatpush1.bf16.msra.mxu0 %v5253
    %5569 = vmatprep.subr.bf16.mxu0 %v5258
    %5570 = vmatpush1.bf16.msra.mxu0 %v5257
    %5571 = vmatprep.subr.bf16.mxu0 %v5262
    %5572 = vmatpush1.bf16.msra.mxu0 %v5261
    %5573 = vmatprep.mubr.bf16.mxu0 %v4796
    %5574 = vmatmul.mubr.bf16.gmra.mrb[0].mxu0 %v4795
    %v5575 = vpop.f32.mrb[0].mxu0
    %v5576 = vadd.f32 %v4810, %v5575
    %v5577 = vpop.f32.mrb[0].mxu0
    %v5578 = vadd.f32 %v4814, %v5577
    %v5579 = vpop.f32.mrb[0].mxu0
    %v5580 = vadd.f32 %v4810, %v5579
    %v5581 = vpop.f32.mrb[0].mxu0
    %v5582 = vadd.f32 %v4814, %v5581
    %5583 = vdwg.mxu0
    %5584 = vmatprep.subr.bf16.mxu0 %v5266
    %5585 = vmatpush1.bf16.msra.mxu0 %v5265
    %5586 = vmatprep.subr.bf16.mxu0 %v5270
    %5587 = vmatpush1.bf16.msra.mxu0 %v5269
    %5588 = vmatprep.subr.bf16.mxu0 %v5274
    %5589 = vmatpush1.bf16.msra.mxu0 %v5273
    %5590 = vmatprep.subr.bf16.mxu0 %v5278
    %5591 = vmatpush1.bf16.msra.mxu0 %v5277
    %5592 = vmatprep.subr.bf16.mxu0 %v5282
    %5593 = vmatpush1.bf16.msra.mxu0 %v5281
    %5594 = vmatprep.subr.bf16.mxu0 %v5286
    %5595 = vmatpush1.bf16.msra.mxu0 %v5285
    %5596 = vmatprep.subr.bf16.mxu0 %v5290
    %5597 = vmatpush1.bf16.msra.mxu0 %v5289
    %5598 = vmatprep.subr.bf16.mxu0 %v5294
    %5599 = vmatpush1.bf16.msra.mxu0 %v5293
    %5600 = vmatprep.subr.bf16.mxu0 %v5298
    %5601 = vmatpush1.bf16.msra.mxu0 %v5297
    %5602 = vmatprep.subr.bf16.mxu0 %v5302
    %5603 = vmatpush1.bf16.msra.mxu0 %v5301
    %5604 = vmatprep.subr.bf16.mxu0 %v5306
    %5605 = vmatpush1.bf16.msra.mxu0 %v5305
    %5606 = vmatprep.subr.bf16.mxu0 %v5310
    %5607 = vmatpush1.bf16.msra.mxu0 %v5309
    %5608 = vmatprep.subr.bf16.mxu0 %v5314
    %5609 = vmatpush1.bf16.msra.mxu0 %v5313
    %5610 = vmatprep.subr.bf16.mxu0 %v5318
    %5611 = vmatpush1.bf16.msra.mxu0 %v5317
    %5612 = vmatprep.subr.bf16.mxu0 %v5322
    %5613 = vmatpush1.bf16.msra.mxu0 %v5321
    %5614 = vmatprep.subr.bf16.mxu0 %v5326
    %5615 = vmatpush1.bf16.msra.mxu0 %v5325
    %5616 = vmatprep.mubr.bf16.mxu0 %v4798
    %5617 = vmatmul.mubr.bf16.gmra.mrb[0].mxu0 %v4797
    %v5618 = vpop.f32.mrb[0].mxu0
    %v5619 = vadd.f32 %v5576, %v5618
    %v5620 = vpop.f32.mrb[0].mxu0
    %v5621 = vadd.f32 %v5578, %v5620
    %v5622 = vpop.f32.mrb[0].mxu0
    %v5623 = vadd.f32 %v5580, %v5622
    %v5624 = vpop.f32.mrb[0].mxu0
    %v5625 = vadd.f32 %v5582, %v5624
    %5626 = vdwg.mxu0
    %v5627 = vpack.c.bf16 %v5537, %v5533
    %v5628 = vpack.c.bf16 %v5539, %v5535
    %v5629 = vpack.c.bf16 %v5623, %v5619
    %v5630 = vpack.c.bf16 %v5625, %v5621
    %v5635 = vunpack.c.l.b16 %v5627
    %v5636 = vunpack.c.l.b16 %v5628
    %v5637 = vunpack.c.l.b16 %v5629
    %v5638 = vunpack.c.l.b16 %v5630
    %v5639 = vunpack.c.h.b16 %v5627
    %v5640 = vunpack.c.h.b16 %v5628
    %v5641 = vunpack.c.h.b16 %v5629
    %v5642 = vunpack.c.h.b16 %v5630
    %v5643 = vpack.c.b16 %v5636, %v5635
    %v5644 = vpack.c.b16 %v5638, %v5637
    %v5645 = vpack.c.b16 %v5640, %v5639
    %v5646 = vpack.c.b16 %v5642, %v5641
    %5651 = vst [vmem:[%s8] sm:$0xff] %v5643
    %5652 = vst [vmem:[%s8 + $0x8] sm:$0xff] %v5644
    %5653 = vst [vmem:[%s8 + $0x10] sm:$0xff] %v5645
    %5654 = vst [vmem:[%s8 + $0x18] sm:$0xff] %v5646
    // Predicated region
    $region38: #{tpa_pose_enc.1} parent=1 // pred_check
      _
    $region39: #{tpa_pose_enc.1} parent=1 // pred_check_branch
      %5656 = sbr.rel (0) target = $region41
    $region40: #{tpa_pose_enc.1} parent=1 // pred_region
      _
    $region41: #{tpa_pose_enc.1} parent=1 // pred_fallthru
      _
    // Predicated region
    $region42: #{tpa_pose_enc.1} parent=1 // pred_check
      _
    $region43: #{tpa_pose_enc.1} parent=1 // pred_check_branch
      %5658 = sbr.rel (0) target = $region45
    $region44: #{tpa_pose_enc.1} parent=1 // pred_region
      _
    $region45: #{tpa_pose_enc.1} parent=1 // pred_fallthru
      _
    %5659 = vsyncpa [#allocation3], 1

</llo_original>
